<compile_context>
chip_gen: v5e
topology: v5e:2x2
jax: 0.10.0
libtpu: 0.0.40
codegen_flags: <defaults>
</compile_context>

<pallas_src>
import numpy as np
import jax
import jax.numpy as jnp
from jax import lax
from jax.experimental import pallas as pl
from jax.experimental.pallas import tpu as pltpu


# --------------------------------------------------------------------------
# Host-side weight refolding
# --------------------------------------------------------------------------
def _group_banded(w_hwio, G, W, col_scale=None):
    """Refold a (3, 3, cin, cout) SAME-conv weight into 3 group-banded matrices.

    Group-row lane layout: lane index = a * (W * c) + x * c + c_idx, where `a`
    is the row-within-group.  Returns (3, G*W*cin, G*W*cout); index 0 / 1 / 2
    multiplies the previous / current / next group row.  Horizontal (kx) zero
    padding is baked into the band; vertical padding at the image top/bottom is
    handled by masking the rolled group rows inside the kernel.
    """
    kh, kw, cin, cout = w_hwio.shape
    assert kh == 3 and kw == 3
    # Py[delta, ky, a_src, a_dst] = 1  iff  a_dst + ky - 1 == (delta - 1) * G + a_src
    Py = np.zeros((3, kh, G, G), np.float32)
    for delta in range(3):
        for ky in range(kh):
            for a_dst in range(G):
                a_src = a_dst + ky - 1 - (delta - 1) * G
                if 0 <= a_src < G:
                    Py[delta, ky, a_src, a_dst] = 1.0
    # Px[kx, x_src, x_dst] = 1  iff  x_src == x_dst + kx - 1 (inside the image)
    Px = np.zeros((kw, W, W), np.float32)
    for kx in range(kw):
        for x_dst in range(W):
            x_src = x_dst + kx - 1
            if 0 <= x_src < W:
                Px[kx, x_src, x_dst] = 1.0
    banded = jnp.einsum('dkAa,lpq,klio->dApiaqo',
                        jnp.asarray(Py), jnp.asarray(Px), w_hwio)
    banded = banded.reshape(3, G * W * cin, G * W * cout)
    if col_scale is not None:
        banded = banded * jnp.tile(col_scale, G * W)[None, None, :]
    return banded


def _pick_group(H, W, d, cd, ch):
    """Smallest G dividing H that makes the folded lane widths full vregs."""
    for G in range(1, H + 1):
        if H % G:
            continue
        if G * W * ch > 1024:          # keep the block-diag conv2 weight modest
            break
        if (G * W * d) % 128 == 0 and (G * W * cd) % 128 == 0:
            return G
    return 1                           # fallback: per-row banding (still correct)


def _pick_block_batch(B, Hg):
    """Batch images per grid step: fill MXU rows but keep >= 2 grid steps."""
    try:
        kind = jax.devices()[0].device_kind.lower()
    except Exception:
        kind = ""
    m_target = 128 if "v5" in kind else 256     # v5e MXU rows saturate at 128
    bb = max(1, min(m_target // max(Hg, 1), B))
    if B >= 2:
        bb = min(bb, max(1, B // 2))            # >= 2 steps -> both v7x TCs busy
    return bb


# --------------------------------------------------------------------------
# Kernel
# --------------------------------------------------------------------------
def _make_kernel(Bb, Hg, Kx, Kh, Ncd):
    Mg = Bb * Hg          # matmul M dimension (group rows per grid step)
    No = 2 * Ncd          # fused conv3 output width (log_s head || t head)

    def kernel(x1_ref, x2_ref, w1_ref, b1_ref, w2_ref, b2_ref, w3_ref, b3_ref,
               y2_ref, ldj_ref):
        f32 = jnp.float32

        if Hg > 1:
            # 0/1 masks killing the cross-image wrap of the group-row rolls.
            g = lax.broadcasted_iota(jnp.int32, (Mg, 1), 0) % Hg
            has_prev = (g != 0).astype(f32)
            has_next = (g != Hg - 1).astype(f32)

        def conv3x3(v, w_ref, acc):
            # v: (Mg, K) folded group rows; w_ref: (3, K, N) banded taps for the
            # previous / current / next group row.  The +-1 group-row halo is a
            # sublane roll (idle XLU slot), masked at image boundaries -- no
            # padded VMEM staging scratch, no strided-slice relayout copies.
            acc = acc + jnp.dot(v, w_ref[1], preferred_element_type=f32)
            if Hg > 1:
                prev = pltpu.roll(v, shift=1, axis=0) * has_prev        # v[g-1]
                nxt = pltpu.roll(v, shift=Mg - 1, axis=0) * has_next    # v[g+1]
                acc = acc + jnp.dot(prev, w_ref[0], preferred_element_type=f32)
                acc = acc + jnp.dot(nxt, w_ref[2], preferred_element_type=f32)
            return acc

        # ---- conv1 (3x3 SAME): 3 group-banded matmuls, bias-init, ReLU ----
        x1 = x1_ref[...].astype(f32).reshape(Mg, Kx)
        h = conv3x3(x1, w1_ref, jnp.broadcast_to(b1_ref[...], (Mg, Kh)))
        h = jnp.maximum(h, 0.0)

        # ---- conv2 (1x1): one block-diagonal matmul, ReLU ----
        h = jnp.dot(h, w2_ref[...], preferred_element_type=f32) + b2_ref[...]
        h = jnp.maximum(h, 0.0)

        # ---- conv3 (3x3 SAME): fused (log_s || t) heads, exp(log_scale) and
        #      bias pre-folded into the weights / accumulator init ----
        o = conv3x3(h, w3_ref, jnp.broadcast_to(b3_ref[...], (Mg, No)))
        ls_raw = o[:, :Ncd]
        t = o[:, Ncd:]

        # ---- affine coupling: y2 = x2 * s + t (lane-dense store) ----
        s = jax.nn.sigmoid(ls_raw + 2.0) + 1.0
        log_s = jnp.log(s)
        x2 = x2_ref[...].astype(f32).reshape(Mg, Ncd)
        y2 = x2 * s + t
        y2_ref[...] = y2.reshape(Bb, Hg, Ncd).astype(y2_ref.dtype)

        # ---- per-image log-det-Jacobian, written as a lane-dense 128-wide row
        #      (value replicated across lanes; host slices column 0) ----
        log_s3 = log_s.reshape(Bb, Hg, Ncd)
        ldj = jnp.sum(jnp.sum(log_s3, axis=2, keepdims=True), axis=1, keepdims=True)
        ldj_ref[...] = jnp.broadcast_to(ldj, (Bb, 1, 128))

    return kernel


# --------------------------------------------------------------------------
# Wrapper
# --------------------------------------------------------------------------
def affine_coupling_forward(x_nhwc, params):
    """x_nhwc: (B, H, W, C) float32 (C even).  Returns (y_nhwc, LDJ[B])."""
    B, H, W, C = x_nhwc.shape
    d = C // 2
    cd = C - d
    ch = params['w1'].shape[-1]
    f32 = jnp.float32

    # Group-row folding: G image rows onto the lane axis -> 128-lane multiples.
    G = _pick_group(H, W, d, cd, ch)
    Hg = H // G
    Kx, Kh, Ncd = G * W * d, G * W * ch, G * W * cd

    # Batch blocking (+ zero padding so Bb always divides the padded batch).
    Bb = _pick_block_batch(B, Hg)
    Bpad = -(-B // Bb) * Bb
    grid = (Bpad // Bb,)

    # ---- host-side weight refolding (tiny, done once per call) ----
    ls = jnp.exp(params['log_scale'].astype(f32)).reshape(C)
    w1g = _group_banded(params['w1'].astype(f32), G, W)                         # (3, Kx, Kh)
    w2g = jnp.kron(jnp.eye(G * W, dtype=f32), params['w2'].astype(f32))         # (Kh, Kh)
    w3s = _group_banded(params['w3'][..., :cd].astype(f32), G, W, ls[:cd])      # (3, Kh, Ncd)
    w3t = _group_banded(params['w3'][..., cd:].astype(f32), G, W, ls[cd:])      # (3, Kh, Ncd)
    w3g = jnp.concatenate([w3s, w3t], axis=-1)                                  # (3, Kh, 2*Ncd)
    b1g = jnp.tile(params['b1'].astype(f32), G * W).reshape(1, Kh)
    b2g = jnp.tile(params['b2'].astype(f32), G * W).reshape(1, Kh)
    b3s = jnp.tile(params['b3'][:cd].astype(f32), G * W) * jnp.tile(ls[:cd], G * W)
    b3t = jnp.tile(params['b3'][cd:].astype(f32), G * W) * jnp.tile(ls[cd:], G * W)
    b3g = jnp.concatenate([b3s, b3t]).reshape(1, 2 * Ncd)

    # Lane-folded activations: (row-within-group, column, channel) on lanes.
    x1f = x_nhwc[..., :d].reshape(B, Hg, Kx)
    x2f = x_nhwc[..., d:].reshape(B, Hg, Ncd)
    if Bpad != B:
        padw = [(0, Bpad - B), (0, 0), (0, 0)]
        x1f = jnp.pad(x1f, padw)
        x2f = jnp.pad(x2f, padw)

    kernel = _make_kernel(Bb, Hg, Kx, Kh, Ncd)

    y2f, ldj = pl.pallas_call(
        kernel,
        out_shape=(jax.ShapeDtypeStruct((Bpad, Hg, Ncd), x_nhwc.dtype),
                   jax.ShapeDtypeStruct((Bpad, 1, 128), jnp.float32)),
        grid_spec=pltpu.PrefetchScalarGridSpec(
            num_scalar_prefetch=0,
            grid=grid,
            in_specs=[
                pl.BlockSpec((Bb, Hg, Kx), lambda b: (b, 0, 0)),
                pl.BlockSpec((Bb, Hg, Ncd), lambda b: (b, 0, 0)),
                pl.BlockSpec((3, Kx, Kh), lambda b: (0, 0, 0)),
                pl.BlockSpec((1, Kh), lambda b: (0, 0)),
                pl.BlockSpec((Kh, Kh), lambda b: (0, 0)),
                pl.BlockSpec((1, Kh), lambda b: (0, 0)),
                pl.BlockSpec((3, Kh, 2 * Ncd), lambda b: (0, 0, 0)),
                pl.BlockSpec((1, 2 * Ncd), lambda b: (0, 0)),
            ],
            out_specs=[
                pl.BlockSpec((Bb, Hg, Ncd), lambda b: (b, 0, 0)),
                pl.BlockSpec((Bb, 1, 128), lambda b: (b, 0, 0)),
            ],
        ),
        compiler_params=pltpu.CompilerParams(dimension_semantics=("parallel",)),
    )(x1f, x2f, w1g, b1g, w2g, b2g, w3g, b3g)

    # Pass-through half re-attached outside the kernel (x1 is an identity copy).
    y2 = y2f[:B].reshape(B, H, W, cd)
    y = jnp.concatenate([x_nhwc[..., :d], y2], axis=-1)
    return y, ldj[:B, 0, 0]


# --------------------------------------------------------------------------
# Pure-JAX reference + test harness
# --------------------------------------------------------------------------
def ref_forward(x, p):
    """Pure-JAX NHWC reference replicating the PyTorch forward (non-inverse)."""
    B, H, W, C = x.shape
    d = C // 2
    dn = ('NHWC', 'HWIO', 'NHWC')
    x1, x2 = x[..., :d], x[..., d:]
    h = lax.conv_general_dilated(x1, p['w1'], (1, 1), 'SAME', dimension_numbers=dn) + p['b1']
    h = jnp.maximum(h, 0.0)
    h = jnp.einsum('bhwc,cd->bhwd', h, p['w2']) + p['b2']
    h = jnp.maximum(h, 0.0)
    o = lax.conv_general_dilated(h, p['w3'], (1, 1), 'SAME', dimension_numbers=dn) + p['b3']
    o = o * jnp.exp(p['log_scale'])
    log_s_raw, t = o[..., :C - d], o[..., C - d:]
    s = jax.nn.sigmoid(log_s_raw + 2.0) + 1.0
    log_s = jnp.log(s)
    y2 = x2 * s + t
    y = jnp.concatenate([x1, y2], axis=-1)
    LDJ = jnp.sum(log_s.reshape(B, -1), axis=-1)
    return y, LDJ


if __name__ == "__main__":
    B, C, H, W, CH = 2, 4, 16, 16, 8       # channels=4, channels_h=8
    d = C // 2
    co = (C - d) * 2

    key = jax.random.PRNGKey(0)
    k1, k2, kx = jax.random.split(key, 3)

    # Deterministic init mirroring the module: conv1/conv2 ~ N(0, 0.05), bias 0;
    # conv3 weights & bias zero; log_scale zeros.
    params = {
        'w1': (0.05 * jax.random.normal(k1, (3, 3, d, CH))).astype(jnp.float32),
        'b1': jnp.zeros((CH,), jnp.float32),
        'w2': (0.05 * jax.random.normal(k2, (CH, CH))).astype(jnp.float32),
        'b2': jnp.zeros((CH,), jnp.float32),
        'w3': jnp.zeros((3, 3, CH, co), jnp.float32),
        'b3': jnp.zeros((co,), jnp.float32),
        'log_scale': jnp.zeros((C,), jnp.float32),
    }

    x_nchw = jax.random.normal(kx, (B, C, H, W), jnp.float32)   # PyTorch-style input
    x_nhwc = jnp.transpose(x_nchw, (0, 2, 3, 1))                # kernel layout

    fwd = jax.jit(affine_coupling_forward)

    y, ldj = jax.block_until_ready(fwd(x_nhwc, params))
    y_r, ldj_r = ref_forward(x_nhwc, params)
    assert jnp.allclose(y, y_r, atol=1e-4, rtol=1e-4), "y mismatch"
    assert jnp.allclose(ldj, ldj_r, atol=1e-4, rtol=1e-4), "LDJ mismatch"

    # Non-zero conv3/bias/log_scale so all paths (scale/bias folding) are exercised.
    kk = jax.random.split(jax.random.PRNGKey(1), 3)
    params2 = dict(params)
    params2['w3'] = (0.05 * jax.random.normal(kk[0], (3, 3, CH, co))).astype(jnp.float32)
    params2['b3'] = (0.05 * jax.random.normal(kk[1], (co,))).astype(jnp.float32)
    params2['log_scale'] = (0.1 * jax.random.normal(kk[2], (C,))).astype(jnp.float32)
    y2_, ldj2_ = jax.block_until_ready(fwd(x_nhwc, params2))
    y2_r, ldj2_r = ref_forward(x_nhwc, params2)
    assert jnp.allclose(y2_, y2_r, atol=1e-4, rtol=1e-4), "y mismatch (nonzero conv3)"
    assert jnp.allclose(ldj2_, ldj2_r, atol=1e-4, rtol=1e-4), "LDJ mismatch (nonzero conv3)"

    # Odd batch size exercises the batch-padding path (Bb=2 -> pad 5 -> 6).
    x_odd = jax.random.normal(jax.random.PRNGKey(2), (5, H, W, C), jnp.float32)
    y3_, ldj3_ = jax.block_until_ready(fwd(x_odd, params2))
    y3_r, ldj3_r = ref_forward(x_odd, params2)
    assert jnp.allclose(y3_, y3_r, atol=1e-4, rtol=1e-4), "y mismatch (odd batch)"
    assert jnp.allclose(ldj3_, ldj3_r, atol=1e-4, rtol=1e-4), "LDJ mismatch (odd batch)"

    print("KERNEL_OK")
</pallas_src>

<mosaic_0001>
module attributes {stable_mosaic.version = 11 : i64} {
  func.func @kernel(%arg0: i32, %arg1: memref<1x4x128xf32, #tpu.memory_space<vmem>>, %arg2: memref<1x4x128xf32, #tpu.memory_space<vmem>>, %arg3: memref<3x128x512xf32, #tpu.memory_space<vmem>>, %arg4: memref<1x512xf32, #tpu.memory_space<vmem>>, %arg5: memref<512x512xf32, #tpu.memory_space<vmem>>, %arg6: memref<1x512xf32, #tpu.memory_space<vmem>>, %arg7: memref<3x512x256xf32, #tpu.memory_space<vmem>>, %arg8: memref<1x256xf32, #tpu.memory_space<vmem>>, %arg9: memref<1x4x128xf32, #tpu.memory_space<vmem>>, %arg10: memref<1x1x128xf32, #tpu.memory_space<vmem>>) attributes {dimension_semantics = [#tpu.dimension_semantics<parallel>], iteration_bounds = array<i64: 2>, scalar_prefetch = 0 : i64, scratch_operands = 0 : i64, tpu.core_type = #tpu.core_type<tc>, window_params = [{transform_indices = @transform_0, window_bounds = array<i64: 1, 4, 128>}, {transform_indices = @transform_1, window_bounds = array<i64: 1, 4, 128>}, {pipeline_mode = #tpu.pipeline_mode<synchronous>, transform_indices = @transform_2, window_bounds = array<i64: 3, 128, 512>}, {pipeline_mode = #tpu.pipeline_mode<synchronous>, transform_indices = @transform_3, window_bounds = array<i64: 1, 512>}, {pipeline_mode = #tpu.pipeline_mode<synchronous>, transform_indices = @transform_4, window_bounds = array<i64: 512, 512>}, {pipeline_mode = #tpu.pipeline_mode<synchronous>, transform_indices = @transform_5, window_bounds = array<i64: 1, 512>}, {pipeline_mode = #tpu.pipeline_mode<synchronous>, transform_indices = @transform_6, window_bounds = array<i64: 3, 512, 256>}, {pipeline_mode = #tpu.pipeline_mode<synchronous>, transform_indices = @transform_7, window_bounds = array<i64: 1, 256>}, {transform_indices = @transform_8, window_bounds = array<i64: 1, 4, 128>}, {transform_indices = @transform_9, window_bounds = array<i64: 1, 1, 128>}]} {
    %0 = tpu.iota {dimensions = array<i32: 0>} : vector<4x1xi32>
    %c4_i32 = arith.constant 4 : i32
    %c0_i32 = arith.constant 0 : i32
    %1 = arith.cmpi eq, %c4_i32, %c0_i32 : i32
    %c1_i32 = arith.constant 1 : i32
    %2 = arith.select %1, %c1_i32, %c4_i32 : i32
    %3 = vector.broadcast %2 : i32 to vector<4x1xi32>
    %4 = arith.remsi %0, %3 : vector<4x1xi32>
    %c0_i32_0 = arith.constant 0 : i32
    %5 = vector.broadcast %c0_i32_0 : i32 to vector<4x1xi32>
    %6 = arith.cmpi ne, %4, %5 : vector<4x1xi32>
    %c0_i32_1 = arith.constant 0 : i32
    %7 = vector.broadcast %c0_i32_1 : i32 to vector<4x1xi32>
    %8 = arith.cmpi slt, %4, %7 : vector<4x1xi32>
    %c0_i32_2 = arith.constant 0 : i32
    %9 = arith.cmpi slt, %2, %c0_i32_2 : i32
    %10 = vector.broadcast %9 : i1 to vector<4x1xi1>
    %11 = vector.broadcast %10 : vector<4x1xi1> to vector<4x1xi1>
    %12 = arith.xori %8, %11 : vector<4x1xi1>
    %13 = arith.andi %12, %6 : vector<4x1xi1>
    %14 = vector.broadcast %2 : i32 to vector<4x1xi32>
    %15 = arith.addi %4, %14 : vector<4x1xi32>
    %16 = arith.select %13, %15, %4 : vector<4x1xi1>, vector<4x1xi32>
    %c0_i32_3 = arith.constant 0 : i32
    %17 = vector.broadcast %c0_i32_3 : i32 to vector<4x1xi32>
    %18 = arith.cmpi ne, %16, %17 : vector<4x1xi32>
    %19 = arith.extui %18 : vector<4x1xi1> to vector<4x1xi32>
    %20 = arith.sitofp %19 : vector<4x1xi32> to vector<4x1xf32>
    %c3_i32 = arith.constant 3 : i32
    %21 = vector.broadcast %c3_i32 : i32 to vector<4x1xi32>
    %22 = arith.cmpi ne, %16, %21 : vector<4x1xi32>
    %23 = arith.extui %22 : vector<4x1xi1> to vector<4x1xi32>
    %24 = arith.sitofp %23 : vector<4x1xi32> to vector<4x1xf32>
    %c0 = arith.constant 0 : index
    %c0_4 = arith.constant 0 : index
    %c0_5 = arith.constant 0 : index
    %25 = vector.load %arg1[%c0, %c0_4, %c0_5] : memref<1x4x128xf32, #tpu.memory_space<vmem>>, vector<1x4x128xf32>
    %26 = vector.shape_cast %25 : vector<1x4x128xf32> to vector<4x128xf32>
    %c0_6 = arith.constant 0 : index
    %c0_7 = arith.constant 0 : index
    %27 = vector.load %arg4[%c0_6, %c0_7] : memref<1x512xf32, #tpu.memory_space<vmem>>, vector<1x512xf32>
    %28 = vector.shape_cast %27 : vector<1x512xf32> to vector<1x512xf32>
    %29 = vector.broadcast %28 : vector<1x512xf32> to vector<4x512xf32>
    %c1 = arith.constant 1 : index
    %c0_8 = arith.constant 0 : index
    %c0_9 = arith.constant 0 : index
    %30 = vector.load %arg3[%c1, %c0_8, %c0_9] : memref<3x128x512xf32, #tpu.memory_space<vmem>>, vector<1x128x512xf32>
    %31 = vector.shape_cast %30 : vector<1x128x512xf32> to vector<128x512xf32>
    %cst = arith.constant dense<0.000000e+00> : vector<4x512xf32>
    %32 = tpu.matmul %26, %31, %cst {dimension_numbers = #tpu.dot_dimension_numbers<[1], [0], [0], [1], [0, 0, 1, 1], [], []>} : vector<4x128xf32>, vector<128x512xf32>, vector<4x512xf32> -> vector<4x512xf32>
    %33 = arith.addf %29, %32 : vector<4x512xf32>
    %c1_i32_10 = arith.constant 1 : i32
    %34 = tpu.dynamic_rotate %26 by %c1_i32_10 dim 0 : vector<4x128xf32>, i32 -> vector<4x128xf32>
    %35 = vector.broadcast %20 : vector<4x1xf32> to vector<4x128xf32>
    %36 = arith.mulf %34, %35 : vector<4x128xf32>
    %c3_i32_11 = arith.constant 3 : i32
    %37 = tpu.dynamic_rotate %26 by %c3_i32_11 dim 0 : vector<4x128xf32>, i32 -> vector<4x128xf32>
    %38 = vector.broadcast %24 : vector<4x1xf32> to vector<4x128xf32>
    %39 = arith.mulf %37, %38 : vector<4x128xf32>
    %c0_12 = arith.constant 0 : index
    %c0_13 = arith.constant 0 : index
    %c0_14 = arith.constant 0 : index
    %40 = vector.load %arg3[%c0_12, %c0_13, %c0_14] : memref<3x128x512xf32, #tpu.memory_space<vmem>>, vector<1x128x512xf32>
    %41 = vector.shape_cast %40 : vector<1x128x512xf32> to vector<128x512xf32>
    %cst_15 = arith.constant dense<0.000000e+00> : vector<4x512xf32>
    %42 = tpu.matmul %36, %41, %cst_15 {dimension_numbers = #tpu.dot_dimension_numbers<[1], [0], [0], [1], [0, 0, 1, 1], [], []>} : vector<4x128xf32>, vector<128x512xf32>, vector<4x512xf32> -> vector<4x512xf32>
    %43 = arith.addf %33, %42 : vector<4x512xf32>
    %c2 = arith.constant 2 : index
    %c0_16 = arith.constant 0 : index
    %c0_17 = arith.constant 0 : index
    %44 = vector.load %arg3[%c2, %c0_16, %c0_17] : memref<3x128x512xf32, #tpu.memory_space<vmem>>, vector<1x128x512xf32>
    %45 = vector.shape_cast %44 : vector<1x128x512xf32> to vector<128x512xf32>
    %cst_18 = arith.constant dense<0.000000e+00> : vector<4x512xf32>
    %46 = tpu.matmul %39, %45, %cst_18 {dimension_numbers = #tpu.dot_dimension_numbers<[1], [0], [0], [1], [0, 0, 1, 1], [], []>} : vector<4x128xf32>, vector<128x512xf32>, vector<4x512xf32> -> vector<4x512xf32>
    %47 = arith.addf %43, %46 : vector<4x512xf32>
    %cst_19 = arith.constant 0.000000e+00 : f32
    %48 = vector.broadcast %cst_19 : f32 to vector<4x512xf32>
    %49 = arith.maximumf %47, %48 : vector<4x512xf32>
    %c0_20 = arith.constant 0 : index
    %c0_21 = arith.constant 0 : index
    %50 = vector.load %arg5[%c0_20, %c0_21] : memref<512x512xf32, #tpu.memory_space<vmem>>, vector<512x512xf32>
    %cst_22 = arith.constant dense<0.000000e+00> : vector<4x512xf32>
    %51 = tpu.matmul %49, %50, %cst_22 {dimension_numbers = #tpu.dot_dimension_numbers<[1], [0], [0], [1], [0, 0, 1, 1], [], []>} : vector<4x512xf32>, vector<512x512xf32>, vector<4x512xf32> -> vector<4x512xf32>
    %c0_23 = arith.constant 0 : index
    %c0_24 = arith.constant 0 : index
    %52 = vector.load %arg6[%c0_23, %c0_24] : memref<1x512xf32, #tpu.memory_space<vmem>>, vector<1x512xf32>
    %53 = vector.broadcast %52 : vector<1x512xf32> to vector<4x512xf32>
    %54 = arith.addf %51, %53 : vector<4x512xf32>
    %cst_25 = arith.constant 0.000000e+00 : f32
    %55 = vector.broadcast %cst_25 : f32 to vector<4x512xf32>
    %56 = arith.maximumf %54, %55 : vector<4x512xf32>
    %c0_26 = arith.constant 0 : index
    %c0_27 = arith.constant 0 : index
    %57 = vector.load %arg8[%c0_26, %c0_27] : memref<1x256xf32, #tpu.memory_space<vmem>>, vector<1x256xf32>
    %58 = vector.shape_cast %57 : vector<1x256xf32> to vector<1x256xf32>
    %59 = vector.broadcast %58 : vector<1x256xf32> to vector<4x256xf32>
    %c1_28 = arith.constant 1 : index
    %c0_29 = arith.constant 0 : index
    %c0_30 = arith.constant 0 : index
    %60 = vector.load %arg7[%c1_28, %c0_29, %c0_30] : memref<3x512x256xf32, #tpu.memory_space<vmem>>, vector<1x512x256xf32>
    %61 = vector.shape_cast %60 : vector<1x512x256xf32> to vector<512x256xf32>
    %cst_31 = arith.constant dense<0.000000e+00> : vector<4x256xf32>
    %62 = tpu.matmul %56, %61, %cst_31 {dimension_numbers = #tpu.dot_dimension_numbers<[1], [0], [0], [1], [0, 0, 1, 1], [], []>} : vector<4x512xf32>, vector<512x256xf32>, vector<4x256xf32> -> vector<4x256xf32>
    %63 = arith.addf %59, %62 : vector<4x256xf32>
    %c1_i32_32 = arith.constant 1 : i32
    %64 = tpu.dynamic_rotate %56 by %c1_i32_32 dim 0 : vector<4x512xf32>, i32 -> vector<4x512xf32>
    %65 = vector.broadcast %20 : vector<4x1xf32> to vector<4x512xf32>
    %66 = arith.mulf %64, %65 : vector<4x512xf32>
    %c3_i32_33 = arith.constant 3 : i32
    %67 = tpu.dynamic_rotate %56 by %c3_i32_33 dim 0 : vector<4x512xf32>, i32 -> vector<4x512xf32>
    %68 = vector.broadcast %24 : vector<4x1xf32> to vector<4x512xf32>
    %69 = arith.mulf %67, %68 : vector<4x512xf32>
    %c0_34 = arith.constant 0 : index
    %c0_35 = arith.constant 0 : index
    %c0_36 = arith.constant 0 : index
    %70 = vector.load %arg7[%c0_34, %c0_35, %c0_36] : memref<3x512x256xf32, #tpu.memory_space<vmem>>, vector<1x512x256xf32>
    %71 = vector.shape_cast %70 : vector<1x512x256xf32> to vector<512x256xf32>
    %cst_37 = arith.constant dense<0.000000e+00> : vector<4x256xf32>
    %72 = tpu.matmul %66, %71, %cst_37 {dimension_numbers = #tpu.dot_dimension_numbers<[1], [0], [0], [1], [0, 0, 1, 1], [], []>} : vector<4x512xf32>, vector<512x256xf32>, vector<4x256xf32> -> vector<4x256xf32>
    %73 = arith.addf %63, %72 : vector<4x256xf32>
    %c2_38 = arith.constant 2 : index
    %c0_39 = arith.constant 0 : index
    %c0_40 = arith.constant 0 : index
    %74 = vector.load %arg7[%c2_38, %c0_39, %c0_40] : memref<3x512x256xf32, #tpu.memory_space<vmem>>, vector<1x512x256xf32>
    %75 = vector.shape_cast %74 : vector<1x512x256xf32> to vector<512x256xf32>
    %cst_41 = arith.constant dense<0.000000e+00> : vector<4x256xf32>
    %76 = tpu.matmul %69, %75, %cst_41 {dimension_numbers = #tpu.dot_dimension_numbers<[1], [0], [0], [1], [0, 0, 1, 1], [], []>} : vector<4x512xf32>, vector<512x256xf32>, vector<4x256xf32> -> vector<4x256xf32>
    %77 = arith.addf %73, %76 : vector<4x256xf32>
    %78 = vector.extract_strided_slice %77 {offsets = [0, 0], sizes = [4, 128], strides = [1, 1]} : vector<4x256xf32> to vector<4x128xf32>
    %79 = vector.extract_strided_slice %77 {offsets = [0, 128], sizes = [4, 128], strides = [1, 1]} : vector<4x256xf32> to vector<4x128xf32>
    %cst_42 = arith.constant 2.000000e+00 : f32
    %80 = vector.broadcast %cst_42 : f32 to vector<4x128xf32>
    %81 = arith.addf %78, %80 : vector<4x128xf32>
    %82 = arith.negf %81 : vector<4x128xf32>
    %83 = math.exp %82 : vector<4x128xf32>
    %cst_43 = arith.constant 1.000000e+00 : f32
    %84 = vector.broadcast %cst_43 : f32 to vector<4x128xf32>
    %85 = arith.addf %84, %83 : vector<4x128xf32>
    %86 = arith.divf %84, %85 : vector<4x128xf32>
    %cst_44 = arith.constant 1.000000e+00 : f32
    %87 = vector.broadcast %cst_44 : f32 to vector<4x128xf32>
    %88 = arith.addf %86, %87 : vector<4x128xf32>
    %89 = math.log %88 : vector<4x128xf32>
    %c0_45 = arith.constant 0 : index
    %c0_46 = arith.constant 0 : index
    %c0_47 = arith.constant 0 : index
    %90 = vector.load %arg2[%c0_45, %c0_46, %c0_47] : memref<1x4x128xf32, #tpu.memory_space<vmem>>, vector<1x4x128xf32>
    %91 = vector.shape_cast %90 : vector<1x4x128xf32> to vector<4x128xf32>
    %92 = arith.mulf %91, %88 : vector<4x128xf32>
    %93 = arith.addf %92, %79 : vector<4x128xf32>
    %94 = vector.shape_cast %93 : vector<4x128xf32> to vector<1x4x128xf32>
    %c0_48 = arith.constant 0 : index
    %c0_49 = arith.constant 0 : index
    %c0_50 = arith.constant 0 : index
    %95 = vector.load %arg9[%c0_48, %c0_49, %c0_50] : memref<1x4x128xf32, #tpu.memory_space<vmem>>, vector<1x4x128xf32>
    tpu.vector_store %arg9[%c0_48, %c0_49, %c0_50], %94 {strides = array<i32>} : memref<1x4x128xf32, #tpu.memory_space<vmem>>, vector<1x4x128xf32>,
    %96 = vector.shape_cast %89 : vector<4x128xf32> to vector<1x4x128xf32>
    %cst_51 = arith.constant dense<0.000000e+00> : vector<1x4xf32>
    %97 = vector.multi_reduction <add>, %96, %cst_51 [2] : vector<1x4x128xf32> to vector<1x4xf32>
    %98 = vector.shape_cast %97 : vector<1x4xf32> to vector<1x4x1xf32>
    %cst_52 = arith.constant dense<0.000000e+00> : vector<1x1xf32>
    %99 = vector.multi_reduction <add>, %98, %cst_52 [1] : vector<1x4x1xf32> to vector<1x1xf32>
    %100 = vector.shape_cast %99 : vector<1x1xf32> to vector<1x1x1xf32>
    %101 = vector.shape_cast %100 : vector<1x1x1xf32> to vector<1x1x1xf32>
    %102 = vector.broadcast %101 : vector<1x1x1xf32> to vector<1x1x128xf32>
    %c0_53 = arith.constant 0 : index
    %c0_54 = arith.constant 0 : index
    %c0_55 = arith.constant 0 : index
    %103 = vector.load %arg10[%c0_53, %c0_54, %c0_55] : memref<1x1x128xf32, #tpu.memory_space<vmem>>, vector<1x1x128xf32>
    tpu.vector_store %arg10[%c0_53, %c0_54, %c0_55], %102 {strides = array<i32>} : memref<1x1x128xf32, #tpu.memory_space<vmem>>, vector<1x1x128xf32>,
    return
  }
  func.func @transform_0(%arg0: i32) -> (i32, i32, i32) {
    %c0_i32 = arith.constant 0 : i32
    %c0_i32_0 = arith.constant 0 : i32
    %c0_i32_1 = arith.constant 0 : i32
    return %arg0, %c0_i32, %c0_i32_0 : i32, i32, i32
  }
  func.func @transform_1(%arg0: i32) -> (i32, i32, i32) {
    %c0_i32 = arith.constant 0 : i32
    %c0_i32_0 = arith.constant 0 : i32
    %c0_i32_1 = arith.constant 0 : i32
    return %arg0, %c0_i32, %c0_i32_0 : i32, i32, i32
  }
  func.func @transform_2(%arg0: i32) -> (i32, i32, i32) {
    %c0_i32 = arith.constant 0 : i32
    %c0_i32_0 = arith.constant 0 : i32
    %c0_i32_1 = arith.constant 0 : i32
    %c0_i32_2 = arith.constant 0 : i32
    return %c0_i32, %c0_i32_0, %c0_i32_1 : i32, i32, i32
  }
  func.func @transform_3(%arg0: i32) -> (i32, i32) {
    %c0_i32 = arith.constant 0 : i32
    %c0_i32_0 = arith.constant 0 : i32
    %c0_i32_1 = arith.constant 0 : i32
    return %c0_i32, %c0_i32_0 : i32, i32
  }
  func.func @transform_4(%arg0: i32) -> (i32, i32) {
    %c0_i32 = arith.constant 0 : i32
    %c0_i32_0 = arith.constant 0 : i32
    %c0_i32_1 = arith.constant 0 : i32
    return %c0_i32, %c0_i32_0 : i32, i32
  }
  func.func @transform_5(%arg0: i32) -> (i32, i32) {
    %c0_i32 = arith.constant 0 : i32
    %c0_i32_0 = arith.constant 0 : i32
    %c0_i32_1 = arith.constant 0 : i32
    return %c0_i32, %c0_i32_0 : i32, i32
  }
  func.func @transform_6(%arg0: i32) -> (i32, i32, i32) {
    %c0_i32 = arith.constant 0 : i32
    %c0_i32_0 = arith.constant 0 : i32
    %c0_i32_1 = arith.constant 0 : i32
    %c0_i32_2 = arith.constant 0 : i32
    return %c0_i32, %c0_i32_0, %c0_i32_1 : i32, i32, i32
  }
  func.func @transform_7(%arg0: i32) -> (i32, i32) {
    %c0_i32 = arith.constant 0 : i32
    %c0_i32_0 = arith.constant 0 : i32
    %c0_i32_1 = arith.constant 0 : i32
    return %c0_i32, %c0_i32_0 : i32, i32
  }
  func.func @transform_8(%arg0: i32) -> (i32, i32, i32) {
    %c0_i32 = arith.constant 0 : i32
    %c0_i32_0 = arith.constant 0 : i32
    %c0_i32_1 = arith.constant 0 : i32
    return %arg0, %c0_i32, %c0_i32_0 : i32, i32, i32
  }
  func.func @transform_9(%arg0: i32) -> (i32, i32, i32) {
    %c0_i32 = arith.constant 0 : i32
    %c0_i32_0 = arith.constant 0 : i32
    %c0_i32_1 = arith.constant 0 : i32
    return %arg0, %c0_i32, %c0_i32_0 : i32, i32, i32
  }
}

</mosaic_0001>

<llo_original>
// kernel: tile.48
$region0: #{tile.48}
  #allocation0 [shape = 's32[1]{0}', space=sflag, size = 0x4, scoped, tag = 'scoped memory for tile.48']
  %s0 = inlined_call_operand.vmem [shape: f32[2], index: 0, kind: input, shape index: {}]
  %s1 = inlined_call_operand.vmem [shape: f32[64,2], index: 1, kind: output, shape index: {}]
  // Predicated region
  $region2: #{tile.48} parent=0 // pred_check
    _
  $region3: #{tile.48} parent=0 // pred_check_branch
    %3 = sbr.rel (0) target = $region5
  $region4: #{tile.48} parent=0 // pred_region
    _
  $region5: #{tile.48} parent=0 // pred_fallthru
    _
  %v4 = vld [vmem:[%s0] ss:$0 sm:$0xff]
  %5 = vst [vmem:[%s1] sm:$0xff] %v4
  %s6 = scalar_lea.vmem %s1, 8
  %7 = vst [vmem:[%s6] sm:$0xff] %v4
  %s8 = scalar_lea.vmem %s1, 16
  %9 = vst [vmem:[%s8] sm:$0xff] %v4
  %s10 = scalar_lea.vmem %s1, 24
  %11 = vst [vmem:[%s10] sm:$0xff] %v4
  %s12 = scalar_lea.vmem %s1, 32
  %13 = vst [vmem:[%s12] sm:$0xff] %v4
  %s14 = scalar_lea.vmem %s1, 40
  %15 = vst [vmem:[%s14] sm:$0xff] %v4
  %s16 = scalar_lea.vmem %s1, 48
  %17 = vst [vmem:[%s16] sm:$0xff] %v4
  %s18 = scalar_lea.vmem %s1, 56
  %19 = vst [vmem:[%s18] sm:$0xff] %v4

// kernel: mul.29
$region0: #{mul.29}
  %s0 = inlined_call_operand.vmem [shape: f32[64,2], index: 0, kind: input, shape index: {}]
  %s1 = inlined_call_operand.vmem [shape: f32[128], index: 1, kind: output, shape index: {}]
  $region1: #{mul.29} parent=0
    #allocation0 [shape = 'u8[4096]{0}', space=vmem, size = 0x1000, scoped, tag = 'scoped mem for output reshape']
    %v2 = vld [vmem:[%s0] sm:$0x1]
    %vm3 = vcmask 15360
    %4 = vst.msk [vmem:[#allocation0] sm:$0x1] %vm3, %v2
    %s5 = scalar_lea.vmem %s0, 63
    %v6 = vld [vmem:[%s5] sm:$0x1]
    %7 = vrot.lane.b32.xlu0 %v6, 126
    %v8 = vpop.permute.xlu0 %7
    %vm9 = vcmask 1048560
    %10 = vst.msk [vmem:[#allocation0] sm:$0x1] %vm9, %v8
    %s11 = scalar_lea.vmem %s0, 62
    %v12 = vld [vmem:[%s11] sm:$0x1]
    %13 = vrot.lane.b32.xlu0 %v12, 124
    %v14 = vpop.permute.xlu0 %13
    %vm15 = vcmask 1032160
    %16 = vst.msk [vmem:[#allocation0] sm:$0x1] %vm15, %v14
    %s17 = scalar_lea.vmem %s0, 61
    %v18 = vld [vmem:[%s17] sm:$0x1]
    %19 = vrot.lane.b32.xlu0 %v18, 122
    %v20 = vpop.permute.xlu0 %19
    %vm21 = vcmask 1015760
    %22 = vst.msk [vmem:[#allocation0] sm:$0x1] %vm21, %v20
    %s23 = scalar_lea.vmem %s0, 60
    %v24 = vld [vmem:[%s23] sm:$0x1]
    %25 = vrot.lane.b32.xlu0 %v24, 120
    %v26 = vpop.permute.xlu0 %25
    %vm27 = vcmask 999360
    %28 = vst.msk [vmem:[#allocation0] sm:$0x1] %vm27, %v26
    %s29 = scalar_lea.vmem %s0, 59
    %v30 = vld [vmem:[%s29] sm:$0x1]
    %31 = vrot.lane.b32.xlu0 %v30, 118
    %v32 = vpop.permute.xlu0 %31
    %vm33 = vcmask 982960
    %34 = vst.msk [vmem:[#allocation0] sm:$0x1] %vm33, %v32
    %s35 = scalar_lea.vmem %s0, 58
    %v36 = vld [vmem:[%s35] sm:$0x1]
    %37 = vrot.lane.b32.xlu0 %v36, 116
    %v38 = vpop.permute.xlu0 %37
    %vm39 = vcmask 966560
    %40 = vst.msk [vmem:[#allocation0] sm:$0x1] %vm39, %v38
    %s41 = scalar_lea.vmem %s0, 57
    %v42 = vld [vmem:[%s41] sm:$0x1]
    %43 = vrot.lane.b32.xlu0 %v42, 114
    %v44 = vpop.permute.xlu0 %43
    %vm45 = vcmask 950160
    %46 = vst.msk [vmem:[#allocation0] sm:$0x1] %vm45, %v44
    %s47 = scalar_lea.vmem %s0, 56
    %v48 = vld [vmem:[%s47] sm:$0x1]
    %49 = vrot.lane.b32.xlu0 %v48, 112
    %v50 = vpop.permute.xlu0 %49
    %vm51 = vcmask 933760
    %52 = vst.msk [vmem:[#allocation0] sm:$0x1] %vm51, %v50
    %s53 = scalar_lea.vmem %s0, 55
    %v54 = vld [vmem:[%s53] sm:$0x1]
    %55 = vrot.lane.b32.xlu0 %v54, 110
    %v56 = vpop.permute.xlu0 %55
    %vm57 = vcmask 917360
    %58 = vst.msk [vmem:[#allocation0] sm:$0x1] %vm57, %v56
    %s59 = scalar_lea.vmem %s0, 54
    %v60 = vld [vmem:[%s59] sm:$0x1]
    %61 = vrot.lane.b32.xlu0 %v60, 108
    %v62 = vpop.permute.xlu0 %61
    %vm63 = vcmask 900960
    %64 = vst.msk [vmem:[#allocation0] sm:$0x1] %vm63, %v62
    %s65 = scalar_lea.vmem %s0, 53
    %v66 = vld [vmem:[%s65] sm:$0x1]
    %67 = vrot.lane.b32.xlu0 %v66, 106
    %v68 = vpop.permute.xlu0 %67
    %vm69 = vcmask 884560
    %70 = vst.msk [vmem:[#allocation0] sm:$0x1] %vm69, %v68
    %s71 = scalar_lea.vmem %s0, 52
    %v72 = vld [vmem:[%s71] sm:$0x1]
    %73 = vrot.lane.b32.xlu0 %v72, 104
    %v74 = vpop.permute.xlu0 %73
    %vm75 = vcmask 868160
    %76 = vst.msk [vmem:[#allocation0] sm:$0x1] %vm75, %v74
    %s77 = scalar_lea.vmem %s0, 51
    %v78 = vld [vmem:[%s77] sm:$0x1]
    %79 = vrot.lane.b32.xlu0 %v78, 102
    %v80 = vpop.permute.xlu0 %79
    %vm81 = vcmask 851760
    %82 = vst.msk [vmem:[#allocation0] sm:$0x1] %vm81, %v80
    %s83 = scalar_lea.vmem %s0, 50
    %v84 = vld [vmem:[%s83] sm:$0x1]
    %85 = vrot.lane.b32.xlu0 %v84, 100
    %v86 = vpop.permute.xlu0 %85
    %vm87 = vcmask 835360
    %88 = vst.msk [vmem:[#allocation0] sm:$0x1] %vm87, %v86
    %s89 = scalar_lea.vmem %s0, 49
    %v90 = vld [vmem:[%s89] sm:$0x1]
    %91 = vrot.lane.b32.xlu0 %v90, 98
    %v92 = vpop.permute.xlu0 %91
    %vm93 = vcmask 818960
    %94 = vst.msk [vmem:[#allocation0] sm:$0x1] %vm93, %v92
    %s95 = scalar_lea.vmem %s0, 48
    %v96 = vld [vmem:[%s95] sm:$0x1]
    %97 = vrot.lane.b32.xlu0 %v96, 96
    %v98 = vpop.permute.xlu0 %97
    %vm99 = vcmask 802560
    %100 = vst.msk [vmem:[#allocation0] sm:$0x1] %vm99, %v98
    %s101 = scalar_lea.vmem %s0, 47
    %v102 = vld [vmem:[%s101] sm:$0x1]
    %103 = vrot.lane.b32.xlu0 %v102, 94
    %v104 = vpop.permute.xlu0 %103
    %vm105 = vcmask 786160
    %106 = vst.msk [vmem:[#allocation0] sm:$0x1] %vm105, %v104
    %s107 = scalar_lea.vmem %s0, 46
    %v108 = vld [vmem:[%s107] sm:$0x1]
    %109 = vrot.lane.b32.xlu0 %v108, 92
    %v110 = vpop.permute.xlu0 %109
    %vm111 = vcmask 769760
    %112 = vst.msk [vmem:[#allocation0] sm:$0x1] %vm111, %v110
    %s113 = scalar_lea.vmem %s0, 45
    %v114 = vld [vmem:[%s113] sm:$0x1]
    %115 = vrot.lane.b32.xlu0 %v114, 90
    %v116 = vpop.permute.xlu0 %115
    %vm117 = vcmask 753360
    %118 = vst.msk [vmem:[#allocation0] sm:$0x1] %vm117, %v116
    %s119 = scalar_lea.vmem %s0, 44
    %v120 = vld [vmem:[%s119] sm:$0x1]
    %121 = vrot.lane.b32.xlu0 %v120, 88
    %v122 = vpop.permute.xlu0 %121
    %vm123 = vcmask 736960
    %124 = vst.msk [vmem:[#allocation0] sm:$0x1] %vm123, %v122
    %s125 = scalar_lea.vmem %s0, 43
    %v126 = vld [vmem:[%s125] sm:$0x1]
    %127 = vrot.lane.b32.xlu0 %v126, 86
    %v128 = vpop.permute.xlu0 %127
    %vm129 = vcmask 720560
    %130 = vst.msk [vmem:[#allocation0] sm:$0x1] %vm129, %v128
    %s131 = scalar_lea.vmem %s0, 42
    %v132 = vld [vmem:[%s131] sm:$0x1]
    %133 = vrot.lane.b32.xlu0 %v132, 84
    %v134 = vpop.permute.xlu0 %133
    %vm135 = vcmask 704160
    %136 = vst.msk [vmem:[#allocation0] sm:$0x1] %vm135, %v134
    %s137 = scalar_lea.vmem %s0, 41
    %v138 = vld [vmem:[%s137] sm:$0x1]
    %139 = vrot.lane.b32.xlu0 %v138, 82
    %v140 = vpop.permute.xlu0 %139
    %vm141 = vcmask 687760
    %142 = vst.msk [vmem:[#allocation0] sm:$0x1] %vm141, %v140
    %s143 = scalar_lea.vmem %s0, 40
    %v144 = vld [vmem:[%s143] sm:$0x1]
    %145 = vrot.lane.b32.xlu0 %v144, 80
    %v146 = vpop.permute.xlu0 %145
    %vm147 = vcmask 671360
    %148 = vst.msk [vmem:[#allocation0] sm:$0x1] %vm147, %v146
    %s149 = scalar_lea.vmem %s0, 39
    %v150 = vld [vmem:[%s149] sm:$0x1]
    %151 = vrot.lane.b32.xlu0 %v150, 78
    %v152 = vpop.permute.xlu0 %151
    %vm153 = vcmask 654960
    %154 = vst.msk [vmem:[#allocation0] sm:$0x1] %vm153, %v152
    %s155 = scalar_lea.vmem %s0, 38
    %v156 = vld [vmem:[%s155] sm:$0x1]
    %157 = vrot.lane.b32.xlu0 %v156, 76
    %v158 = vpop.permute.xlu0 %157
    %vm159 = vcmask 638560
    %160 = vst.msk [vmem:[#allocation0] sm:$0x1] %vm159, %v158
    %s161 = scalar_lea.vmem %s0, 37
    %v162 = vld [vmem:[%s161] sm:$0x1]
    %163 = vrot.lane.b32.xlu0 %v162, 74
    %v164 = vpop.permute.xlu0 %163
    %vm165 = vcmask 622160
    %166 = vst.msk [vmem:[#allocation0] sm:$0x1] %vm165, %v164
    %s167 = scalar_lea.vmem %s0, 36
    %v168 = vld [vmem:[%s167] sm:$0x1]
    %169 = vrot.lane.b32.xlu0 %v168, 72
    %v170 = vpop.permute.xlu0 %169
    %vm171 = vcmask 605760
    %172 = vst.msk [vmem:[#allocation0] sm:$0x1] %vm171, %v170
    %s173 = scalar_lea.vmem %s0, 35
    %v174 = vld [vmem:[%s173] sm:$0x1]
    %175 = vrot.lane.b32.xlu0 %v174, 70
    %v176 = vpop.permute.xlu0 %175
    %vm177 = vcmask 589360
    %178 = vst.msk [vmem:[#allocation0] sm:$0x1] %vm177, %v176
    %s179 = scalar_lea.vmem %s0, 34
    %v180 = vld [vmem:[%s179] sm:$0x1]
    %181 = vrot.lane.b32.xlu0 %v180, 68
    %v182 = vpop.permute.xlu0 %181
    %vm183 = vcmask 572960
    %184 = vst.msk [vmem:[#allocation0] sm:$0x1] %vm183, %v182
    %s185 = scalar_lea.vmem %s0, 33
    %v186 = vld [vmem:[%s185] sm:$0x1]
    %187 = vrot.lane.b32.xlu0 %v186, 66
    %v188 = vpop.permute.xlu0 %187
    %vm189 = vcmask 556560
    %190 = vst.msk [vmem:[#allocation0] sm:$0x1] %vm189, %v188
    %s191 = scalar_lea.vmem %s0, 32
    %v192 = vld [vmem:[%s191] sm:$0x1]
    %193 = vrot.lane.b32.xlu0 %v192, 64
    %v194 = vpop.permute.xlu0 %193
    %vm195 = vcmask 540160
    %196 = vst.msk [vmem:[#allocation0] sm:$0x1] %vm195, %v194
    %s197 = scalar_lea.vmem %s0, 31
    %v198 = vld [vmem:[%s197] sm:$0x1]
    %199 = vrot.lane.b32.xlu0 %v198, 62
    %v200 = vpop.permute.xlu0 %199
    %vm201 = vcmask 523760
    %202 = vst.msk [vmem:[#allocation0] sm:$0x1] %vm201, %v200
    %s203 = scalar_lea.vmem %s0, 30
    %v204 = vld [vmem:[%s203] sm:$0x1]
    %205 = vrot.lane.b32.xlu0 %v204, 60
    %v206 = vpop.permute.xlu0 %205
    %vm207 = vcmask 507360
    %208 = vst.msk [vmem:[#allocation0] sm:$0x1] %vm207, %v206
    %s209 = scalar_lea.vmem %s0, 29
    %v210 = vld [vmem:[%s209] sm:$0x1]
    %211 = vrot.lane.b32.xlu0 %v210, 58
    %v212 = vpop.permute.xlu0 %211
    %vm213 = vcmask 490960
    %214 = vst.msk [vmem:[#allocation0] sm:$0x1] %vm213, %v212
    %s215 = scalar_lea.vmem %s0, 28
    %v216 = vld [vmem:[%s215] sm:$0x1]
    %217 = vrot.lane.b32.xlu0 %v216, 56
    %v218 = vpop.permute.xlu0 %217
    %vm219 = vcmask 474560
    %220 = vst.msk [vmem:[#allocation0] sm:$0x1] %vm219, %v218
    %s221 = scalar_lea.vmem %s0, 27
    %v222 = vld [vmem:[%s221] sm:$0x1]
    %223 = vrot.lane.b32.xlu0 %v222, 54
    %v224 = vpop.permute.xlu0 %223
    %vm225 = vcmask 458160
    %226 = vst.msk [vmem:[#allocation0] sm:$0x1] %vm225, %v224
    %s227 = scalar_lea.vmem %s0, 26
    %v228 = vld [vmem:[%s227] sm:$0x1]
    %229 = vrot.lane.b32.xlu0 %v228, 52
    %v230 = vpop.permute.xlu0 %229
    %vm231 = vcmask 441760
    %232 = vst.msk [vmem:[#allocation0] sm:$0x1] %vm231, %v230
    %s233 = scalar_lea.vmem %s0, 25
    %v234 = vld [vmem:[%s233] sm:$0x1]
    %235 = vrot.lane.b32.xlu0 %v234, 50
    %v236 = vpop.permute.xlu0 %235
    %vm237 = vcmask 425360
    %238 = vst.msk [vmem:[#allocation0] sm:$0x1] %vm237, %v236
    %s239 = scalar_lea.vmem %s0, 24
    %v240 = vld [vmem:[%s239] sm:$0x1]
    %241 = vrot.lane.b32.xlu0 %v240, 48
    %v242 = vpop.permute.xlu0 %241
    %vm243 = vcmask 408960
    %244 = vst.msk [vmem:[#allocation0] sm:$0x1] %vm243, %v242
    %s245 = scalar_lea.vmem %s0, 23
    %v246 = vld [vmem:[%s245] sm:$0x1]
    %247 = vrot.lane.b32.xlu0 %v246, 46
    %v248 = vpop.permute.xlu0 %247
    %vm249 = vcmask 392560
    %250 = vst.msk [vmem:[#allocation0] sm:$0x1] %vm249, %v248
    %s251 = scalar_lea.vmem %s0, 22
    %v252 = vld [vmem:[%s251] sm:$0x1]
    %253 = vrot.lane.b32.xlu0 %v252, 44
    %v254 = vpop.permute.xlu0 %253
    %vm255 = vcmask 376160
    %256 = vst.msk [vmem:[#allocation0] sm:$0x1] %vm255, %v254
    %s257 = scalar_lea.vmem %s0, 21
    %v258 = vld [vmem:[%s257] sm:$0x1]
    %259 = vrot.lane.b32.xlu0 %v258, 42
    %v260 = vpop.permute.xlu0 %259
    %vm261 = vcmask 359760
    %262 = vst.msk [vmem:[#allocation0] sm:$0x1] %vm261, %v260
    %s263 = scalar_lea.vmem %s0, 20
    %v264 = vld [vmem:[%s263] sm:$0x1]
    %265 = vrot.lane.b32.xlu0 %v264, 40
    %v266 = vpop.permute.xlu0 %265
    %vm267 = vcmask 343360
    %268 = vst.msk [vmem:[#allocation0] sm:$0x1] %vm267, %v266
    %s269 = scalar_lea.vmem %s0, 19
    %v270 = vld [vmem:[%s269] sm:$0x1]
    %271 = vrot.lane.b32.xlu0 %v270, 38
    %v272 = vpop.permute.xlu0 %271
    %vm273 = vcmask 326960
    %274 = vst.msk [vmem:[#allocation0] sm:$0x1] %vm273, %v272
    %s275 = scalar_lea.vmem %s0, 18
    %v276 = vld [vmem:[%s275] sm:$0x1]
    %277 = vrot.lane.b32.xlu0 %v276, 36
    %v278 = vpop.permute.xlu0 %277
    %vm279 = vcmask 310560
    %280 = vst.msk [vmem:[#allocation0] sm:$0x1] %vm279, %v278
    %s281 = scalar_lea.vmem %s0, 17
    %v282 = vld [vmem:[%s281] sm:$0x1]
    %283 = vrot.lane.b32.xlu0 %v282, 34
    %v284 = vpop.permute.xlu0 %283
    %vm285 = vcmask 294160
    %286 = vst.msk [vmem:[#allocation0] sm:$0x1] %vm285, %v284
    %s287 = scalar_lea.vmem %s0, 16
    %v288 = vld [vmem:[%s287] sm:$0x1]
    %289 = vrot.lane.b32.xlu0 %v288, 32
    %v290 = vpop.permute.xlu0 %289
    %vm291 = vcmask 277760
    %292 = vst.msk [vmem:[#allocation0] sm:$0x1] %vm291, %v290
    %s293 = scalar_lea.vmem %s0, 15
    %v294 = vld [vmem:[%s293] sm:$0x1]
    %295 = vrot.lane.b32.xlu0 %v294, 30
    %v296 = vpop.permute.xlu0 %295
    %vm297 = vcmask 261360
    %298 = vst.msk [vmem:[#allocation0] sm:$0x1] %vm297, %v296
    %s299 = scalar_lea.vmem %s0, 14
    %v300 = vld [vmem:[%s299] sm:$0x1]
    %301 = vrot.lane.b32.xlu0 %v300, 28
    %v302 = vpop.permute.xlu0 %301
    %vm303 = vcmask 244960
    %304 = vst.msk [vmem:[#allocation0] sm:$0x1] %vm303, %v302
    %s305 = scalar_lea.vmem %s0, 13
    %v306 = vld [vmem:[%s305] sm:$0x1]
    %307 = vrot.lane.b32.xlu0 %v306, 26
    %v308 = vpop.permute.xlu0 %307
    %vm309 = vcmask 228560
    %310 = vst.msk [vmem:[#allocation0] sm:$0x1] %vm309, %v308
    %s311 = scalar_lea.vmem %s0, 12
    %v312 = vld [vmem:[%s311] sm:$0x1]
    %313 = vrot.lane.b32.xlu0 %v312, 24
    %v314 = vpop.permute.xlu0 %313
    %vm315 = vcmask 212160
    %316 = vst.msk [vmem:[#allocation0] sm:$0x1] %vm315, %v314
    %s317 = scalar_lea.vmem %s0, 11
    %v318 = vld [vmem:[%s317] sm:$0x1]
    %319 = vrot.lane.b32.xlu0 %v318, 22
    %v320 = vpop.permute.xlu0 %319
    %vm321 = vcmask 195760
    %322 = vst.msk [vmem:[#allocation0] sm:$0x1] %vm321, %v320
    %s323 = scalar_lea.vmem %s0, 10
    %v324 = vld [vmem:[%s323] sm:$0x1]
    %325 = vrot.lane.b32.xlu0 %v324, 20
    %v326 = vpop.permute.xlu0 %325
    %vm327 = vcmask 179360
    %328 = vst.msk [vmem:[#allocation0] sm:$0x1] %vm327, %v326
    %s329 = scalar_lea.vmem %s0, 9
    %v330 = vld [vmem:[%s329] sm:$0x1]
    %331 = vrot.lane.b32.xlu0 %v330, 18
    %v332 = vpop.permute.xlu0 %331
    %vm333 = vcmask 162960
    %334 = vst.msk [vmem:[#allocation0] sm:$0x1] %vm333, %v332
    %s335 = scalar_lea.vmem %s0, 8
    %v336 = vld [vmem:[%s335] sm:$0x1]
    %337 = vrot.lane.b32.xlu0 %v336, 16
    %v338 = vpop.permute.xlu0 %337
    %vm339 = vcmask 146560
    %340 = vst.msk [vmem:[#allocation0] sm:$0x1] %vm339, %v338
    %s341 = scalar_lea.vmem %s0, 7
    %v342 = vld [vmem:[%s341] sm:$0x1]
    %343 = vrot.lane.b32.xlu0 %v342, 14
    %v344 = vpop.permute.xlu0 %343
    %vm345 = vcmask 130160
    %346 = vst.msk [vmem:[#allocation0] sm:$0x1] %vm345, %v344
    %s347 = scalar_lea.vmem %s0, 6
    %v348 = vld [vmem:[%s347] sm:$0x1]
    %349 = vrot.lane.b32.xlu0 %v348, 12
    %v350 = vpop.permute.xlu0 %349
    %vm351 = vcmask 113760
    %352 = vst.msk [vmem:[#allocation0] sm:$0x1] %vm351, %v350
    %s353 = scalar_lea.vmem %s0, 5
    %v354 = vld [vmem:[%s353] sm:$0x1]
    %355 = vrot.lane.b32.xlu0 %v354, 10
    %v356 = vpop.permute.xlu0 %355
    %vm357 = vcmask 97360
    %358 = vst.msk [vmem:[#allocation0] sm:$0x1] %vm357, %v356
    %s359 = scalar_lea.vmem %s0, 4
    %v360 = vld [vmem:[%s359] sm:$0x1]
    %361 = vrot.lane.b32.xlu0 %v360, 8
    %v362 = vpop.permute.xlu0 %361
    %vm363 = vcmask 80960
    %364 = vst.msk [vmem:[#allocation0] sm:$0x1] %vm363, %v362
    %s365 = scalar_lea.vmem %s0, 3
    %v366 = vld [vmem:[%s365] sm:$0x1]
    %367 = vrot.lane.b32.xlu0 %v366, 6
    %v368 = vpop.permute.xlu0 %367
    %vm369 = vcmask 64560
    %370 = vst.msk [vmem:[#allocation0] sm:$0x1] %vm369, %v368
    %s371 = scalar_lea.vmem %s0, 2
    %v372 = vld [vmem:[%s371] sm:$0x1]
    %373 = vrot.lane.b32.xlu0 %v372, 4
    %v374 = vpop.permute.xlu0 %373
    %vm375 = vcmask 48160
    %376 = vst.msk [vmem:[#allocation0] sm:$0x1] %vm375, %v374
    %s377 = scalar_lea.vmem %s0, 1
    %v378 = vld [vmem:[%s377] sm:$0x1]
    %379 = vrot.lane.b32.xlu0 %v378, 2
    %v380 = vpop.permute.xlu0 %379
    %vm381 = vcmask 31760
    %382 = vst.msk [vmem:[#allocation0] sm:$0x1] %vm381, %v380
    %s384 = ssub.s32 2, 1
    %v385 = vld [vmem:[#allocation0] sm:%s384]
    %s387 = ssub.s32 2, 1
    %388 = vst [vmem:[%s1] sm:%s387] %v385

// kernel: mul.32
$region0: #{mul.32}
  #allocation0 [shape = 's32[1]{0}', space=sflag, size = 0x4, scoped, tag = 'scoped memory for mul.32']
  %s0 = inlined_call_operand.vmem [shape: f32[128], index: 0, kind: input, shape index: {}]
  %s1 = inlined_call_operand.vmem [shape: f32[128], index: 1, kind: input, shape index: {}]
  %s2 = inlined_call_operand.vmem [shape: f32[128], index: 2, kind: output, shape index: {}]
  %v3 = vld [vmem:[%s0] sm:$0x1]
  %v4 = vld [vmem:[%s1] sm:$0x1]
  %5 = xla_tuple %v3, %v4
  %6 = xla_tuple %5
  %v7 = vmul.f32 %v3, %v4
  %8 = xla_tuple %v7
  %9 = vst [vmem:[%s2] sm:$0x1] %v7

// kernel: tile.53
$region0: #{tile.53}
  #allocation0 [shape = 's32[1]{0}', space=sflag, size = 0x4, scoped, tag = 'scoped memory for tile.53']
  %s0 = inlined_call_operand.vmem [shape: f32[8], index: 0, kind: input, shape index: {}]
  %s1 = inlined_call_operand.vmem [shape: f32[64,8], index: 1, kind: output, shape index: {}]
  // Predicated region
  $region2: #{tile.53} parent=0 // pred_check
    _
  $region3: #{tile.53} parent=0 // pred_check_branch
    %3 = sbr.rel (0) target = $region5
  $region4: #{tile.53} parent=0 // pred_region
    _
  $region5: #{tile.53} parent=0 // pred_fallthru
    _
  %v4 = vld [vmem:[%s0] ss:$0 sm:$0xff]
  %5 = vst [vmem:[%s1] sm:$0xff] %v4
  %s6 = scalar_lea.vmem %s1, 8
  %7 = vst [vmem:[%s6] sm:$0xff] %v4
  %s8 = scalar_lea.vmem %s1, 16
  %9 = vst [vmem:[%s8] sm:$0xff] %v4
  %s10 = scalar_lea.vmem %s1, 24
  %11 = vst [vmem:[%s10] sm:$0xff] %v4
  %s12 = scalar_lea.vmem %s1, 32
  %13 = vst [vmem:[%s12] sm:$0xff] %v4
  %s14 = scalar_lea.vmem %s1, 40
  %15 = vst [vmem:[%s14] sm:$0xff] %v4
  %s16 = scalar_lea.vmem %s1, 48
  %17 = vst [vmem:[%s16] sm:$0xff] %v4
  %s18 = scalar_lea.vmem %s1, 56
  %19 = vst [vmem:[%s18] sm:$0xff] %v4

// kernel: tile.54
$region0: #{tile.54}
  %s0 = inlined_call_operand.vmem [shape: f32[64,8], index: 0, kind: input, shape index: {}]
  %s1 = inlined_call_operand.vmem [shape: f32[1,512], index: 1, kind: output, shape index: {}]
  $region1: #{tile.54} parent=0
    #allocation0 [shape = 'u8[16384]{0}', space=vmem, size = 0x4000, scoped, tag = 'scoped mem for output reshape']
    %s2 = smov 3
    %v3 = vld [vmem:[%s0] ss:$16 sm:%s2]
    %s4 = smov 12
    %v5 = vld [vmem:[%s0] ss:$16 sm:%s4]
    %vm6 = vcmask 1043458
    %v7 = vsel %vm6, %v5, %v3
    %vm8 = vcmask 64512
    %9 = vst.msk [vmem:[#allocation0] ss:$8 sm:$0xf] %vm8, %v7
    %s10 = scalar_lea.vmem %s0, 15
    %s11 = smov 3
    %v12 = vld [vmem:[%s10] ss:$16 sm:%s11]
    %s13 = scalar_lea.vmem %s0, 15
    %s14 = smov 12
    %v15 = vld [vmem:[%s13] ss:$16 sm:%s14]
    %vm16 = vcmask 1043458
    %v17 = vsel %vm16, %v15, %v12
    %18 = vrot.lane.b32.xlu0 %v17, 120
    %v19 = vpop.permute.xlu0 %18
    %vm20 = vcmask 1048512
    %21 = vst.msk [vmem:[#allocation0] ss:$8 sm:$0xf] %vm20, %v19
    %s22 = scalar_lea.vmem %s0, 14
    %s23 = smov 3
    %v24 = vld [vmem:[%s22] ss:$16 sm:%s23]
    %s25 = scalar_lea.vmem %s0, 14
    %s26 = smov 12
    %v27 = vld [vmem:[%s25] ss:$16 sm:%s26]
    %vm28 = vcmask 1043458
    %v29 = vsel %vm28, %v27, %v24
    %30 = vrot.lane.b32.xlu0 %v29, 112
    %v31 = vpop.permute.xlu0 %30
    %vm32 = vcmask 982912
    %33 = vst.msk [vmem:[#allocation0] ss:$8 sm:$0xf] %vm32, %v31
    %s34 = scalar_lea.vmem %s0, 13
    %s35 = smov 3
    %v36 = vld [vmem:[%s34] ss:$16 sm:%s35]
    %s37 = scalar_lea.vmem %s0, 13
    %s38 = smov 12
    %v39 = vld [vmem:[%s37] ss:$16 sm:%s38]
    %vm40 = vcmask 1043458
    %v41 = vsel %vm40, %v39, %v36
    %42 = vrot.lane.b32.xlu0 %v41, 104
    %v43 = vpop.permute.xlu0 %42
    %vm44 = vcmask 917312
    %45 = vst.msk [vmem:[#allocation0] ss:$8 sm:$0xf] %vm44, %v43
    %s46 = scalar_lea.vmem %s0, 12
    %s47 = smov 3
    %v48 = vld [vmem:[%s46] ss:$16 sm:%s47]
    %s49 = scalar_lea.vmem %s0, 12
    %s50 = smov 12
    %v51 = vld [vmem:[%s49] ss:$16 sm:%s50]
    %vm52 = vcmask 1043458
    %v53 = vsel %vm52, %v51, %v48
    %54 = vrot.lane.b32.xlu0 %v53, 96
    %v55 = vpop.permute.xlu0 %54
    %vm56 = vcmask 851712
    %57 = vst.msk [vmem:[#allocation0] ss:$8 sm:$0xf] %vm56, %v55
    %s58 = scalar_lea.vmem %s0, 11
    %s59 = smov 3
    %v60 = vld [vmem:[%s58] ss:$16 sm:%s59]
    %s61 = scalar_lea.vmem %s0, 11
    %s62 = smov 12
    %v63 = vld [vmem:[%s61] ss:$16 sm:%s62]
    %vm64 = vcmask 1043458
    %v65 = vsel %vm64, %v63, %v60
    %66 = vrot.lane.b32.xlu0 %v65, 88
    %v67 = vpop.permute.xlu0 %66
    %vm68 = vcmask 786112
    %69 = vst.msk [vmem:[#allocation0] ss:$8 sm:$0xf] %vm68, %v67
    %s70 = scalar_lea.vmem %s0, 10
    %s71 = smov 3
    %v72 = vld [vmem:[%s70] ss:$16 sm:%s71]
    %s73 = scalar_lea.vmem %s0, 10
    %s74 = smov 12
    %v75 = vld [vmem:[%s73] ss:$16 sm:%s74]
    %vm76 = vcmask 1043458
    %v77 = vsel %vm76, %v75, %v72
    %78 = vrot.lane.b32.xlu0 %v77, 80
    %v79 = vpop.permute.xlu0 %78
    %vm80 = vcmask 720512
    %81 = vst.msk [vmem:[#allocation0] ss:$8 sm:$0xf] %vm80, %v79
    %s82 = scalar_lea.vmem %s0, 9
    %s83 = smov 3
    %v84 = vld [vmem:[%s82] ss:$16 sm:%s83]
    %s85 = scalar_lea.vmem %s0, 9
    %s86 = smov 12
    %v87 = vld [vmem:[%s85] ss:$16 sm:%s86]
    %vm88 = vcmask 1043458
    %v89 = vsel %vm88, %v87, %v84
    %90 = vrot.lane.b32.xlu0 %v89, 72
    %v91 = vpop.permute.xlu0 %90
    %vm92 = vcmask 654912
    %93 = vst.msk [vmem:[#allocation0] ss:$8 sm:$0xf] %vm92, %v91
    %s94 = scalar_lea.vmem %s0, 8
    %s95 = smov 3
    %v96 = vld [vmem:[%s94] ss:$16 sm:%s95]
    %s97 = scalar_lea.vmem %s0, 8
    %s98 = smov 12
    %v99 = vld [vmem:[%s97] ss:$16 sm:%s98]
    %vm100 = vcmask 1043458
    %v101 = vsel %vm100, %v99, %v96
    %102 = vrot.lane.b32.xlu0 %v101, 64
    %v103 = vpop.permute.xlu0 %102
    %vm104 = vcmask 589312
    %105 = vst.msk [vmem:[#allocation0] ss:$8 sm:$0xf] %vm104, %v103
    %s106 = scalar_lea.vmem %s0, 7
    %s107 = smov 3
    %v108 = vld [vmem:[%s106] ss:$16 sm:%s107]
    %s109 = scalar_lea.vmem %s0, 7
    %s110 = smov 12
    %v111 = vld [vmem:[%s109] ss:$16 sm:%s110]
    %vm112 = vcmask 1043458
    %v113 = vsel %vm112, %v111, %v108
    %114 = vrot.lane.b32.xlu0 %v113, 56
    %v115 = vpop.permute.xlu0 %114
    %vm116 = vcmask 523712
    %117 = vst.msk [vmem:[#allocation0] ss:$8 sm:$0xf] %vm116, %v115
    %s118 = scalar_lea.vmem %s0, 6
    %s119 = smov 3
    %v120 = vld [vmem:[%s118] ss:$16 sm:%s119]
    %s121 = scalar_lea.vmem %s0, 6
    %s122 = smov 12
    %v123 = vld [vmem:[%s121] ss:$16 sm:%s122]
    %vm124 = vcmask 1043458
    %v125 = vsel %vm124, %v123, %v120
    %126 = vrot.lane.b32.xlu0 %v125, 48
    %v127 = vpop.permute.xlu0 %126
    %vm128 = vcmask 458112
    %129 = vst.msk [vmem:[#allocation0] ss:$8 sm:$0xf] %vm128, %v127
    %s130 = scalar_lea.vmem %s0, 5
    %s131 = smov 3
    %v132 = vld [vmem:[%s130] ss:$16 sm:%s131]
    %s133 = scalar_lea.vmem %s0, 5
    %s134 = smov 12
    %v135 = vld [vmem:[%s133] ss:$16 sm:%s134]
    %vm136 = vcmask 1043458
    %v137 = vsel %vm136, %v135, %v132
    %138 = vrot.lane.b32.xlu0 %v137, 40
    %v139 = vpop.permute.xlu0 %138
    %vm140 = vcmask 392512
    %141 = vst.msk [vmem:[#allocation0] ss:$8 sm:$0xf] %vm140, %v139
    %s142 = scalar_lea.vmem %s0, 4
    %s143 = smov 3
    %v144 = vld [vmem:[%s142] ss:$16 sm:%s143]
    %s145 = scalar_lea.vmem %s0, 4
    %s146 = smov 12
    %v147 = vld [vmem:[%s145] ss:$16 sm:%s146]
    %vm148 = vcmask 1043458
    %v149 = vsel %vm148, %v147, %v144
    %150 = vrot.lane.b32.xlu0 %v149, 32
    %v151 = vpop.permute.xlu0 %150
    %vm152 = vcmask 326912
    %153 = vst.msk [vmem:[#allocation0] ss:$8 sm:$0xf] %vm152, %v151
    %s154 = scalar_lea.vmem %s0, 3
    %s155 = smov 3
    %v156 = vld [vmem:[%s154] ss:$16 sm:%s155]
    %s157 = scalar_lea.vmem %s0, 3
    %s158 = smov 12
    %v159 = vld [vmem:[%s157] ss:$16 sm:%s158]
    %vm160 = vcmask 1043458
    %v161 = vsel %vm160, %v159, %v156
    %162 = vrot.lane.b32.xlu0 %v161, 24
    %v163 = vpop.permute.xlu0 %162
    %vm164 = vcmask 261312
    %165 = vst.msk [vmem:[#allocation0] ss:$8 sm:$0xf] %vm164, %v163
    %s166 = scalar_lea.vmem %s0, 2
    %s167 = smov 3
    %v168 = vld [vmem:[%s166] ss:$16 sm:%s167]
    %s169 = scalar_lea.vmem %s0, 2
    %s170 = smov 12
    %v171 = vld [vmem:[%s169] ss:$16 sm:%s170]
    %vm172 = vcmask 1043458
    %v173 = vsel %vm172, %v171, %v168
    %174 = vrot.lane.b32.xlu0 %v173, 16
    %v175 = vpop.permute.xlu0 %174
    %vm176 = vcmask 195712
    %177 = vst.msk [vmem:[#allocation0] ss:$8 sm:$0xf] %vm176, %v175
    %s178 = scalar_lea.vmem %s0, 1
    %s179 = smov 3
    %v180 = vld [vmem:[%s178] ss:$16 sm:%s179]
    %s181 = scalar_lea.vmem %s0, 1
    %s182 = smov 12
    %v183 = vld [vmem:[%s181] ss:$16 sm:%s182]
    %vm184 = vcmask 1043458
    %v185 = vsel %vm184, %v183, %v180
    %186 = vrot.lane.b32.xlu0 %v185, 8
    %v187 = vpop.permute.xlu0 %186
    %vm188 = vcmask 130112
    %189 = vst.msk [vmem:[#allocation0] ss:$8 sm:$0xf] %vm188, %v187
    %s191 = ssub.s32 2, 1
    %v192 = vld [vmem:[#allocation0] sm:%s191]
    %s194 = ssub.s32 2, 1
    %195 = vst [vmem:[%s1] sm:%s194] %v192
    %s196 = scalar_lea.vmem [#allocation0], 8
    %v197 = vld [vmem:[%s196] sm:%s191]
    %s199 = ssub.s32 2, 1
    %s200 = scalar_lea.vmem %s1, 1
    %201 = vst [vmem:[%s200] sm:%s199] %v197
    %s202 = scalar_lea.vmem [#allocation0], 16
    %v203 = vld [vmem:[%s202] sm:%s191]
    %s205 = ssub.s32 2, 1
    %s206 = scalar_lea.vmem %s1, 2
    %207 = vst [vmem:[%s206] sm:%s205] %v203
    %s208 = scalar_lea.vmem [#allocation0], 24
    %v209 = vld [vmem:[%s208] sm:%s191]
    %s211 = ssub.s32 2, 1
    %s212 = scalar_lea.vmem %s1, 3
    %213 = vst [vmem:[%s212] sm:%s211] %v209

// kernel: affine_coupling_forward.1
$region0: #{affine_coupling_forward.1}
  #allocation0 [shape = 'u32[]', space=smem, size = 0x4, offset = 0x4, fixed_abs, tag = 'smem constant byte address 0x4 - core index']
  #allocation1 [shape = 'u32[72,128]{1,0:T(1,128)}', space=vmem, size = 0x9000, scoped, tag = 'internal scratch']
  %s0 = inlined_call_operand.vmem [shape: f32[2,4,128], index: 0, kind: input, shape index: {}]
  %s1 = inlined_call_operand.vmem [shape: f32[2,4,128], index: 1, kind: input, shape index: {}]
  %s2 = inlined_call_operand.vmem [shape: f32[3,128,512], index: 2, kind: input, shape index: {}]
  %s3 = inlined_call_operand.vmem [shape: f32[1,512], index: 3, kind: input, shape index: {}]
  %s4 = inlined_call_operand.vmem [shape: f32[512,512], index: 4, kind: input, shape index: {}]
  %s5 = inlined_call_operand.vmem [shape: f32[1,512], index: 5, kind: input, shape index: {}]
  %s6 = inlined_call_operand.vmem [shape: f32[3,512,256], index: 6, kind: input, shape index: {}]
  %s7 = inlined_call_operand.vmem [shape: f32[1,256], index: 7, kind: input, shape index: {}]
  %s8 = inlined_call_operand.vmem [shape: f32[2,4,128], index: 8, kind: output, shape index: {0}]
  %s9 = inlined_call_operand.vmem [shape: f32[2,1,128], index: 9, kind: output, shape index: {1}]
  %10 = xla_tuple %s8, %s9
  %s11 = sld [smem:[#allocation0]]
  $region73: #{affine_coupling_forward.1} parent=0
    _
  %s13 = ssub.s32 1, %s11
  %s14 = scalar_select 0, %s13, %s11
  loop: start=0, step=1, limit=4
  $region2: #{affine_coupling_forward.1} parent=0 // loop_pre_header
    _
  $region3: #{affine_coupling_forward.1} parent=0 // loop_header
    %s16 = sphi 0, %s20
    %p17 = scmp.ge.s32.totalorder %s16, 4
    %s26 = sphi 0, %s28
    %s29 = sphi 0, %s26
    %s30 = sphi 0, %s29
    %s46 = sphi 0, %s30
    %s52 = sphi 0, %s54
    %s55 = sphi 0, %s52
    %s56 = sphi 0, %s55
    %s72 = sphi 0, %s56
    %s76 = sphi 0, %s76
    %s78 = sphi 0, %s76
    %s79 = sphi 0, %s78
    %s93 = sphi 0, %s79
    %s97 = sphi 0, %s97
    %s99 = sphi 0, %s97
    %s100 = sphi 0, %s99
    %s114 = sphi 0, %s100
    %s118 = sphi 0, %s118
    %s120 = sphi 0, %s118
    %s121 = sphi 0, %s120
    %s135 = sphi 0, %s121
    %s139 = sphi 0, %s139
    %s141 = sphi 0, %s139
    %s142 = sphi 0, %s141
    %s156 = sphi 0, %s142
    %s160 = sphi 0, %s160
    %s162 = sphi 0, %s160
    %s163 = sphi 0, %s162
    %s177 = sphi 0, %s163
    %s181 = sphi 0, %s181
    %s183 = sphi 0, %s181
    %s184 = sphi 0, %s183
    %s198 = sphi 0, %s184
    %s204 = sphi 0, %s206
    %s207 = sphi 0, %s204
    %s208 = sphi 0, %s207
    %s224 = sphi 0, %s208
    %s230 = sphi 0, %s232
    %s233 = sphi 0, %s230
    %s234 = sphi 0, %s233
    %s250 = sphi 0, %s234
  $region4: #{affine_coupling_forward.1} parent=0 // loop_header_branch
    %19 = sbr.rel (%p17) target = $region8
  $region5: #{affine_coupling_forward.1} parent=0 // loop_body
    %s21 = ssub.s32 %s16, 1
    %s22 = ssub.s32 %s16, 2
    %s23 = sadd.s32 %s16, 1
    %s24 = ssub.s32 %s16, %s23
    %p25 = scmp.eq.s32.totalorder %s24, 0
    %s27 = sadd.s32 %s26, 1
    %s28 = scalar_select %p25, %s26, %s27
    %p31 = pneg %p25
    %p32 = scmp.eq.s32.totalorder %s16, 1
    %p33 = por %p31, %p32
    %p34 = scmp.ne.s32.totalorder %s26, %s29
    %p35 = scmp.eq.s32.totalorder %s16, 0
    %p36 = por %p34, %p35
    %p37 = scmp.ne.s32.totalorder %s26, %s29
    %p38 = scmp.eq.s32.totalorder %s21, 1
    %p39 = por %p37, %p38
    %p40 = scmp.ne.s32.totalorder %s29, %s30
    %p41 = scmp.eq.s32.totalorder %s21, 0
    %p42 = por %p40, %p41
    %p43 = scmp.ne.s32.totalorder %s29, %s30
    %p44 = scmp.eq.s32.totalorder %s22, 1
    %p45 = por %p43, %p44
    %p47 = scmp.ne.s32.totalorder %s30, %s46
    %p48 = scmp.eq.s32.totalorder %s22, 0
    %p49 = por %p47, %p48
    %s50 = ssub.s32 %s16, %s23
    %p51 = scmp.eq.s32.totalorder %s50, 0
    %s53 = sadd.s32 %s52, 1
    %s54 = scalar_select %p51, %s52, %s53
    %p57 = pneg %p51
    %p58 = scmp.eq.s32.totalorder %s16, 1
    %p59 = por %p57, %p58
    %p60 = scmp.ne.s32.totalorder %s52, %s55
    %p61 = scmp.eq.s32.totalorder %s16, 0
    %p62 = por %p60, %p61
    %p63 = scmp.ne.s32.totalorder %s52, %s55
    %p64 = scmp.eq.s32.totalorder %s21, 1
    %p65 = por %p63, %p64
    %p66 = scmp.ne.s32.totalorder %s55, %s56
    %p67 = scmp.eq.s32.totalorder %s21, 0
    %p68 = por %p66, %p67
    %p69 = scmp.ne.s32.totalorder %s55, %s56
    %p70 = scmp.eq.s32.totalorder %s22, 1
    %p71 = por %p69, %p70
    %p73 = scmp.ne.s32.totalorder %s56, %s72
    %p74 = scmp.eq.s32.totalorder %s22, 0
    %p75 = por %p73, %p74
    %s77 = sadd.s32 %s76, 1
    %p80 = scmp.eq.s32.totalorder %s16, 1
    %p81 = scmp.ne.s32.totalorder %s76, %s78
    %p82 = scmp.eq.s32.totalorder %s16, 0
    %p83 = por %p81, %p82
    %p84 = scmp.ne.s32.totalorder %s76, %s78
    %p85 = scmp.eq.s32.totalorder %s21, 1
    %p86 = por %p84, %p85
    %p87 = scmp.ne.s32.totalorder %s78, %s79
    %p88 = scmp.eq.s32.totalorder %s21, 0
    %p89 = por %p87, %p88
    %p90 = scmp.ne.s32.totalorder %s78, %s79
    %p91 = scmp.eq.s32.totalorder %s22, 1
    %p92 = por %p90, %p91
    %p94 = scmp.ne.s32.totalorder %s79, %s93
    %p95 = scmp.eq.s32.totalorder %s22, 0
    %p96 = por %p94, %p95
    %s98 = sadd.s32 %s97, 1
    %p101 = scmp.eq.s32.totalorder %s16, 1
    %p102 = scmp.ne.s32.totalorder %s97, %s99
    %p103 = scmp.eq.s32.totalorder %s16, 0
    %p104 = por %p102, %p103
    %p105 = scmp.ne.s32.totalorder %s97, %s99
    %p106 = scmp.eq.s32.totalorder %s21, 1
    %p107 = por %p105, %p106
    %p108 = scmp.ne.s32.totalorder %s99, %s100
    %p109 = scmp.eq.s32.totalorder %s21, 0
    %p110 = por %p108, %p109
    %p111 = scmp.ne.s32.totalorder %s99, %s100
    %p112 = scmp.eq.s32.totalorder %s22, 1
    %p113 = por %p111, %p112
    %p115 = scmp.ne.s32.totalorder %s100, %s114
    %p116 = scmp.eq.s32.totalorder %s22, 0
    %p117 = por %p115, %p116
    %s119 = sadd.s32 %s118, 1
    %p122 = scmp.eq.s32.totalorder %s16, 1
    %p123 = scmp.ne.s32.totalorder %s118, %s120
    %p124 = scmp.eq.s32.totalorder %s16, 0
    %p125 = por %p123, %p124
    %p126 = scmp.ne.s32.totalorder %s118, %s120
    %p127 = scmp.eq.s32.totalorder %s21, 1
    %p128 = por %p126, %p127
    %p129 = scmp.ne.s32.totalorder %s120, %s121
    %p130 = scmp.eq.s32.totalorder %s21, 0
    %p131 = por %p129, %p130
    %p132 = scmp.ne.s32.totalorder %s120, %s121
    %p133 = scmp.eq.s32.totalorder %s22, 1
    %p134 = por %p132, %p133
    %p136 = scmp.ne.s32.totalorder %s121, %s135
    %p137 = scmp.eq.s32.totalorder %s22, 0
    %p138 = por %p136, %p137
    %s140 = sadd.s32 %s139, 1
    %p143 = scmp.eq.s32.totalorder %s16, 1
    %p144 = scmp.ne.s32.totalorder %s139, %s141
    %p145 = scmp.eq.s32.totalorder %s16, 0
    %p146 = por %p144, %p145
    %p147 = scmp.ne.s32.totalorder %s139, %s141
    %p148 = scmp.eq.s32.totalorder %s21, 1
    %p149 = por %p147, %p148
    %p150 = scmp.ne.s32.totalorder %s141, %s142
    %p151 = scmp.eq.s32.totalorder %s21, 0
    %p152 = por %p150, %p151
    %p153 = scmp.ne.s32.totalorder %s141, %s142
    %p154 = scmp.eq.s32.totalorder %s22, 1
    %p155 = por %p153, %p154
    %p157 = scmp.ne.s32.totalorder %s142, %s156
    %p158 = scmp.eq.s32.totalorder %s22, 0
    %p159 = por %p157, %p158
    %s161 = sadd.s32 %s160, 1
    %p164 = scmp.eq.s32.totalorder %s16, 1
    %p165 = scmp.ne.s32.totalorder %s160, %s162
    %p166 = scmp.eq.s32.totalorder %s16, 0
    %p167 = por %p165, %p166
    %p168 = scmp.ne.s32.totalorder %s160, %s162
    %p169 = scmp.eq.s32.totalorder %s21, 1
    %p170 = por %p168, %p169
    %p171 = scmp.ne.s32.totalorder %s162, %s163
    %p172 = scmp.eq.s32.totalorder %s21, 0
    %p173 = por %p171, %p172
    %p174 = scmp.ne.s32.totalorder %s162, %s163
    %p175 = scmp.eq.s32.totalorder %s22, 1
    %p176 = por %p174, %p175
    %p178 = scmp.ne.s32.totalorder %s163, %s177
    %p179 = scmp.eq.s32.totalorder %s22, 0
    %p180 = por %p178, %p179
    %s182 = sadd.s32 %s181, 1
    %p185 = scmp.eq.s32.totalorder %s16, 1
    %p186 = scmp.ne.s32.totalorder %s181, %s183
    %p187 = scmp.eq.s32.totalorder %s16, 0
    %p188 = por %p186, %p187
    %p189 = scmp.ne.s32.totalorder %s181, %s183
    %p190 = scmp.eq.s32.totalorder %s21, 1
    %p191 = por %p189, %p190
    %p192 = scmp.ne.s32.totalorder %s183, %s184
    %p193 = scmp.eq.s32.totalorder %s21, 0
    %p194 = por %p192, %p193
    %p195 = scmp.ne.s32.totalorder %s183, %s184
    %p196 = scmp.eq.s32.totalorder %s22, 1
    %p197 = por %p195, %p196
    %p199 = scmp.ne.s32.totalorder %s184, %s198
    %p200 = scmp.eq.s32.totalorder %s22, 0
    %p201 = por %p199, %p200
    %s202 = ssub.s32 %s16, %s23
    %p203 = scmp.eq.s32.totalorder %s202, 0
    %s205 = sadd.s32 %s204, 1
    %s206 = scalar_select %p203, %s204, %s205
    %p209 = pneg %p203
    %p210 = scmp.eq.s32.totalorder %s16, 1
    %p211 = por %p209, %p210
    %p212 = scmp.ne.s32.totalorder %s204, %s207
    %p213 = scmp.eq.s32.totalorder %s16, 0
    %p214 = por %p212, %p213
    %p215 = scmp.ne.s32.totalorder %s204, %s207
    %p216 = scmp.eq.s32.totalorder %s21, 1
    %p217 = por %p215, %p216
    %p218 = scmp.ne.s32.totalorder %s207, %s208
    %p219 = scmp.eq.s32.totalorder %s21, 0
    %p220 = por %p218, %p219
    %p221 = scmp.ne.s32.totalorder %s207, %s208
    %p222 = scmp.eq.s32.totalorder %s22, 1
    %p223 = por %p221, %p222
    %p225 = scmp.ne.s32.totalorder %s208, %s224
    %p226 = scmp.eq.s32.totalorder %s22, 0
    %p227 = por %p225, %p226
    %s228 = ssub.s32 %s16, %s23
    %p229 = scmp.eq.s32.totalorder %s228, 0
    %s231 = sadd.s32 %s230, 1
    %s232 = scalar_select %p229, %s230, %s231
    %p235 = pneg %p229
    %p236 = scmp.eq.s32.totalorder %s16, 1
    %p237 = por %p235, %p236
    %p238 = scmp.ne.s32.totalorder %s230, %s233
    %p239 = scmp.eq.s32.totalorder %s16, 0
    %p240 = por %p238, %p239
    %p241 = scmp.ne.s32.totalorder %s230, %s233
    %p242 = scmp.eq.s32.totalorder %s21, 1
    %p243 = por %p241, %p242
    %p244 = scmp.ne.s32.totalorder %s233, %s234
    %p245 = scmp.eq.s32.totalorder %s21, 0
    %p246 = por %p244, %p245
    %p247 = scmp.ne.s32.totalorder %s233, %s234
    %p248 = scmp.eq.s32.totalorder %s22, 1
    %p249 = por %p247, %p248
    %p251 = scmp.ne.s32.totalorder %s234, %s250
    %p252 = scmp.eq.s32.totalorder %s22, 0
    %p253 = por %p251, %p252
    %p254 = scmp.le.s32.totalorder 1, %s16
    %p255 = scmp.lt.s32.totalorder %s16, 3
    %p256 = pnand %p254, %p255
    %p257 = pneg %p256
    // Predicated region
    $region9: #{affine_coupling_forward.1} parent=5 // pred_check
      _
    $region10: #{affine_coupling_forward.1} parent=5 // pred_check_branch
      %259 = sbr.rel (%p256) target = $region12
    $region11: #{affine_coupling_forward.1} parent=5 // pred_region
      %s260 = ssub.s32 %s16, 1
      // Predicated region
      $region13: #{affine_coupling_forward.1} parent=11 // pred_check
        %p261 = pneg %p89
      $region14: #{affine_coupling_forward.1} parent=11 // pred_check_branch
        %263 = sbr.rel (%p261) target = $region16
      $region15: #{affine_coupling_forward.1} parent=11 // pred_region
        _
      $region16: #{affine_coupling_forward.1} parent=11 // pred_fallthru
        _
      // Predicated region
      $region17: #{affine_coupling_forward.1} parent=11 // pred_check
        %p264 = pneg %p110
      $region18: #{affine_coupling_forward.1} parent=11 // pred_check_branch
        %266 = sbr.rel (%p264) target = $region20
      $region19: #{affine_coupling_forward.1} parent=11 // pred_region
        _
      $region20: #{affine_coupling_forward.1} parent=11 // pred_fallthru
        _
      // Predicated region
      $region21: #{affine_coupling_forward.1} parent=11 // pred_check
        %p267 = pneg %p131
      $region22: #{affine_coupling_forward.1} parent=11 // pred_check_branch
        %269 = sbr.rel (%p267) target = $region24
      $region23: #{affine_coupling_forward.1} parent=11 // pred_region
        _
      $region24: #{affine_coupling_forward.1} parent=11 // pred_fallthru
        _
      // Predicated region
      $region25: #{affine_coupling_forward.1} parent=11 // pred_check
        %p270 = pneg %p152
      $region26: #{affine_coupling_forward.1} parent=11 // pred_check_branch
        %272 = sbr.rel (%p270) target = $region28
      $region27: #{affine_coupling_forward.1} parent=11 // pred_region
        _
      $region28: #{affine_coupling_forward.1} parent=11 // pred_fallthru
        _
      // Predicated region
      $region29: #{affine_coupling_forward.1} parent=11 // pred_check
        %p273 = pneg %p173
      $region30: #{affine_coupling_forward.1} parent=11 // pred_check_branch
        %275 = sbr.rel (%p273) target = $region32
      $region31: #{affine_coupling_forward.1} parent=11 // pred_region
        _
      $region32: #{affine_coupling_forward.1} parent=11 // pred_fallthru
        _
      // Predicated region
      $region33: #{affine_coupling_forward.1} parent=11 // pred_check
        %p276 = pneg %p194
      $region34: #{affine_coupling_forward.1} parent=11 // pred_check_branch
        %278 = sbr.rel (%p276) target = $region36
      $region35: #{affine_coupling_forward.1} parent=11 // pred_region
        _
      $region36: #{affine_coupling_forward.1} parent=11 // pred_fallthru
        _
    $region12: #{affine_coupling_forward.1} parent=5 // pred_fallthru
      _
    %p279 = scmp.lt.s32.totalorder %s16, 2
    // Predicated region
    $region37: #{affine_coupling_forward.1} parent=5 // pred_check
      %p280 = pneg %p279
    $region38: #{affine_coupling_forward.1} parent=5 // pred_check_branch
      %282 = sbr.rel (%p280) target = $region40
    $region39: #{affine_coupling_forward.1} parent=5 // pred_region
      // Predicated region
      $region41: #{affine_coupling_forward.1} parent=39 // pred_check
        %p283 = pneg %p36
      $region42: #{affine_coupling_forward.1} parent=39 // pred_check_branch
        %285 = sbr.rel (%p283) target = $region44
      $region43: #{affine_coupling_forward.1} parent=39 // pred_region
        %p286 = scmp.lt.s32.totalorder %s16, 1
        %s287 = scalar_select %p286, %s16, 1
        %s288 = smul.addr %s287, 4
        %s289 = scalar_lea.vmem %s0, %s288
      $region44: #{affine_coupling_forward.1} parent=39 // pred_fallthru
        _
      // Predicated region
      $region45: #{affine_coupling_forward.1} parent=39 // pred_check
        %p290 = pneg %p62
      $region46: #{affine_coupling_forward.1} parent=39 // pred_check_branch
        %292 = sbr.rel (%p290) target = $region48
      $region47: #{affine_coupling_forward.1} parent=39 // pred_region
        %p293 = scmp.lt.s32.totalorder %s16, 1
        %s294 = scalar_select %p293, %s16, 1
        %s295 = smul.addr %s294, 4
        %s296 = scalar_lea.vmem %s1, %s295
      $region48: #{affine_coupling_forward.1} parent=39 // pred_fallthru
        _
    $region40: #{affine_coupling_forward.1} parent=5 // pred_fallthru
      _
    %p297 = scmp.le.s32.totalorder 1, %s16
    %p298 = scmp.lt.s32.totalorder %s16, 3
    %p299 = pnand %p297, %p298
    %p300 = pneg %p299
    // Predicated region
    $region49: #{affine_coupling_forward.1} parent=5 // pred_check
      _
    $region50: #{affine_coupling_forward.1} parent=5 // pred_check_branch
      %302 = sbr.rel (%p299) target = $region52
    $region51: #{affine_coupling_forward.1} parent=5 // pred_region
      %s303 = ssub.s32 %s16, 1
      %p304 = scmp.lt.s32.totalorder %s21, 1
      %s305 = scalar_select %p304, %s21, 1
      %s306 = smul.addr %s305, 4
      %s307 = scalar_lea.vmem %s0, %s306
      %p308 = pneg %p42
      %p309 = pneg %p39
      %p310 = scmp.lt.s32.totalorder %s21, 1
      %s311 = scalar_select %p310, %s21, 1
      %s312 = smul.addr %s311, 4
      %s313 = scalar_lea.vmem %s1, %s312
      %p314 = pneg %p68
      %p315 = pneg %p65
      %p316 = pneg %p89
      %p317 = pneg %p86
      %p318 = pneg %p110
      %p319 = pneg %p107
      %p320 = pneg %p131
      %p321 = pneg %p128
      %p322 = pneg %p152
      %p323 = pneg %p149
      %p324 = pneg %p173
      %p325 = pneg %p170
      %p326 = pneg %p194
      %p327 = pneg %p191
      %p328 = pneg %p220
      %p329 = pneg %p217
      %p330 = scmp.lt.s32.totalorder %s21, 1
      %s331 = scalar_select %p330, %s21, 1
      %s332 = smul.addr %s331, 4
      %s333 = scalar_lea.vmem %s8, %s332
      %p334 = pneg %p246
      %p335 = pneg %p243
      %p336 = scmp.lt.s32.totalorder %s21, 1
      %s337 = scalar_select %p336, %s21, 1
      %s338 = scalar_lea.vmem %s9, %s337
      %p339 = scmp.lt.s32.totalorder %s21, 1
      %s340 = scalar_select %p339, %s21, 1
      %s341 = smul.addr %s340, 4
      %s342 = scalar_lea.vmem %s0, %s341
      %p343 = scmp.lt.s32.totalorder %s21, 1
      %s344 = scalar_select %p343, %s21, 1
      %s345 = smul.addr %s344, 4
      %s346 = scalar_lea.vmem %s1, %s345
      %p347 = scmp.lt.s32.totalorder %s21, 1
      %s348 = scalar_select %p347, %s21, 1
      %s349 = smul.addr %s348, 4
      %s350 = scalar_lea.vmem %s8, %s349
      %p351 = scmp.lt.s32.totalorder %s21, 1
      %s352 = scalar_select %p351, %s21, 1
      %s353 = scalar_lea.vmem %s9, %s352
      %v354 = vlaneseq
      %v355 = vshrl.u32 %v354, 7
      %vm356 = vcmp.lt.s32.totalorder %v355, 0
      %v357 = vsub.s32 0, %v355
      %v358 = vsel %vm356, %v357, %v355
      %v359 = vshrl.u32 %v358, 2
      %v360 = vand.u32 %v358, 3
      %v361 = vsub.s32 0, %v360
      %v362 = vsel %vm356, %v361, %v360
      %vm363 = vcmp.ne.s32.totalorder %v362, 0
      %vm364 = vcmp.lt.s32.totalorder %v362, 0
      %vm365 = vmand %vm364, %vm363
      %v366 = vadd.s32 %v362, 4
      %v367 = vsel %vm365, %v366, %v362
      %vm368 = vcmp.ne.s32.totalorder %v367, 0
      %v369 = vsel %vm368, 1, 0
      %v370 = vcvt.s32.f32 %v369
      %vm371 = vcmp.ne.s32.totalorder %v367, 3
      %v372 = vsel %vm371, 1, 0
      %v373 = vcvt.s32.f32 %v372
      %v374 = vld [vmem:[%s342] sm:$0xf]
      %v375 = vld [vmem:[%s3] sm:$0xf]
      %v377 = vperm.slane %v375, 0
      %v378 = vperm.slane %v375, 1
      %v379 = vperm.slane %v375, 2
      %v380 = vperm.slane %v375, 3
      %s385 = scalar_lea.vmem %s2, 512
      %v386 = vld [vmem:[%s385] sm:$0xff]
      %v387 = vld [vmem:[%s385 + $0x8] sm:$0xff]
      %v388 = vld [vmem:[%s385 + $0x10] sm:$0xff]
      %v389 = vld [vmem:[%s385 + $0x18] sm:$0xff]
      %v390 = vld [vmem:[%s385 + $0x20] sm:$0xff]
      %v391 = vld [vmem:[%s385 + $0x28] sm:$0xff]
      %v392 = vld [vmem:[%s385 + $0x30] sm:$0xff]
      %v393 = vld [vmem:[%s385 + $0x38] sm:$0xff]
      %v394 = vld [vmem:[%s385 + $0x40] sm:$0xff]
      %v395 = vld [vmem:[%s385 + $0x48] sm:$0xff]
      %v396 = vld [vmem:[%s385 + $0x50] sm:$0xff]
      %v397 = vld [vmem:[%s385 + $0x58] sm:$0xff]
      %v398 = vld [vmem:[%s385 + $0x60] sm:$0xff]
      %v399 = vld [vmem:[%s385 + $0x68] sm:$0xff]
      %v400 = vld [vmem:[%s385 + $0x70] sm:$0xff]
      %v401 = vld [vmem:[%s385 + $0x78] sm:$0xff]
      %v402 = vld [vmem:[%s385 + $0x80] sm:$0xff]
      %v403 = vld [vmem:[%s385 + $0x88] sm:$0xff]
      %v404 = vld [vmem:[%s385 + $0x90] sm:$0xff]
      %v405 = vld [vmem:[%s385 + $0x98] sm:$0xff]
      %v406 = vld [vmem:[%s385 + $0xa0] sm:$0xff]
      %v407 = vld [vmem:[%s385 + $0xa8] sm:$0xff]
      %v408 = vld [vmem:[%s385 + $0xb0] sm:$0xff]
      %v409 = vld [vmem:[%s385 + $0xb8] sm:$0xff]
      %v410 = vld [vmem:[%s385 + $0xc0] sm:$0xff]
      %v411 = vld [vmem:[%s385 + $0xc8] sm:$0xff]
      %v412 = vld [vmem:[%s385 + $0xd0] sm:$0xff]
      %v413 = vld [vmem:[%s385 + $0xd8] sm:$0xff]
      %v414 = vld [vmem:[%s385 + $0xe0] sm:$0xff]
      %v415 = vld [vmem:[%s385 + $0xe8] sm:$0xff]
      %v416 = vld [vmem:[%s385 + $0xf0] sm:$0xff]
      %v417 = vld [vmem:[%s385 + $0xf8] sm:$0xff]
      %v418 = vld [vmem:[%s385 + $0x100] sm:$0xff]
      %v419 = vld [vmem:[%s385 + $0x108] sm:$0xff]
      %v420 = vld [vmem:[%s385 + $0x110] sm:$0xff]
      %v421 = vld [vmem:[%s385 + $0x118] sm:$0xff]
      %v422 = vld [vmem:[%s385 + $0x120] sm:$0xff]
      %v423 = vld [vmem:[%s385 + $0x128] sm:$0xff]
      %v424 = vld [vmem:[%s385 + $0x130] sm:$0xff]
      %v425 = vld [vmem:[%s385 + $0x138] sm:$0xff]
      %v426 = vld [vmem:[%s385 + $0x140] sm:$0xff]
      %v427 = vld [vmem:[%s385 + $0x148] sm:$0xff]
      %v428 = vld [vmem:[%s385 + $0x150] sm:$0xff]
      %v429 = vld [vmem:[%s385 + $0x158] sm:$0xff]
      %v430 = vld [vmem:[%s385 + $0x160] sm:$0xff]
      %v431 = vld [vmem:[%s385 + $0x168] sm:$0xff]
      %v432 = vld [vmem:[%s385 + $0x170] sm:$0xff]
      %v433 = vld [vmem:[%s385 + $0x178] sm:$0xff]
      %v434 = vld [vmem:[%s385 + $0x180] sm:$0xff]
      %v435 = vld [vmem:[%s385 + $0x188] sm:$0xff]
      %v436 = vld [vmem:[%s385 + $0x190] sm:$0xff]
      %v437 = vld [vmem:[%s385 + $0x198] sm:$0xff]
      %v438 = vld [vmem:[%s385 + $0x1a0] sm:$0xff]
      %v439 = vld [vmem:[%s385 + $0x1a8] sm:$0xff]
      %v440 = vld [vmem:[%s385 + $0x1b0] sm:$0xff]
      %v441 = vld [vmem:[%s385 + $0x1b8] sm:$0xff]
      %v442 = vld [vmem:[%s385 + $0x1c0] sm:$0xff]
      %v443 = vld [vmem:[%s385 + $0x1c8] sm:$0xff]
      %v444 = vld [vmem:[%s385 + $0x1d0] sm:$0xff]
      %v445 = vld [vmem:[%s385 + $0x1d8] sm:$0xff]
      %v446 = vld [vmem:[%s385 + $0x1e0] sm:$0xff]
      %v447 = vld [vmem:[%s385 + $0x1e8] sm:$0xff]
      %v448 = vld [vmem:[%s385 + $0x1f0] sm:$0xff]
      %v449 = vld [vmem:[%s385 + $0x1f8] sm:$0xff]
      %450 = vmatpush.msra.mxu0 %v446
      %451 = vmatpush.msra.mxu0 %v442
      %452 = vmatpush.msra.mxu0 %v438
      %453 = vmatpush.msra.mxu0 %v434
      %454 = vmatpush.msra.mxu0 %v430
      %455 = vmatpush.msra.mxu0 %v426
      %456 = vmatpush.msra.mxu0 %v422
      %457 = vmatpush.msra.mxu0 %v418
      %458 = vmatpush.msra.mxu0 %v414
      %459 = vmatpush.msra.mxu0 %v410
      %460 = vmatpush.msra.mxu0 %v406
      %461 = vmatpush.msra.mxu0 %v402
      %462 = vmatpush.msra.mxu0 %v398
      %463 = vmatpush.msra.mxu0 %v394
      %464 = vmatpush.msra.mxu0 %v390
      %465 = vmatpush.msra.mxu0 %v386
      %466 = vmatmul.f32.gmra.mxu0 %v374
      %v467 = vpop.f32.mrf.mxu0
      %v468 = vadd.f32 0.0, %v467
      %469 = vdwg.mxu0
      %470 = vmatpush.msra.mxu0 %v447
      %471 = vmatpush.msra.mxu0 %v443
      %472 = vmatpush.msra.mxu0 %v439
      %473 = vmatpush.msra.mxu0 %v435
      %474 = vmatpush.msra.mxu0 %v431
      %475 = vmatpush.msra.mxu0 %v427
      %476 = vmatpush.msra.mxu0 %v423
      %477 = vmatpush.msra.mxu0 %v419
      %478 = vmatpush.msra.mxu0 %v415
      %479 = vmatpush.msra.mxu0 %v411
      %480 = vmatpush.msra.mxu0 %v407
      %481 = vmatpush.msra.mxu0 %v403
      %482 = vmatpush.msra.mxu0 %v399
      %483 = vmatpush.msra.mxu0 %v395
      %484 = vmatpush.msra.mxu0 %v391
      %485 = vmatpush.msra.mxu0 %v387
      %486 = vmatmul.f32.gmra.mxu0 %v374
      %v487 = vpop.f32.mrf.mxu0
      %v488 = vadd.f32 0.0, %v487
      %489 = vdwg.mxu0
      %490 = vmatpush.msra.mxu0 %v448
      %491 = vmatpush.msra.mxu0 %v444
      %492 = vmatpush.msra.mxu0 %v440
      %493 = vmatpush.msra.mxu0 %v436
      %494 = vmatpush.msra.mxu0 %v432
      %495 = vmatpush.msra.mxu0 %v428
      %496 = vmatpush.msra.mxu0 %v424
      %497 = vmatpush.msra.mxu0 %v420
      %498 = vmatpush.msra.mxu0 %v416
      %499 = vmatpush.msra.mxu0 %v412
      %500 = vmatpush.msra.mxu0 %v408
      %501 = vmatpush.msra.mxu0 %v404
      %502 = vmatpush.msra.mxu0 %v400
      %503 = vmatpush.msra.mxu0 %v396
      %504 = vmatpush.msra.mxu0 %v392
      %505 = vmatpush.msra.mxu0 %v388
      %506 = vmatmul.f32.gmra.mxu0 %v374
      %v507 = vpop.f32.mrf.mxu0
      %v508 = vadd.f32 0.0, %v507
      %509 = vdwg.mxu0
      %510 = vmatpush.msra.mxu0 %v449
      %511 = vmatpush.msra.mxu0 %v445
      %512 = vmatpush.msra.mxu0 %v441
      %513 = vmatpush.msra.mxu0 %v437
      %514 = vmatpush.msra.mxu0 %v433
      %515 = vmatpush.msra.mxu0 %v429
      %516 = vmatpush.msra.mxu0 %v425
      %517 = vmatpush.msra.mxu0 %v421
      %518 = vmatpush.msra.mxu0 %v417
      %519 = vmatpush.msra.mxu0 %v413
      %520 = vmatpush.msra.mxu0 %v409
      %521 = vmatpush.msra.mxu0 %v405
      %522 = vmatpush.msra.mxu0 %v401
      %523 = vmatpush.msra.mxu0 %v397
      %524 = vmatpush.msra.mxu0 %v393
      %525 = vmatpush.msra.mxu0 %v389
      %526 = vmatmul.f32.gmra.mxu0 %v374
      %v527 = vpop.f32.mrf.mxu0
      %v528 = vadd.f32 0.0, %v527
      %529 = vdwg.mxu0
      %v530 = vadd.f32 %v377, %v468
      %v531 = vadd.f32 %v378, %v488
      %v532 = vadd.f32 %v379, %v508
      %v533 = vadd.f32 %v380, %v528
      %vm534 = vcmask 1047556
      %v535 = vrot.slane %v374, 4
      %v536 = vsel %vm534, %v535, %v374
      %v537 = vrot.slane %v536, 4
      %v538 = vsel %vm534, %v537, %v374
      %v540 = vrot.slane %v370, 5
      %v542 = vmul.f32 %v538, %v540
      %v544 = vrot.slane %v373, 7
      %v546 = vmul.f32 %v538, %v544
      %v547 = vld [vmem:[%s2] sm:$0xff]
      %v548 = vld [vmem:[%s2 + $0x8] sm:$0xff]
      %v549 = vld [vmem:[%s2 + $0x10] sm:$0xff]
      %v550 = vld [vmem:[%s2 + $0x18] sm:$0xff]
      %v551 = vld [vmem:[%s2 + $0x20] sm:$0xff]
      %v552 = vld [vmem:[%s2 + $0x28] sm:$0xff]
      %v553 = vld [vmem:[%s2 + $0x30] sm:$0xff]
      %v554 = vld [vmem:[%s2 + $0x38] sm:$0xff]
      %v555 = vld [vmem:[%s2 + $0x40] sm:$0xff]
      %v556 = vld [vmem:[%s2 + $0x48] sm:$0xff]
      %v557 = vld [vmem:[%s2 + $0x50] sm:$0xff]
      %v558 = vld [vmem:[%s2 + $0x58] sm:$0xff]
      %v559 = vld [vmem:[%s2 + $0x60] sm:$0xff]
      %v560 = vld [vmem:[%s2 + $0x68] sm:$0xff]
      %v561 = vld [vmem:[%s2 + $0x70] sm:$0xff]
      %v562 = vld [vmem:[%s2 + $0x78] sm:$0xff]
      %v563 = vld [vmem:[%s2 + $0x80] sm:$0xff]
      %v564 = vld [vmem:[%s2 + $0x88] sm:$0xff]
      %v565 = vld [vmem:[%s2 + $0x90] sm:$0xff]
      %v566 = vld [vmem:[%s2 + $0x98] sm:$0xff]
      %v567 = vld [vmem:[%s2 + $0xa0] sm:$0xff]
      %v568 = vld [vmem:[%s2 + $0xa8] sm:$0xff]
      %v569 = vld [vmem:[%s2 + $0xb0] sm:$0xff]
      %v570 = vld [vmem:[%s2 + $0xb8] sm:$0xff]
      %v571 = vld [vmem:[%s2 + $0xc0] sm:$0xff]
      %v572 = vld [vmem:[%s2 + $0xc8] sm:$0xff]
      %v573 = vld [vmem:[%s2 + $0xd0] sm:$0xff]
      %v574 = vld [vmem:[%s2 + $0xd8] sm:$0xff]
      %v575 = vld [vmem:[%s2 + $0xe0] sm:$0xff]
      %v576 = vld [vmem:[%s2 + $0xe8] sm:$0xff]
      %v577 = vld [vmem:[%s2 + $0xf0] sm:$0xff]
      %v578 = vld [vmem:[%s2 + $0xf8] sm:$0xff]
      %v579 = vld [vmem:[%s2 + $0x100] sm:$0xff]
      %v580 = vld [vmem:[%s2 + $0x108] sm:$0xff]
      %v581 = vld [vmem:[%s2 + $0x110] sm:$0xff]
      %v582 = vld [vmem:[%s2 + $0x118] sm:$0xff]
      %v583 = vld [vmem:[%s2 + $0x120] sm:$0xff]
      %v584 = vld [vmem:[%s2 + $0x128] sm:$0xff]
      %v585 = vld [vmem:[%s2 + $0x130] sm:$0xff]
      %v586 = vld [vmem:[%s2 + $0x138] sm:$0xff]
      %v587 = vld [vmem:[%s2 + $0x140] sm:$0xff]
      %v588 = vld [vmem:[%s2 + $0x148] sm:$0xff]
      %v589 = vld [vmem:[%s2 + $0x150] sm:$0xff]
      %v590 = vld [vmem:[%s2 + $0x158] sm:$0xff]
      %v591 = vld [vmem:[%s2 + $0x160] sm:$0xff]
      %v592 = vld [vmem:[%s2 + $0x168] sm:$0xff]
      %v593 = vld [vmem:[%s2 + $0x170] sm:$0xff]
      %v594 = vld [vmem:[%s2 + $0x178] sm:$0xff]
      %v595 = vld [vmem:[%s2 + $0x180] sm:$0xff]
      %v596 = vld [vmem:[%s2 + $0x188] sm:$0xff]
      %v597 = vld [vmem:[%s2 + $0x190] sm:$0xff]
      %v598 = vld [vmem:[%s2 + $0x198] sm:$0xff]
      %v599 = vld [vmem:[%s2 + $0x1a0] sm:$0xff]
      %v600 = vld [vmem:[%s2 + $0x1a8] sm:$0xff]
      %v601 = vld [vmem:[%s2 + $0x1b0] sm:$0xff]
      %v602 = vld [vmem:[%s2 + $0x1b8] sm:$0xff]
      %v603 = vld [vmem:[%s2 + $0x1c0] sm:$0xff]
      %v604 = vld [vmem:[%s2 + $0x1c8] sm:$0xff]
      %v605 = vld [vmem:[%s2 + $0x1d0] sm:$0xff]
      %v606 = vld [vmem:[%s2 + $0x1d8] sm:$0xff]
      %v607 = vld [vmem:[%s2 + $0x1e0] sm:$0xff]
      %v608 = vld [vmem:[%s2 + $0x1e8] sm:$0xff]
      %v609 = vld [vmem:[%s2 + $0x1f0] sm:$0xff]
      %v610 = vld [vmem:[%s2 + $0x1f8] sm:$0xff]
      %v612 = vrot.slane %v542, 3
      %614 = vmatpush.msra.mxu0 %v607
      %615 = vmatpush.msra.mxu0 %v603
      %616 = vmatpush.msra.mxu0 %v599
      %617 = vmatpush.msra.mxu0 %v595
      %618 = vmatpush.msra.mxu0 %v591
      %619 = vmatpush.msra.mxu0 %v587
      %620 = vmatpush.msra.mxu0 %v583
      %621 = vmatpush.msra.mxu0 %v579
      %622 = vmatpush.msra.mxu0 %v575
      %623 = vmatpush.msra.mxu0 %v571
      %624 = vmatpush.msra.mxu0 %v567
      %625 = vmatpush.msra.mxu0 %v563
      %626 = vmatpush.msra.mxu0 %v559
      %627 = vmatpush.msra.mxu0 %v555
      %628 = vmatpush.msra.mxu0 %v551
      %629 = vmatpush.msra.mxu0 %v547
      %630 = vmatmul.f32.gmra.mxu0 %v612
      %v631 = vpop.f32.mrf.mxu0
      %v632 = vadd.f32 0.0, %v631
      %633 = vdwg.mxu0
      %634 = vmatpush.msra.mxu0 %v608
      %635 = vmatpush.msra.mxu0 %v604
      %636 = vmatpush.msra.mxu0 %v600
      %637 = vmatpush.msra.mxu0 %v596
      %638 = vmatpush.msra.mxu0 %v592
      %639 = vmatpush.msra.mxu0 %v588
      %640 = vmatpush.msra.mxu0 %v584
      %641 = vmatpush.msra.mxu0 %v580
      %642 = vmatpush.msra.mxu0 %v576
      %643 = vmatpush.msra.mxu0 %v572
      %644 = vmatpush.msra.mxu0 %v568
      %645 = vmatpush.msra.mxu0 %v564
      %646 = vmatpush.msra.mxu0 %v560
      %647 = vmatpush.msra.mxu0 %v556
      %648 = vmatpush.msra.mxu0 %v552
      %649 = vmatpush.msra.mxu0 %v548
      %650 = vmatmul.f32.gmra.mxu0 %v612
      %v651 = vpop.f32.mrf.mxu0
      %v652 = vadd.f32 0.0, %v651
      %653 = vdwg.mxu0
      %654 = vmatpush.msra.mxu0 %v609
      %655 = vmatpush.msra.mxu0 %v605
      %656 = vmatpush.msra.mxu0 %v601
      %657 = vmatpush.msra.mxu0 %v597
      %658 = vmatpush.msra.mxu0 %v593
      %659 = vmatpush.msra.mxu0 %v589
      %660 = vmatpush.msra.mxu0 %v585
      %661 = vmatpush.msra.mxu0 %v581
      %662 = vmatpush.msra.mxu0 %v577
      %663 = vmatpush.msra.mxu0 %v573
      %664 = vmatpush.msra.mxu0 %v569
      %665 = vmatpush.msra.mxu0 %v565
      %666 = vmatpush.msra.mxu0 %v561
      %667 = vmatpush.msra.mxu0 %v557
      %668 = vmatpush.msra.mxu0 %v553
      %669 = vmatpush.msra.mxu0 %v549
      %670 = vmatmul.f32.gmra.mxu0 %v612
      %v671 = vpop.f32.mrf.mxu0
      %v672 = vadd.f32 0.0, %v671
      %673 = vdwg.mxu0
      %674 = vmatpush.msra.mxu0 %v610
      %675 = vmatpush.msra.mxu0 %v606
      %676 = vmatpush.msra.mxu0 %v602
      %677 = vmatpush.msra.mxu0 %v598
      %678 = vmatpush.msra.mxu0 %v594
      %679 = vmatpush.msra.mxu0 %v590
      %680 = vmatpush.msra.mxu0 %v586
      %681 = vmatpush.msra.mxu0 %v582
      %682 = vmatpush.msra.mxu0 %v578
      %683 = vmatpush.msra.mxu0 %v574
      %684 = vmatpush.msra.mxu0 %v570
      %685 = vmatpush.msra.mxu0 %v566
      %686 = vmatpush.msra.mxu0 %v562
      %687 = vmatpush.msra.mxu0 %v558
      %688 = vmatpush.msra.mxu0 %v554
      %689 = vmatpush.msra.mxu0 %v550
      %690 = vmatmul.f32.gmra.mxu0 %v612
      %v691 = vpop.f32.mrf.mxu0
      %v692 = vadd.f32 0.0, %v691
      %693 = vdwg.mxu0
      %v694 = vadd.f32 %v530, %v632
      %v695 = vadd.f32 %v531, %v652
      %v696 = vadd.f32 %v532, %v672
      %v697 = vadd.f32 %v533, %v692
      %s698 = scalar_lea.vmem %s2, 1024
      %v699 = vld [vmem:[%s698] sm:$0xff]
      %v700 = vld [vmem:[%s698 + $0x8] sm:$0xff]
      %v701 = vld [vmem:[%s698 + $0x10] sm:$0xff]
      %v702 = vld [vmem:[%s698 + $0x18] sm:$0xff]
      %v703 = vld [vmem:[%s698 + $0x20] sm:$0xff]
      %v704 = vld [vmem:[%s698 + $0x28] sm:$0xff]
      %v705 = vld [vmem:[%s698 + $0x30] sm:$0xff]
      %v706 = vld [vmem:[%s698 + $0x38] sm:$0xff]
      %v707 = vld [vmem:[%s698 + $0x40] sm:$0xff]
      %v708 = vld [vmem:[%s698 + $0x48] sm:$0xff]
      %v709 = vld [vmem:[%s698 + $0x50] sm:$0xff]
      %v710 = vld [vmem:[%s698 + $0x58] sm:$0xff]
      %v711 = vld [vmem:[%s698 + $0x60] sm:$0xff]
      %v712 = vld [vmem:[%s698 + $0x68] sm:$0xff]
      %v713 = vld [vmem:[%s698 + $0x70] sm:$0xff]
      %v714 = vld [vmem:[%s698 + $0x78] sm:$0xff]
      %v715 = vld [vmem:[%s698 + $0x80] sm:$0xff]
      %v716 = vld [vmem:[%s698 + $0x88] sm:$0xff]
      %v717 = vld [vmem:[%s698 + $0x90] sm:$0xff]
      %v718 = vld [vmem:[%s698 + $0x98] sm:$0xff]
      %v719 = vld [vmem:[%s698 + $0xa0] sm:$0xff]
      %v720 = vld [vmem:[%s698 + $0xa8] sm:$0xff]
      %v721 = vld [vmem:[%s698 + $0xb0] sm:$0xff]
      %v722 = vld [vmem:[%s698 + $0xb8] sm:$0xff]
      %v723 = vld [vmem:[%s698 + $0xc0] sm:$0xff]
      %v724 = vld [vmem:[%s698 + $0xc8] sm:$0xff]
      %v725 = vld [vmem:[%s698 + $0xd0] sm:$0xff]
      %v726 = vld [vmem:[%s698 + $0xd8] sm:$0xff]
      %v727 = vld [vmem:[%s698 + $0xe0] sm:$0xff]
      %v728 = vld [vmem:[%s698 + $0xe8] sm:$0xff]
      %v729 = vld [vmem:[%s698 + $0xf0] sm:$0xff]
      %v730 = vld [vmem:[%s698 + $0xf8] sm:$0xff]
      %v731 = vld [vmem:[%s698 + $0x100] sm:$0xff]
      %v732 = vld [vmem:[%s698 + $0x108] sm:$0xff]
      %v733 = vld [vmem:[%s698 + $0x110] sm:$0xff]
      %v734 = vld [vmem:[%s698 + $0x118] sm:$0xff]
      %v735 = vld [vmem:[%s698 + $0x120] sm:$0xff]
      %v736 = vld [vmem:[%s698 + $0x128] sm:$0xff]
      %v737 = vld [vmem:[%s698 + $0x130] sm:$0xff]
      %v738 = vld [vmem:[%s698 + $0x138] sm:$0xff]
      %v739 = vld [vmem:[%s698 + $0x140] sm:$0xff]
      %v740 = vld [vmem:[%s698 + $0x148] sm:$0xff]
      %v741 = vld [vmem:[%s698 + $0x150] sm:$0xff]
      %v742 = vld [vmem:[%s698 + $0x158] sm:$0xff]
      %v743 = vld [vmem:[%s698 + $0x160] sm:$0xff]
      %v744 = vld [vmem:[%s698 + $0x168] sm:$0xff]
      %v745 = vld [vmem:[%s698 + $0x170] sm:$0xff]
      %v746 = vld [vmem:[%s698 + $0x178] sm:$0xff]
      %v747 = vld [vmem:[%s698 + $0x180] sm:$0xff]
      %v748 = vld [vmem:[%s698 + $0x188] sm:$0xff]
      %v749 = vld [vmem:[%s698 + $0x190] sm:$0xff]
      %v750 = vld [vmem:[%s698 + $0x198] sm:$0xff]
      %v751 = vld [vmem:[%s698 + $0x1a0] sm:$0xff]
      %v752 = vld [vmem:[%s698 + $0x1a8] sm:$0xff]
      %v753 = vld [vmem:[%s698 + $0x1b0] sm:$0xff]
      %v754 = vld [vmem:[%s698 + $0x1b8] sm:$0xff]
      %v755 = vld [vmem:[%s698 + $0x1c0] sm:$0xff]
      %v756 = vld [vmem:[%s698 + $0x1c8] sm:$0xff]
      %v757 = vld [vmem:[%s698 + $0x1d0] sm:$0xff]
      %v758 = vld [vmem:[%s698 + $0x1d8] sm:$0xff]
      %v759 = vld [vmem:[%s698 + $0x1e0] sm:$0xff]
      %v760 = vld [vmem:[%s698 + $0x1e8] sm:$0xff]
      %v761 = vld [vmem:[%s698 + $0x1f0] sm:$0xff]
      %v762 = vld [vmem:[%s698 + $0x1f8] sm:$0xff]
      %v764 = vrot.slane %v546, 1
      %766 = vmatpush.msra.mxu0 %v759
      %767 = vmatpush.msra.mxu0 %v755
      %768 = vmatpush.msra.mxu0 %v751
      %769 = vmatpush.msra.mxu0 %v747
      %770 = vmatpush.msra.mxu0 %v743
      %771 = vmatpush.msra.mxu0 %v739
      %772 = vmatpush.msra.mxu0 %v735
      %773 = vmatpush.msra.mxu0 %v731
      %774 = vmatpush.msra.mxu0 %v727
      %775 = vmatpush.msra.mxu0 %v723
      %776 = vmatpush.msra.mxu0 %v719
      %777 = vmatpush.msra.mxu0 %v715
      %778 = vmatpush.msra.mxu0 %v711
      %779 = vmatpush.msra.mxu0 %v707
      %780 = vmatpush.msra.mxu0 %v703
      %781 = vmatpush.msra.mxu0 %v699
      %782 = vmatmul.f32.gmra.mxu0 %v764
      %v783 = vpop.f32.mrf.mxu0
      %v784 = vadd.f32 0.0, %v783
      %785 = vdwg.mxu0
      %786 = vmatpush.msra.mxu0 %v760
      %787 = vmatpush.msra.mxu0 %v756
      %788 = vmatpush.msra.mxu0 %v752
      %789 = vmatpush.msra.mxu0 %v748
      %790 = vmatpush.msra.mxu0 %v744
      %791 = vmatpush.msra.mxu0 %v740
      %792 = vmatpush.msra.mxu0 %v736
      %793 = vmatpush.msra.mxu0 %v732
      %794 = vmatpush.msra.mxu0 %v728
      %795 = vmatpush.msra.mxu0 %v724
      %796 = vmatpush.msra.mxu0 %v720
      %797 = vmatpush.msra.mxu0 %v716
      %798 = vmatpush.msra.mxu0 %v712
      %799 = vmatpush.msra.mxu0 %v708
      %800 = vmatpush.msra.mxu0 %v704
      %801 = vmatpush.msra.mxu0 %v700
      %802 = vmatmul.f32.gmra.mxu0 %v764
      %v803 = vpop.f32.mrf.mxu0
      %v804 = vadd.f32 0.0, %v803
      %805 = vdwg.mxu0
      %806 = vmatpush.msra.mxu0 %v761
      %807 = vmatpush.msra.mxu0 %v757
      %808 = vmatpush.msra.mxu0 %v753
      %809 = vmatpush.msra.mxu0 %v749
      %810 = vmatpush.msra.mxu0 %v745
      %811 = vmatpush.msra.mxu0 %v741
      %812 = vmatpush.msra.mxu0 %v737
      %813 = vmatpush.msra.mxu0 %v733
      %814 = vmatpush.msra.mxu0 %v729
      %815 = vmatpush.msra.mxu0 %v725
      %816 = vmatpush.msra.mxu0 %v721
      %817 = vmatpush.msra.mxu0 %v717
      %818 = vmatpush.msra.mxu0 %v713
      %819 = vmatpush.msra.mxu0 %v709
      %820 = vmatpush.msra.mxu0 %v705
      %821 = vmatpush.msra.mxu0 %v701
      %822 = vmatmul.f32.gmra.mxu0 %v764
      %v823 = vpop.f32.mrf.mxu0
      %v824 = vadd.f32 0.0, %v823
      %825 = vdwg.mxu0
      %826 = vmatpush.msra.mxu0 %v762
      %827 = vmatpush.msra.mxu0 %v758
      %828 = vmatpush.msra.mxu0 %v754
      %829 = vmatpush.msra.mxu0 %v750
      %830 = vmatpush.msra.mxu0 %v746
      %831 = vmatpush.msra.mxu0 %v742
      %832 = vmatpush.msra.mxu0 %v738
      %833 = vmatpush.msra.mxu0 %v734
      %834 = vmatpush.msra.mxu0 %v730
      %835 = vmatpush.msra.mxu0 %v726
      %836 = vmatpush.msra.mxu0 %v722
      %837 = vmatpush.msra.mxu0 %v718
      %838 = vmatpush.msra.mxu0 %v714
      %839 = vmatpush.msra.mxu0 %v710
      %840 = vmatpush.msra.mxu0 %v706
      %841 = vmatpush.msra.mxu0 %v702
      %842 = vmatmul.f32.gmra.mxu0 %v764
      %v843 = vpop.f32.mrf.mxu0
      %v844 = vadd.f32 0.0, %v843
      %845 = vdwg.mxu0
      %v846 = vadd.f32 %v694, %v784
      %v847 = vadd.f32 %v695, %v804
      %v848 = vadd.f32 %v696, %v824
      %v849 = vadd.f32 %v697, %v844
      %v850 = vmax.f32 %v846, 0.0
      %v851 = vmax.f32 %v847, 0.0
      %v852 = vmax.f32 %v848, 0.0
      %v853 = vmax.f32 %v849, 0.0
      %v854 = vld [vmem:[%s4] sm:$0xff]
      %v855 = vld [vmem:[%s4 + $0x8] sm:$0xff]
      %v856 = vld [vmem:[%s4 + $0x10] sm:$0xff]
      %v857 = vld [vmem:[%s4 + $0x18] sm:$0xff]
      %v858 = vld [vmem:[%s4 + $0x20] sm:$0xff]
      %v859 = vld [vmem:[%s4 + $0x28] sm:$0xff]
      %v860 = vld [vmem:[%s4 + $0x30] sm:$0xff]
      %v861 = vld [vmem:[%s4 + $0x38] sm:$0xff]
      %v862 = vld [vmem:[%s4 + $0x40] sm:$0xff]
      %v863 = vld [vmem:[%s4 + $0x48] sm:$0xff]
      %v864 = vld [vmem:[%s4 + $0x50] sm:$0xff]
      %v865 = vld [vmem:[%s4 + $0x58] sm:$0xff]
      %v866 = vld [vmem:[%s4 + $0x60] sm:$0xff]
      %v867 = vld [vmem:[%s4 + $0x68] sm:$0xff]
      %v868 = vld [vmem:[%s4 + $0x70] sm:$0xff]
      %v869 = vld [vmem:[%s4 + $0x78] sm:$0xff]
      %v870 = vld [vmem:[%s4 + $0x80] sm:$0xff]
      %v871 = vld [vmem:[%s4 + $0x88] sm:$0xff]
      %v872 = vld [vmem:[%s4 + $0x90] sm:$0xff]
      %v873 = vld [vmem:[%s4 + $0x98] sm:$0xff]
      %v874 = vld [vmem:[%s4 + $0xa0] sm:$0xff]
      %v875 = vld [vmem:[%s4 + $0xa8] sm:$0xff]
      %v876 = vld [vmem:[%s4 + $0xb0] sm:$0xff]
      %v877 = vld [vmem:[%s4 + $0xb8] sm:$0xff]
      %v878 = vld [vmem:[%s4 + $0xc0] sm:$0xff]
      %v879 = vld [vmem:[%s4 + $0xc8] sm:$0xff]
      %v880 = vld [vmem:[%s4 + $0xd0] sm:$0xff]
      %v881 = vld [vmem:[%s4 + $0xd8] sm:$0xff]
      %v882 = vld [vmem:[%s4 + $0xe0] sm:$0xff]
      %v883 = vld [vmem:[%s4 + $0xe8] sm:$0xff]
      %v884 = vld [vmem:[%s4 + $0xf0] sm:$0xff]
      %v885 = vld [vmem:[%s4 + $0xf8] sm:$0xff]
      %v886 = vld [vmem:[%s4 + $0x100] sm:$0xff]
      %v887 = vld [vmem:[%s4 + $0x108] sm:$0xff]
      %v888 = vld [vmem:[%s4 + $0x110] sm:$0xff]
      %v889 = vld [vmem:[%s4 + $0x118] sm:$0xff]
      %v890 = vld [vmem:[%s4 + $0x120] sm:$0xff]
      %v891 = vld [vmem:[%s4 + $0x128] sm:$0xff]
      %v892 = vld [vmem:[%s4 + $0x130] sm:$0xff]
      %v893 = vld [vmem:[%s4 + $0x138] sm:$0xff]
      %v894 = vld [vmem:[%s4 + $0x140] sm:$0xff]
      %v895 = vld [vmem:[%s4 + $0x148] sm:$0xff]
      %v896 = vld [vmem:[%s4 + $0x150] sm:$0xff]
      %v897 = vld [vmem:[%s4 + $0x158] sm:$0xff]
      %v898 = vld [vmem:[%s4 + $0x160] sm:$0xff]
      %v899 = vld [vmem:[%s4 + $0x168] sm:$0xff]
      %v900 = vld [vmem:[%s4 + $0x170] sm:$0xff]
      %v901 = vld [vmem:[%s4 + $0x178] sm:$0xff]
      %v902 = vld [vmem:[%s4 + $0x180] sm:$0xff]
      %v903 = vld [vmem:[%s4 + $0x188] sm:$0xff]
      %v904 = vld [vmem:[%s4 + $0x190] sm:$0xff]
      %v905 = vld [vmem:[%s4 + $0x198] sm:$0xff]
      %v906 = vld [vmem:[%s4 + $0x1a0] sm:$0xff]
      %v907 = vld [vmem:[%s4 + $0x1a8] sm:$0xff]
      %v908 = vld [vmem:[%s4 + $0x1b0] sm:$0xff]
      %v909 = vld [vmem:[%s4 + $0x1b8] sm:$0xff]
      %v910 = vld [vmem:[%s4 + $0x1c0] sm:$0xff]
      %v911 = vld [vmem:[%s4 + $0x1c8] sm:$0xff]
      %v912 = vld [vmem:[%s4 + $0x1d0] sm:$0xff]
      %v913 = vld [vmem:[%s4 + $0x1d8] sm:$0xff]
      %v914 = vld [vmem:[%s4 + $0x1e0] sm:$0xff]
      %v915 = vld [vmem:[%s4 + $0x1e8] sm:$0xff]
      %v916 = vld [vmem:[%s4 + $0x1f0] sm:$0xff]
      %v917 = vld [vmem:[%s4 + $0x1f8] sm:$0xff]
      %v918 = vld [vmem:[%s4 + $0x200] sm:$0xff]
      %v919 = vld [vmem:[%s4 + $0x208] sm:$0xff]
      %v920 = vld [vmem:[%s4 + $0x210] sm:$0xff]
      %v921 = vld [vmem:[%s4 + $0x218] sm:$0xff]
      %v922 = vld [vmem:[%s4 + $0x220] sm:$0xff]
      %v923 = vld [vmem:[%s4 + $0x228] sm:$0xff]
      %v924 = vld [vmem:[%s4 + $0x230] sm:$0xff]
      %v925 = vld [vmem:[%s4 + $0x238] sm:$0xff]
      %v926 = vld [vmem:[%s4 + $0x240] sm:$0xff]
      %v927 = vld [vmem:[%s4 + $0x248] sm:$0xff]
      %v928 = vld [vmem:[%s4 + $0x250] sm:$0xff]
      %v929 = vld [vmem:[%s4 + $0x258] sm:$0xff]
      %v930 = vld [vmem:[%s4 + $0x260] sm:$0xff]
      %v931 = vld [vmem:[%s4 + $0x268] sm:$0xff]
      %v932 = vld [vmem:[%s4 + $0x270] sm:$0xff]
      %v933 = vld [vmem:[%s4 + $0x278] sm:$0xff]
      %v934 = vld [vmem:[%s4 + $0x280] sm:$0xff]
      %v935 = vld [vmem:[%s4 + $0x288] sm:$0xff]
      %v936 = vld [vmem:[%s4 + $0x290] sm:$0xff]
      %v937 = vld [vmem:[%s4 + $0x298] sm:$0xff]
      %v938 = vld [vmem:[%s4 + $0x2a0] sm:$0xff]
      %v939 = vld [vmem:[%s4 + $0x2a8] sm:$0xff]
      %v940 = vld [vmem:[%s4 + $0x2b0] sm:$0xff]
      %v941 = vld [vmem:[%s4 + $0x2b8] sm:$0xff]
      %v942 = vld [vmem:[%s4 + $0x2c0] sm:$0xff]
      %v943 = vld [vmem:[%s4 + $0x2c8] sm:$0xff]
      %v944 = vld [vmem:[%s4 + $0x2d0] sm:$0xff]
      %v945 = vld [vmem:[%s4 + $0x2d8] sm:$0xff]
      %v946 = vld [vmem:[%s4 + $0x2e0] sm:$0xff]
      %v947 = vld [vmem:[%s4 + $0x2e8] sm:$0xff]
      %v948 = vld [vmem:[%s4 + $0x2f0] sm:$0xff]
      %v949 = vld [vmem:[%s4 + $0x2f8] sm:$0xff]
      %v950 = vld [vmem:[%s4 + $0x300] sm:$0xff]
      %v951 = vld [vmem:[%s4 + $0x308] sm:$0xff]
      %v952 = vld [vmem:[%s4 + $0x310] sm:$0xff]
      %v953 = vld [vmem:[%s4 + $0x318] sm:$0xff]
      %v954 = vld [vmem:[%s4 + $0x320] sm:$0xff]
      %v955 = vld [vmem:[%s4 + $0x328] sm:$0xff]
      %v956 = vld [vmem:[%s4 + $0x330] sm:$0xff]
      %v957 = vld [vmem:[%s4 + $0x338] sm:$0xff]
      %v958 = vld [vmem:[%s4 + $0x340] sm:$0xff]
      %v959 = vld [vmem:[%s4 + $0x348] sm:$0xff]
      %v960 = vld [vmem:[%s4 + $0x350] sm:$0xff]
      %v961 = vld [vmem:[%s4 + $0x358] sm:$0xff]
      %v962 = vld [vmem:[%s4 + $0x360] sm:$0xff]
      %v963 = vld [vmem:[%s4 + $0x368] sm:$0xff]
      %v964 = vld [vmem:[%s4 + $0x370] sm:$0xff]
      %v965 = vld [vmem:[%s4 + $0x378] sm:$0xff]
      %v966 = vld [vmem:[%s4 + $0x380] sm:$0xff]
      %v967 = vld [vmem:[%s4 + $0x388] sm:$0xff]
      %v968 = vld [vmem:[%s4 + $0x390] sm:$0xff]
      %v969 = vld [vmem:[%s4 + $0x398] sm:$0xff]
      %v970 = vld [vmem:[%s4 + $0x3a0] sm:$0xff]
      %v971 = vld [vmem:[%s4 + $0x3a8] sm:$0xff]
      %v972 = vld [vmem:[%s4 + $0x3b0] sm:$0xff]
      %v973 = vld [vmem:[%s4 + $0x3b8] sm:$0xff]
      %v974 = vld [vmem:[%s4 + $0x3c0] sm:$0xff]
      %v975 = vld [vmem:[%s4 + $0x3c8] sm:$0xff]
      %v976 = vld [vmem:[%s4 + $0x3d0] sm:$0xff]
      %v977 = vld [vmem:[%s4 + $0x3d8] sm:$0xff]
      %v978 = vld [vmem:[%s4 + $0x3e0] sm:$0xff]
      %v979 = vld [vmem:[%s4 + $0x3e8] sm:$0xff]
      %v980 = vld [vmem:[%s4 + $0x3f0] sm:$0xff]
      %v981 = vld [vmem:[%s4 + $0x3f8] sm:$0xff]
      %v982 = vld [vmem:[%s4 + $0x400] sm:$0xff]
      %v983 = vld [vmem:[%s4 + $0x408] sm:$0xff]
      %v984 = vld [vmem:[%s4 + $0x410] sm:$0xff]
      %v985 = vld [vmem:[%s4 + $0x418] sm:$0xff]
      %v986 = vld [vmem:[%s4 + $0x420] sm:$0xff]
      %v987 = vld [vmem:[%s4 + $0x428] sm:$0xff]
      %v988 = vld [vmem:[%s4 + $0x430] sm:$0xff]
      %v989 = vld [vmem:[%s4 + $0x438] sm:$0xff]
      %v990 = vld [vmem:[%s4 + $0x440] sm:$0xff]
      %v991 = vld [vmem:[%s4 + $0x448] sm:$0xff]
      %v992 = vld [vmem:[%s4 + $0x450] sm:$0xff]
      %v993 = vld [vmem:[%s4 + $0x458] sm:$0xff]
      %v994 = vld [vmem:[%s4 + $0x460] sm:$0xff]
      %v995 = vld [vmem:[%s4 + $0x468] sm:$0xff]
      %v996 = vld [vmem:[%s4 + $0x470] sm:$0xff]
      %v997 = vld [vmem:[%s4 + $0x478] sm:$0xff]
      %v998 = vld [vmem:[%s4 + $0x480] sm:$0xff]
      %v999 = vld [vmem:[%s4 + $0x488] sm:$0xff]
      %v1000 = vld [vmem:[%s4 + $0x490] sm:$0xff]
      %v1001 = vld [vmem:[%s4 + $0x498] sm:$0xff]
      %v1002 = vld [vmem:[%s4 + $0x4a0] sm:$0xff]
      %v1003 = vld [vmem:[%s4 + $0x4a8] sm:$0xff]
      %v1004 = vld [vmem:[%s4 + $0x4b0] sm:$0xff]
      %v1005 = vld [vmem:[%s4 + $0x4b8] sm:$0xff]
      %v1006 = vld [vmem:[%s4 + $0x4c0] sm:$0xff]
      %v1007 = vld [vmem:[%s4 + $0x4c8] sm:$0xff]
      %v1008 = vld [vmem:[%s4 + $0x4d0] sm:$0xff]
      %v1009 = vld [vmem:[%s4 + $0x4d8] sm:$0xff]
      %v1010 = vld [vmem:[%s4 + $0x4e0] sm:$0xff]
      %v1011 = vld [vmem:[%s4 + $0x4e8] sm:$0xff]
      %v1012 = vld [vmem:[%s4 + $0x4f0] sm:$0xff]
      %v1013 = vld [vmem:[%s4 + $0x4f8] sm:$0xff]
      %v1014 = vld [vmem:[%s4 + $0x500] sm:$0xff]
      %v1015 = vld [vmem:[%s4 + $0x508] sm:$0xff]
      %v1016 = vld [vmem:[%s4 + $0x510] sm:$0xff]
      %v1017 = vld [vmem:[%s4 + $0x518] sm:$0xff]
      %v1018 = vld [vmem:[%s4 + $0x520] sm:$0xff]
      %v1019 = vld [vmem:[%s4 + $0x528] sm:$0xff]
      %v1020 = vld [vmem:[%s4 + $0x530] sm:$0xff]
      %v1021 = vld [vmem:[%s4 + $0x538] sm:$0xff]
      %v1022 = vld [vmem:[%s4 + $0x540] sm:$0xff]
      %v1023 = vld [vmem:[%s4 + $0x548] sm:$0xff]
      %v1024 = vld [vmem:[%s4 + $0x550] sm:$0xff]
      %v1025 = vld [vmem:[%s4 + $0x558] sm:$0xff]
      %v1026 = vld [vmem:[%s4 + $0x560] sm:$0xff]
      %v1027 = vld [vmem:[%s4 + $0x568] sm:$0xff]
      %v1028 = vld [vmem:[%s4 + $0x570] sm:$0xff]
      %v1029 = vld [vmem:[%s4 + $0x578] sm:$0xff]
      %v1030 = vld [vmem:[%s4 + $0x580] sm:$0xff]
      %v1031 = vld [vmem:[%s4 + $0x588] sm:$0xff]
      %v1032 = vld [vmem:[%s4 + $0x590] sm:$0xff]
      %v1033 = vld [vmem:[%s4 + $0x598] sm:$0xff]
      %v1034 = vld [vmem:[%s4 + $0x5a0] sm:$0xff]
      %v1035 = vld [vmem:[%s4 + $0x5a8] sm:$0xff]
      %v1036 = vld [vmem:[%s4 + $0x5b0] sm:$0xff]
      %v1037 = vld [vmem:[%s4 + $0x5b8] sm:$0xff]
      %v1038 = vld [vmem:[%s4 + $0x5c0] sm:$0xff]
      %v1039 = vld [vmem:[%s4 + $0x5c8] sm:$0xff]
      %v1040 = vld [vmem:[%s4 + $0x5d0] sm:$0xff]
      %v1041 = vld [vmem:[%s4 + $0x5d8] sm:$0xff]
      %v1042 = vld [vmem:[%s4 + $0x5e0] sm:$0xff]
      %v1043 = vld [vmem:[%s4 + $0x5e8] sm:$0xff]
      %v1044 = vld [vmem:[%s4 + $0x5f0] sm:$0xff]
      %v1045 = vld [vmem:[%s4 + $0x5f8] sm:$0xff]
      %v1046 = vld [vmem:[%s4 + $0x600] sm:$0xff]
      %v1047 = vld [vmem:[%s4 + $0x608] sm:$0xff]
      %v1048 = vld [vmem:[%s4 + $0x610] sm:$0xff]
      %v1049 = vld [vmem:[%s4 + $0x618] sm:$0xff]
      %v1050 = vld [vmem:[%s4 + $0x620] sm:$0xff]
      %v1051 = vld [vmem:[%s4 + $0x628] sm:$0xff]
      %v1052 = vld [vmem:[%s4 + $0x630] sm:$0xff]
      %v1053 = vld [vmem:[%s4 + $0x638] sm:$0xff]
      %v1054 = vld [vmem:[%s4 + $0x640] sm:$0xff]
      %v1055 = vld [vmem:[%s4 + $0x648] sm:$0xff]
      %v1056 = vld [vmem:[%s4 + $0x650] sm:$0xff]
      %v1057 = vld [vmem:[%s4 + $0x658] sm:$0xff]
      %v1058 = vld [vmem:[%s4 + $0x660] sm:$0xff]
      %v1059 = vld [vmem:[%s4 + $0x668] sm:$0xff]
      %v1060 = vld [vmem:[%s4 + $0x670] sm:$0xff]
      %v1061 = vld [vmem:[%s4 + $0x678] sm:$0xff]
      %v1062 = vld [vmem:[%s4 + $0x680] sm:$0xff]
      %v1063 = vld [vmem:[%s4 + $0x688] sm:$0xff]
      %v1064 = vld [vmem:[%s4 + $0x690] sm:$0xff]
      %v1065 = vld [vmem:[%s4 + $0x698] sm:$0xff]
      %v1066 = vld [vmem:[%s4 + $0x6a0] sm:$0xff]
      %v1067 = vld [vmem:[%s4 + $0x6a8] sm:$0xff]
      %v1068 = vld [vmem:[%s4 + $0x6b0] sm:$0xff]
      %v1069 = vld [vmem:[%s4 + $0x6b8] sm:$0xff]
      %v1070 = vld [vmem:[%s4 + $0x6c0] sm:$0xff]
      %v1071 = vld [vmem:[%s4 + $0x6c8] sm:$0xff]
      %v1072 = vld [vmem:[%s4 + $0x6d0] sm:$0xff]
      %v1073 = vld [vmem:[%s4 + $0x6d8] sm:$0xff]
      %v1074 = vld [vmem:[%s4 + $0x6e0] sm:$0xff]
      %v1075 = vld [vmem:[%s4 + $0x6e8] sm:$0xff]
      %v1076 = vld [vmem:[%s4 + $0x6f0] sm:$0xff]
      %v1077 = vld [vmem:[%s4 + $0x6f8] sm:$0xff]
      %v1078 = vld [vmem:[%s4 + $0x700] sm:$0xff]
      %v1079 = vld [vmem:[%s4 + $0x708] sm:$0xff]
      %v1080 = vld [vmem:[%s4 + $0x710] sm:$0xff]
      %v1081 = vld [vmem:[%s4 + $0x718] sm:$0xff]
      %v1082 = vld [vmem:[%s4 + $0x720] sm:$0xff]
      %v1083 = vld [vmem:[%s4 + $0x728] sm:$0xff]
      %v1084 = vld [vmem:[%s4 + $0x730] sm:$0xff]
      %v1085 = vld [vmem:[%s4 + $0x738] sm:$0xff]
      %v1086 = vld [vmem:[%s4 + $0x740] sm:$0xff]
      %v1087 = vld [vmem:[%s4 + $0x748] sm:$0xff]
      %v1088 = vld [vmem:[%s4 + $0x750] sm:$0xff]
      %v1089 = vld [vmem:[%s4 + $0x758] sm:$0xff]
      %v1090 = vld [vmem:[%s4 + $0x760] sm:$0xff]
      %v1091 = vld [vmem:[%s4 + $0x768] sm:$0xff]
      %v1092 = vld [vmem:[%s4 + $0x770] sm:$0xff]
      %v1093 = vld [vmem:[%s4 + $0x778] sm:$0xff]
      %v1094 = vld [vmem:[%s4 + $0x780] sm:$0xff]
      %v1095 = vld [vmem:[%s4 + $0x788] sm:$0xff]
      %v1096 = vld [vmem:[%s4 + $0x790] sm:$0xff]
      %v1097 = vld [vmem:[%s4 + $0x798] sm:$0xff]
      %v1098 = vld [vmem:[%s4 + $0x7a0] sm:$0xff]
      %v1099 = vld [vmem:[%s4 + $0x7a8] sm:$0xff]
      %v1100 = vld [vmem:[%s4 + $0x7b0] sm:$0xff]
      %v1101 = vld [vmem:[%s4 + $0x7b8] sm:$0xff]
      %v1102 = vld [vmem:[%s4 + $0x7c0] sm:$0xff]
      %v1103 = vld [vmem:[%s4 + $0x7c8] sm:$0xff]
      %v1104 = vld [vmem:[%s4 + $0x7d0] sm:$0xff]
      %v1105 = vld [vmem:[%s4 + $0x7d8] sm:$0xff]
      %v1106 = vld [vmem:[%s4 + $0x7e0] sm:$0xff]
      %v1107 = vld [vmem:[%s4 + $0x7e8] sm:$0xff]
      %v1108 = vld [vmem:[%s4 + $0x7f0] sm:$0xff]
      %v1109 = vld [vmem:[%s4 + $0x7f8] sm:$0xff]
      %v1110 = vld [vmem:[%s5] sm:$0xf]
      %v1112 = vperm.slane %v1110, 0
      %v1113 = vperm.slane %v1110, 1
      %v1114 = vperm.slane %v1110, 2
      %v1115 = vperm.slane %v1110, 3
      %1120 = vmatpush.msra.mxu0 %v914
      %1121 = vmatpush.msra.mxu0 %v910
      %1122 = vmatpush.msra.mxu0 %v906
      %1123 = vmatpush.msra.mxu0 %v902
      %1124 = vmatpush.msra.mxu0 %v898
      %1125 = vmatpush.msra.mxu0 %v894
      %1126 = vmatpush.msra.mxu0 %v890
      %1127 = vmatpush.msra.mxu0 %v886
      %1128 = vmatpush.msra.mxu0 %v882
      %1129 = vmatpush.msra.mxu0 %v878
      %1130 = vmatpush.msra.mxu0 %v874
      %1131 = vmatpush.msra.mxu0 %v870
      %1132 = vmatpush.msra.mxu0 %v866
      %1133 = vmatpush.msra.mxu0 %v862
      %1134 = vmatpush.msra.mxu0 %v858
      %1135 = vmatpush.msra.mxu0 %v854
      %1136 = vmatmul.f32.gmra.mxu0 %v850
      %v1137 = vpop.f32.mrf.mxu0
      %v1138 = vadd.f32 %v1112, %v1137
      %1139 = vdwg.mxu0
      %1140 = vmatpush.msra.mxu0 %v978
      %1141 = vmatpush.msra.mxu0 %v974
      %1142 = vmatpush.msra.mxu0 %v970
      %1143 = vmatpush.msra.mxu0 %v966
      %1144 = vmatpush.msra.mxu0 %v962
      %1145 = vmatpush.msra.mxu0 %v958
      %1146 = vmatpush.msra.mxu0 %v954
      %1147 = vmatpush.msra.mxu0 %v950
      %1148 = vmatpush.msra.mxu0 %v946
      %1149 = vmatpush.msra.mxu0 %v942
      %1150 = vmatpush.msra.mxu0 %v938
      %1151 = vmatpush.msra.mxu0 %v934
      %1152 = vmatpush.msra.mxu0 %v930
      %1153 = vmatpush.msra.mxu0 %v926
      %1154 = vmatpush.msra.mxu0 %v922
      %1155 = vmatpush.msra.mxu0 %v918
      %1156 = vmatmul.f32.gmra.mxu0 %v851
      %v1157 = vpop.f32.mrf.mxu0
      %v1158 = vadd.f32 %v1138, %v1157
      %1159 = vdwg.mxu0
      %1160 = vmatpush.msra.mxu0 %v1042
      %1161 = vmatpush.msra.mxu0 %v1038
      %1162 = vmatpush.msra.mxu0 %v1034
      %1163 = vmatpush.msra.mxu0 %v1030
      %1164 = vmatpush.msra.mxu0 %v1026
      %1165 = vmatpush.msra.mxu0 %v1022
      %1166 = vmatpush.msra.mxu0 %v1018
      %1167 = vmatpush.msra.mxu0 %v1014
      %1168 = vmatpush.msra.mxu0 %v1010
      %1169 = vmatpush.msra.mxu0 %v1006
      %1170 = vmatpush.msra.mxu0 %v1002
      %1171 = vmatpush.msra.mxu0 %v998
      %1172 = vmatpush.msra.mxu0 %v994
      %1173 = vmatpush.msra.mxu0 %v990
      %1174 = vmatpush.msra.mxu0 %v986
      %1175 = vmatpush.msra.mxu0 %v982
      %1176 = vmatmul.f32.gmra.mxu0 %v852
      %v1177 = vpop.f32.mrf.mxu0
      %v1178 = vadd.f32 %v1158, %v1177
      %1179 = vdwg.mxu0
      %1180 = vmatpush.msra.mxu0 %v1106
      %1181 = vmatpush.msra.mxu0 %v1102
      %1182 = vmatpush.msra.mxu0 %v1098
      %1183 = vmatpush.msra.mxu0 %v1094
      %1184 = vmatpush.msra.mxu0 %v1090
      %1185 = vmatpush.msra.mxu0 %v1086
      %1186 = vmatpush.msra.mxu0 %v1082
      %1187 = vmatpush.msra.mxu0 %v1078
      %1188 = vmatpush.msra.mxu0 %v1074
      %1189 = vmatpush.msra.mxu0 %v1070
      %1190 = vmatpush.msra.mxu0 %v1066
      %1191 = vmatpush.msra.mxu0 %v1062
      %1192 = vmatpush.msra.mxu0 %v1058
      %1193 = vmatpush.msra.mxu0 %v1054
      %1194 = vmatpush.msra.mxu0 %v1050
      %1195 = vmatpush.msra.mxu0 %v1046
      %1196 = vmatmul.f32.gmra.mxu0 %v853
      %v1197 = vpop.f32.mrf.mxu0
      %v1198 = vadd.f32 %v1178, %v1197
      %1199 = vdwg.mxu0
      %1200 = vmatpush.msra.mxu0 %v915
      %1201 = vmatpush.msra.mxu0 %v911
      %1202 = vmatpush.msra.mxu0 %v907
      %1203 = vmatpush.msra.mxu0 %v903
      %1204 = vmatpush.msra.mxu0 %v899
      %1205 = vmatpush.msra.mxu0 %v895
      %1206 = vmatpush.msra.mxu0 %v891
      %1207 = vmatpush.msra.mxu0 %v887
      %1208 = vmatpush.msra.mxu0 %v883
      %1209 = vmatpush.msra.mxu0 %v879
      %1210 = vmatpush.msra.mxu0 %v875
      %1211 = vmatpush.msra.mxu0 %v871
      %1212 = vmatpush.msra.mxu0 %v867
      %1213 = vmatpush.msra.mxu0 %v863
      %1214 = vmatpush.msra.mxu0 %v859
      %1215 = vmatpush.msra.mxu0 %v855
      %1216 = vmatmul.f32.gmra.mxu0 %v850
      %v1217 = vpop.f32.mrf.mxu0
      %v1218 = vadd.f32 %v1113, %v1217
      %1219 = vdwg.mxu0
      %1220 = vmatpush.msra.mxu0 %v979
      %1221 = vmatpush.msra.mxu0 %v975
      %1222 = vmatpush.msra.mxu0 %v971
      %1223 = vmatpush.msra.mxu0 %v967
      %1224 = vmatpush.msra.mxu0 %v963
      %1225 = vmatpush.msra.mxu0 %v959
      %1226 = vmatpush.msra.mxu0 %v955
      %1227 = vmatpush.msra.mxu0 %v951
      %1228 = vmatpush.msra.mxu0 %v947
      %1229 = vmatpush.msra.mxu0 %v943
      %1230 = vmatpush.msra.mxu0 %v939
      %1231 = vmatpush.msra.mxu0 %v935
      %1232 = vmatpush.msra.mxu0 %v931
      %1233 = vmatpush.msra.mxu0 %v927
      %1234 = vmatpush.msra.mxu0 %v923
      %1235 = vmatpush.msra.mxu0 %v919
      %1236 = vmatmul.f32.gmra.mxu0 %v851
      %v1237 = vpop.f32.mrf.mxu0
      %v1238 = vadd.f32 %v1218, %v1237
      %1239 = vdwg.mxu0
      %1240 = vmatpush.msra.mxu0 %v1043
      %1241 = vmatpush.msra.mxu0 %v1039
      %1242 = vmatpush.msra.mxu0 %v1035
      %1243 = vmatpush.msra.mxu0 %v1031
      %1244 = vmatpush.msra.mxu0 %v1027
      %1245 = vmatpush.msra.mxu0 %v1023
      %1246 = vmatpush.msra.mxu0 %v1019
      %1247 = vmatpush.msra.mxu0 %v1015
      %1248 = vmatpush.msra.mxu0 %v1011
      %1249 = vmatpush.msra.mxu0 %v1007
      %1250 = vmatpush.msra.mxu0 %v1003
      %1251 = vmatpush.msra.mxu0 %v999
      %1252 = vmatpush.msra.mxu0 %v995
      %1253 = vmatpush.msra.mxu0 %v991
      %1254 = vmatpush.msra.mxu0 %v987
      %1255 = vmatpush.msra.mxu0 %v983
      %1256 = vmatmul.f32.gmra.mxu0 %v852
      %v1257 = vpop.f32.mrf.mxu0
      %v1258 = vadd.f32 %v1238, %v1257
      %1259 = vdwg.mxu0
      %1260 = vmatpush.msra.mxu0 %v1107
      %1261 = vmatpush.msra.mxu0 %v1103
      %1262 = vmatpush.msra.mxu0 %v1099
      %1263 = vmatpush.msra.mxu0 %v1095
      %1264 = vmatpush.msra.mxu0 %v1091
      %1265 = vmatpush.msra.mxu0 %v1087
      %1266 = vmatpush.msra.mxu0 %v1083
      %1267 = vmatpush.msra.mxu0 %v1079
      %1268 = vmatpush.msra.mxu0 %v1075
      %1269 = vmatpush.msra.mxu0 %v1071
      %1270 = vmatpush.msra.mxu0 %v1067
      %1271 = vmatpush.msra.mxu0 %v1063
      %1272 = vmatpush.msra.mxu0 %v1059
      %1273 = vmatpush.msra.mxu0 %v1055
      %1274 = vmatpush.msra.mxu0 %v1051
      %1275 = vmatpush.msra.mxu0 %v1047
      %1276 = vmatmul.f32.gmra.mxu0 %v853
      %v1277 = vpop.f32.mrf.mxu0
      %v1278 = vadd.f32 %v1258, %v1277
      %1279 = vdwg.mxu0
      %1280 = vmatpush.msra.mxu0 %v916
      %1281 = vmatpush.msra.mxu0 %v912
      %1282 = vmatpush.msra.mxu0 %v908
      %1283 = vmatpush.msra.mxu0 %v904
      %1284 = vmatpush.msra.mxu0 %v900
      %1285 = vmatpush.msra.mxu0 %v896
      %1286 = vmatpush.msra.mxu0 %v892
      %1287 = vmatpush.msra.mxu0 %v888
      %1288 = vmatpush.msra.mxu0 %v884
      %1289 = vmatpush.msra.mxu0 %v880
      %1290 = vmatpush.msra.mxu0 %v876
      %1291 = vmatpush.msra.mxu0 %v872
      %1292 = vmatpush.msra.mxu0 %v868
      %1293 = vmatpush.msra.mxu0 %v864
      %1294 = vmatpush.msra.mxu0 %v860
      %1295 = vmatpush.msra.mxu0 %v856
      %1296 = vmatmul.f32.gmra.mxu0 %v850
      %v1297 = vpop.f32.mrf.mxu0
      %v1298 = vadd.f32 %v1114, %v1297
      %1299 = vdwg.mxu0
      %1300 = vmatpush.msra.mxu0 %v980
      %1301 = vmatpush.msra.mxu0 %v976
      %1302 = vmatpush.msra.mxu0 %v972
      %1303 = vmatpush.msra.mxu0 %v968
      %1304 = vmatpush.msra.mxu0 %v964
      %1305 = vmatpush.msra.mxu0 %v960
      %1306 = vmatpush.msra.mxu0 %v956
      %1307 = vmatpush.msra.mxu0 %v952
      %1308 = vmatpush.msra.mxu0 %v948
      %1309 = vmatpush.msra.mxu0 %v944
      %1310 = vmatpush.msra.mxu0 %v940
      %1311 = vmatpush.msra.mxu0 %v936
      %1312 = vmatpush.msra.mxu0 %v932
      %1313 = vmatpush.msra.mxu0 %v928
      %1314 = vmatpush.msra.mxu0 %v924
      %1315 = vmatpush.msra.mxu0 %v920
      %1316 = vmatmul.f32.gmra.mxu0 %v851
      %v1317 = vpop.f32.mrf.mxu0
      %v1318 = vadd.f32 %v1298, %v1317
      %1319 = vdwg.mxu0
      %1320 = vmatpush.msra.mxu0 %v1044
      %1321 = vmatpush.msra.mxu0 %v1040
      %1322 = vmatpush.msra.mxu0 %v1036
      %1323 = vmatpush.msra.mxu0 %v1032
      %1324 = vmatpush.msra.mxu0 %v1028
      %1325 = vmatpush.msra.mxu0 %v1024
      %1326 = vmatpush.msra.mxu0 %v1020
      %1327 = vmatpush.msra.mxu0 %v1016
      %1328 = vmatpush.msra.mxu0 %v1012
      %1329 = vmatpush.msra.mxu0 %v1008
      %1330 = vmatpush.msra.mxu0 %v1004
      %1331 = vmatpush.msra.mxu0 %v1000
      %1332 = vmatpush.msra.mxu0 %v996
      %1333 = vmatpush.msra.mxu0 %v992
      %1334 = vmatpush.msra.mxu0 %v988
      %1335 = vmatpush.msra.mxu0 %v984
      %1336 = vmatmul.f32.gmra.mxu0 %v852
      %v1337 = vpop.f32.mrf.mxu0
      %v1338 = vadd.f32 %v1318, %v1337
      %1339 = vdwg.mxu0
      %1340 = vmatpush.msra.mxu0 %v1108
      %1341 = vmatpush.msra.mxu0 %v1104
      %1342 = vmatpush.msra.mxu0 %v1100
      %1343 = vmatpush.msra.mxu0 %v1096
      %1344 = vmatpush.msra.mxu0 %v1092
      %1345 = vmatpush.msra.mxu0 %v1088
      %1346 = vmatpush.msra.mxu0 %v1084
      %1347 = vmatpush.msra.mxu0 %v1080
      %1348 = vmatpush.msra.mxu0 %v1076
      %1349 = vmatpush.msra.mxu0 %v1072
      %1350 = vmatpush.msra.mxu0 %v1068
      %1351 = vmatpush.msra.mxu0 %v1064
      %1352 = vmatpush.msra.mxu0 %v1060
      %1353 = vmatpush.msra.mxu0 %v1056
      %1354 = vmatpush.msra.mxu0 %v1052
      %1355 = vmatpush.msra.mxu0 %v1048
      %1356 = vmatmul.f32.gmra.mxu0 %v853
      %v1357 = vpop.f32.mrf.mxu0
      %v1358 = vadd.f32 %v1338, %v1357
      %1359 = vdwg.mxu0
      %1360 = vmatpush.msra.mxu0 %v917
      %1361 = vmatpush.msra.mxu0 %v913
      %1362 = vmatpush.msra.mxu0 %v909
      %1363 = vmatpush.msra.mxu0 %v905
      %1364 = vmatpush.msra.mxu0 %v901
      %1365 = vmatpush.msra.mxu0 %v897
      %1366 = vmatpush.msra.mxu0 %v893
      %1367 = vmatpush.msra.mxu0 %v889
      %1368 = vmatpush.msra.mxu0 %v885
      %1369 = vmatpush.msra.mxu0 %v881
      %1370 = vmatpush.msra.mxu0 %v877
      %1371 = vmatpush.msra.mxu0 %v873
      %1372 = vmatpush.msra.mxu0 %v869
      %1373 = vmatpush.msra.mxu0 %v865
      %1374 = vmatpush.msra.mxu0 %v861
      %1375 = vmatpush.msra.mxu0 %v857
      %1376 = vmatmul.f32.gmra.mxu0 %v850
      %v1377 = vpop.f32.mrf.mxu0
      %v1378 = vadd.f32 %v1115, %v1377
      %1379 = vdwg.mxu0
      %1380 = vmatpush.msra.mxu0 %v981
      %1381 = vmatpush.msra.mxu0 %v977
      %1382 = vmatpush.msra.mxu0 %v973
      %1383 = vmatpush.msra.mxu0 %v969
      %1384 = vmatpush.msra.mxu0 %v965
      %1385 = vmatpush.msra.mxu0 %v961
      %1386 = vmatpush.msra.mxu0 %v957
      %1387 = vmatpush.msra.mxu0 %v953
      %1388 = vmatpush.msra.mxu0 %v949
      %1389 = vmatpush.msra.mxu0 %v945
      %1390 = vmatpush.msra.mxu0 %v941
      %1391 = vmatpush.msra.mxu0 %v937
      %1392 = vmatpush.msra.mxu0 %v933
      %1393 = vmatpush.msra.mxu0 %v929
      %1394 = vmatpush.msra.mxu0 %v925
      %1395 = vmatpush.msra.mxu0 %v921
      %1396 = vmatmul.f32.gmra.mxu0 %v851
      %v1397 = vpop.f32.mrf.mxu0
      %v1398 = vadd.f32 %v1378, %v1397
      %1399 = vdwg.mxu0
      %1400 = vmatpush.msra.mxu0 %v1045
      %1401 = vmatpush.msra.mxu0 %v1041
      %1402 = vmatpush.msra.mxu0 %v1037
      %1403 = vmatpush.msra.mxu0 %v1033
      %1404 = vmatpush.msra.mxu0 %v1029
      %1405 = vmatpush.msra.mxu0 %v1025
      %1406 = vmatpush.msra.mxu0 %v1021
      %1407 = vmatpush.msra.mxu0 %v1017
      %1408 = vmatpush.msra.mxu0 %v1013
      %1409 = vmatpush.msra.mxu0 %v1009
      %1410 = vmatpush.msra.mxu0 %v1005
      %1411 = vmatpush.msra.mxu0 %v1001
      %1412 = vmatpush.msra.mxu0 %v997
      %1413 = vmatpush.msra.mxu0 %v993
      %1414 = vmatpush.msra.mxu0 %v989
      %1415 = vmatpush.msra.mxu0 %v985
      %1416 = vmatmul.f32.gmra.mxu0 %v852
      %v1417 = vpop.f32.mrf.mxu0
      %v1418 = vadd.f32 %v1398, %v1417
      %1419 = vdwg.mxu0
      %1420 = vmatpush.msra.mxu0 %v1109
      %1421 = vmatpush.msra.mxu0 %v1105
      %1422 = vmatpush.msra.mxu0 %v1101
      %1423 = vmatpush.msra.mxu0 %v1097
      %1424 = vmatpush.msra.mxu0 %v1093
      %1425 = vmatpush.msra.mxu0 %v1089
      %1426 = vmatpush.msra.mxu0 %v1085
      %1427 = vmatpush.msra.mxu0 %v1081
      %1428 = vmatpush.msra.mxu0 %v1077
      %1429 = vmatpush.msra.mxu0 %v1073
      %1430 = vmatpush.msra.mxu0 %v1069
      %1431 = vmatpush.msra.mxu0 %v1065
      %1432 = vmatpush.msra.mxu0 %v1061
      %1433 = vmatpush.msra.mxu0 %v1057
      %1434 = vmatpush.msra.mxu0 %v1053
      %1435 = vmatpush.msra.mxu0 %v1049
      %1436 = vmatmul.f32.gmra.mxu0 %v853
      %v1437 = vpop.f32.mrf.mxu0
      %v1438 = vadd.f32 %v1418, %v1437
      %1439 = vdwg.mxu0
      %v1440 = vmax.f32 %v1198, 0.0
      %v1441 = vmax.f32 %v1278, 0.0
      %v1442 = vmax.f32 %v1358, 0.0
      %v1443 = vmax.f32 %v1438, 0.0
      %v1444 = vld [vmem:[%s7] sm:$0x3]
      %v1446 = vperm.slane %v1444, 0
      %v1447 = vperm.slane %v1444, 1
      %s1450 = scalar_lea.vmem %s6, 1024
      %v1451 = vld [vmem:[%s1450] sm:$0xff]
      %v1452 = vld [vmem:[%s1450 + $0x8] sm:$0xff]
      %v1453 = vld [vmem:[%s1450 + $0x10] sm:$0xff]
      %v1454 = vld [vmem:[%s1450 + $0x18] sm:$0xff]
      %v1455 = vld [vmem:[%s1450 + $0x20] sm:$0xff]
      %v1456 = vld [vmem:[%s1450 + $0x28] sm:$0xff]
      %v1457 = vld [vmem:[%s1450 + $0x30] sm:$0xff]
      %v1458 = vld [vmem:[%s1450 + $0x38] sm:$0xff]
      %v1459 = vld [vmem:[%s1450 + $0x40] sm:$0xff]
      %v1460 = vld [vmem:[%s1450 + $0x48] sm:$0xff]
      %v1461 = vld [vmem:[%s1450 + $0x50] sm:$0xff]
      %v1462 = vld [vmem:[%s1450 + $0x58] sm:$0xff]
      %v1463 = vld [vmem:[%s1450 + $0x60] sm:$0xff]
      %v1464 = vld [vmem:[%s1450 + $0x68] sm:$0xff]
      %v1465 = vld [vmem:[%s1450 + $0x70] sm:$0xff]
      %v1466 = vld [vmem:[%s1450 + $0x78] sm:$0xff]
      %v1467 = vld [vmem:[%s1450 + $0x80] sm:$0xff]
      %v1468 = vld [vmem:[%s1450 + $0x88] sm:$0xff]
      %v1469 = vld [vmem:[%s1450 + $0x90] sm:$0xff]
      %v1470 = vld [vmem:[%s1450 + $0x98] sm:$0xff]
      %v1471 = vld [vmem:[%s1450 + $0xa0] sm:$0xff]
      %v1472 = vld [vmem:[%s1450 + $0xa8] sm:$0xff]
      %v1473 = vld [vmem:[%s1450 + $0xb0] sm:$0xff]
      %v1474 = vld [vmem:[%s1450 + $0xb8] sm:$0xff]
      %v1475 = vld [vmem:[%s1450 + $0xc0] sm:$0xff]
      %v1476 = vld [vmem:[%s1450 + $0xc8] sm:$0xff]
      %v1477 = vld [vmem:[%s1450 + $0xd0] sm:$0xff]
      %v1478 = vld [vmem:[%s1450 + $0xd8] sm:$0xff]
      %v1479 = vld [vmem:[%s1450 + $0xe0] sm:$0xff]
      %v1480 = vld [vmem:[%s1450 + $0xe8] sm:$0xff]
      %v1481 = vld [vmem:[%s1450 + $0xf0] sm:$0xff]
      %v1482 = vld [vmem:[%s1450 + $0xf8] sm:$0xff]
      %v1483 = vld [vmem:[%s1450 + $0x100] sm:$0xff]
      %v1484 = vld [vmem:[%s1450 + $0x108] sm:$0xff]
      %v1485 = vld [vmem:[%s1450 + $0x110] sm:$0xff]
      %v1486 = vld [vmem:[%s1450 + $0x118] sm:$0xff]
      %v1487 = vld [vmem:[%s1450 + $0x120] sm:$0xff]
      %v1488 = vld [vmem:[%s1450 + $0x128] sm:$0xff]
      %v1489 = vld [vmem:[%s1450 + $0x130] sm:$0xff]
      %v1490 = vld [vmem:[%s1450 + $0x138] sm:$0xff]
      %v1491 = vld [vmem:[%s1450 + $0x140] sm:$0xff]
      %v1492 = vld [vmem:[%s1450 + $0x148] sm:$0xff]
      %v1493 = vld [vmem:[%s1450 + $0x150] sm:$0xff]
      %v1494 = vld [vmem:[%s1450 + $0x158] sm:$0xff]
      %v1495 = vld [vmem:[%s1450 + $0x160] sm:$0xff]
      %v1496 = vld [vmem:[%s1450 + $0x168] sm:$0xff]
      %v1497 = vld [vmem:[%s1450 + $0x170] sm:$0xff]
      %v1498 = vld [vmem:[%s1450 + $0x178] sm:$0xff]
      %v1499 = vld [vmem:[%s1450 + $0x180] sm:$0xff]
      %v1500 = vld [vmem:[%s1450 + $0x188] sm:$0xff]
      %v1501 = vld [vmem:[%s1450 + $0x190] sm:$0xff]
      %v1502 = vld [vmem:[%s1450 + $0x198] sm:$0xff]
      %v1503 = vld [vmem:[%s1450 + $0x1a0] sm:$0xff]
      %v1504 = vld [vmem:[%s1450 + $0x1a8] sm:$0xff]
      %v1505 = vld [vmem:[%s1450 + $0x1b0] sm:$0xff]
      %v1506 = vld [vmem:[%s1450 + $0x1b8] sm:$0xff]
      %v1507 = vld [vmem:[%s1450 + $0x1c0] sm:$0xff]
      %v1508 = vld [vmem:[%s1450 + $0x1c8] sm:$0xff]
      %v1509 = vld [vmem:[%s1450 + $0x1d0] sm:$0xff]
      %v1510 = vld [vmem:[%s1450 + $0x1d8] sm:$0xff]
      %v1511 = vld [vmem:[%s1450 + $0x1e0] sm:$0xff]
      %v1512 = vld [vmem:[%s1450 + $0x1e8] sm:$0xff]
      %v1513 = vld [vmem:[%s1450 + $0x1f0] sm:$0xff]
      %v1514 = vld [vmem:[%s1450 + $0x1f8] sm:$0xff]
      %v1515 = vld [vmem:[%s1450 + $0x200] sm:$0xff]
      %v1516 = vld [vmem:[%s1450 + $0x208] sm:$0xff]
      %v1517 = vld [vmem:[%s1450 + $0x210] sm:$0xff]
      %v1518 = vld [vmem:[%s1450 + $0x218] sm:$0xff]
      %v1519 = vld [vmem:[%s1450 + $0x220] sm:$0xff]
      %v1520 = vld [vmem:[%s1450 + $0x228] sm:$0xff]
      %v1521 = vld [vmem:[%s1450 + $0x230] sm:$0xff]
      %v1522 = vld [vmem:[%s1450 + $0x238] sm:$0xff]
      %v1523 = vld [vmem:[%s1450 + $0x240] sm:$0xff]
      %v1524 = vld [vmem:[%s1450 + $0x248] sm:$0xff]
      %v1525 = vld [vmem:[%s1450 + $0x250] sm:$0xff]
      %v1526 = vld [vmem:[%s1450 + $0x258] sm:$0xff]
      %v1527 = vld [vmem:[%s1450 + $0x260] sm:$0xff]
      %v1528 = vld [vmem:[%s1450 + $0x268] sm:$0xff]
      %v1529 = vld [vmem:[%s1450 + $0x270] sm:$0xff]
      %v1530 = vld [vmem:[%s1450 + $0x278] sm:$0xff]
      %v1531 = vld [vmem:[%s1450 + $0x280] sm:$0xff]
      %v1532 = vld [vmem:[%s1450 + $0x288] sm:$0xff]
      %v1533 = vld [vmem:[%s1450 + $0x290] sm:$0xff]
      %v1534 = vld [vmem:[%s1450 + $0x298] sm:$0xff]
      %v1535 = vld [vmem:[%s1450 + $0x2a0] sm:$0xff]
      %v1536 = vld [vmem:[%s1450 + $0x2a8] sm:$0xff]
      %v1537 = vld [vmem:[%s1450 + $0x2b0] sm:$0xff]
      %v1538 = vld [vmem:[%s1450 + $0x2b8] sm:$0xff]
      %v1539 = vld [vmem:[%s1450 + $0x2c0] sm:$0xff]
      %v1540 = vld [vmem:[%s1450 + $0x2c8] sm:$0xff]
      %v1541 = vld [vmem:[%s1450 + $0x2d0] sm:$0xff]
      %v1542 = vld [vmem:[%s1450 + $0x2d8] sm:$0xff]
      %v1543 = vld [vmem:[%s1450 + $0x2e0] sm:$0xff]
      %v1544 = vld [vmem:[%s1450 + $0x2e8] sm:$0xff]
      %v1545 = vld [vmem:[%s1450 + $0x2f0] sm:$0xff]
      %v1546 = vld [vmem:[%s1450 + $0x2f8] sm:$0xff]
      %v1547 = vld [vmem:[%s1450 + $0x300] sm:$0xff]
      %v1548 = vld [vmem:[%s1450 + $0x308] sm:$0xff]
      %v1549 = vld [vmem:[%s1450 + $0x310] sm:$0xff]
      %v1550 = vld [vmem:[%s1450 + $0x318] sm:$0xff]
      %v1551 = vld [vmem:[%s1450 + $0x320] sm:$0xff]
      %v1552 = vld [vmem:[%s1450 + $0x328] sm:$0xff]
      %v1553 = vld [vmem:[%s1450 + $0x330] sm:$0xff]
      %v1554 = vld [vmem:[%s1450 + $0x338] sm:$0xff]
      %v1555 = vld [vmem:[%s1450 + $0x340] sm:$0xff]
      %v1556 = vld [vmem:[%s1450 + $0x348] sm:$0xff]
      %v1557 = vld [vmem:[%s1450 + $0x350] sm:$0xff]
      %v1558 = vld [vmem:[%s1450 + $0x358] sm:$0xff]
      %v1559 = vld [vmem:[%s1450 + $0x360] sm:$0xff]
      %v1560 = vld [vmem:[%s1450 + $0x368] sm:$0xff]
      %v1561 = vld [vmem:[%s1450 + $0x370] sm:$0xff]
      %v1562 = vld [vmem:[%s1450 + $0x378] sm:$0xff]
      %v1563 = vld [vmem:[%s1450 + $0x380] sm:$0xff]
      %v1564 = vld [vmem:[%s1450 + $0x388] sm:$0xff]
      %v1565 = vld [vmem:[%s1450 + $0x390] sm:$0xff]
      %v1566 = vld [vmem:[%s1450 + $0x398] sm:$0xff]
      %v1567 = vld [vmem:[%s1450 + $0x3a0] sm:$0xff]
      %v1568 = vld [vmem:[%s1450 + $0x3a8] sm:$0xff]
      %v1569 = vld [vmem:[%s1450 + $0x3b0] sm:$0xff]
      %v1570 = vld [vmem:[%s1450 + $0x3b8] sm:$0xff]
      %v1571 = vld [vmem:[%s1450 + $0x3c0] sm:$0xff]
      %v1572 = vld [vmem:[%s1450 + $0x3c8] sm:$0xff]
      %v1573 = vld [vmem:[%s1450 + $0x3d0] sm:$0xff]
      %v1574 = vld [vmem:[%s1450 + $0x3d8] sm:$0xff]
      %v1575 = vld [vmem:[%s1450 + $0x3e0] sm:$0xff]
      %v1576 = vld [vmem:[%s1450 + $0x3e8] sm:$0xff]
      %v1577 = vld [vmem:[%s1450 + $0x3f0] sm:$0xff]
      %v1578 = vld [vmem:[%s1450 + $0x3f8] sm:$0xff]
      %1579 = vmatpush.msra.mxu0 %v1481
      %1580 = vmatpush.msra.mxu0 %v1479
      %1581 = vmatpush.msra.mxu0 %v1477
      %1582 = vmatpush.msra.mxu0 %v1475
      %1583 = vmatpush.msra.mxu0 %v1473
      %1584 = vmatpush.msra.mxu0 %v1471
      %1585 = vmatpush.msra.mxu0 %v1469
      %1586 = vmatpush.msra.mxu0 %v1467
      %1587 = vmatpush.msra.mxu0 %v1465
      %1588 = vmatpush.msra.mxu0 %v1463
      %1589 = vmatpush.msra.mxu0 %v1461
      %1590 = vmatpush.msra.mxu0 %v1459
      %1591 = vmatpush.msra.mxu0 %v1457
      %1592 = vmatpush.msra.mxu0 %v1455
      %1593 = vmatpush.msra.mxu0 %v1453
      %1594 = vmatpush.msra.mxu0 %v1451
      %1595 = vmatmul.f32.gmra.mxu0 %v1440
      %v1596 = vpop.f32.mrf.mxu0
      %v1597 = vadd.f32 0.0, %v1596
      %1598 = vdwg.mxu0
      %1599 = vmatpush.msra.mxu0 %v1513
      %1600 = vmatpush.msra.mxu0 %v1511
      %1601 = vmatpush.msra.mxu0 %v1509
      %1602 = vmatpush.msra.mxu0 %v1507
      %1603 = vmatpush.msra.mxu0 %v1505
      %1604 = vmatpush.msra.mxu0 %v1503
      %1605 = vmatpush.msra.mxu0 %v1501
      %1606 = vmatpush.msra.mxu0 %v1499
      %1607 = vmatpush.msra.mxu0 %v1497
      %1608 = vmatpush.msra.mxu0 %v1495
      %1609 = vmatpush.msra.mxu0 %v1493
      %1610 = vmatpush.msra.mxu0 %v1491
      %1611 = vmatpush.msra.mxu0 %v1489
      %1612 = vmatpush.msra.mxu0 %v1487
      %1613 = vmatpush.msra.mxu0 %v1485
      %1614 = vmatpush.msra.mxu0 %v1483
      %1615 = vmatmul.f32.gmra.mxu0 %v1441
      %v1616 = vpop.f32.mrf.mxu0
      %v1617 = vadd.f32 %v1597, %v1616
      %1618 = vdwg.mxu0
      %1619 = vmatpush.msra.mxu0 %v1545
      %1620 = vmatpush.msra.mxu0 %v1543
      %1621 = vmatpush.msra.mxu0 %v1541
      %1622 = vmatpush.msra.mxu0 %v1539
      %1623 = vmatpush.msra.mxu0 %v1537
      %1624 = vmatpush.msra.mxu0 %v1535
      %1625 = vmatpush.msra.mxu0 %v1533
      %1626 = vmatpush.msra.mxu0 %v1531
      %1627 = vmatpush.msra.mxu0 %v1529
      %1628 = vmatpush.msra.mxu0 %v1527
      %1629 = vmatpush.msra.mxu0 %v1525
      %1630 = vmatpush.msra.mxu0 %v1523
      %1631 = vmatpush.msra.mxu0 %v1521
      %1632 = vmatpush.msra.mxu0 %v1519
      %1633 = vmatpush.msra.mxu0 %v1517
      %1634 = vmatpush.msra.mxu0 %v1515
      %1635 = vmatmul.f32.gmra.mxu0 %v1442
      %v1636 = vpop.f32.mrf.mxu0
      %v1637 = vadd.f32 %v1617, %v1636
      %1638 = vdwg.mxu0
      %1639 = vmatpush.msra.mxu0 %v1577
      %1640 = vmatpush.msra.mxu0 %v1575
      %1641 = vmatpush.msra.mxu0 %v1573
      %1642 = vmatpush.msra.mxu0 %v1571
      %1643 = vmatpush.msra.mxu0 %v1569
      %1644 = vmatpush.msra.mxu0 %v1567
      %1645 = vmatpush.msra.mxu0 %v1565
      %1646 = vmatpush.msra.mxu0 %v1563
      %1647 = vmatpush.msra.mxu0 %v1561
      %1648 = vmatpush.msra.mxu0 %v1559
      %1649 = vmatpush.msra.mxu0 %v1557
      %1650 = vmatpush.msra.mxu0 %v1555
      %1651 = vmatpush.msra.mxu0 %v1553
      %1652 = vmatpush.msra.mxu0 %v1551
      %1653 = vmatpush.msra.mxu0 %v1549
      %1654 = vmatpush.msra.mxu0 %v1547
      %1655 = vmatmul.f32.gmra.mxu0 %v1443
      %v1656 = vpop.f32.mrf.mxu0
      %v1657 = vadd.f32 %v1637, %v1656
      %1658 = vdwg.mxu0
      %1659 = vmatpush.msra.mxu0 %v1482
      %1660 = vmatpush.msra.mxu0 %v1480
      %1661 = vmatpush.msra.mxu0 %v1478
      %1662 = vmatpush.msra.mxu0 %v1476
      %1663 = vmatpush.msra.mxu0 %v1474
      %1664 = vmatpush.msra.mxu0 %v1472
      %1665 = vmatpush.msra.mxu0 %v1470
      %1666 = vmatpush.msra.mxu0 %v1468
      %1667 = vmatpush.msra.mxu0 %v1466
      %1668 = vmatpush.msra.mxu0 %v1464
      %1669 = vmatpush.msra.mxu0 %v1462
      %1670 = vmatpush.msra.mxu0 %v1460
      %1671 = vmatpush.msra.mxu0 %v1458
      %1672 = vmatpush.msra.mxu0 %v1456
      %1673 = vmatpush.msra.mxu0 %v1454
      %1674 = vmatpush.msra.mxu0 %v1452
      %1675 = vmatmul.f32.gmra.mxu0 %v1440
      %v1676 = vpop.f32.mrf.mxu0
      %v1677 = vadd.f32 0.0, %v1676
      %1678 = vdwg.mxu0
      %1679 = vmatpush.msra.mxu0 %v1514
      %1680 = vmatpush.msra.mxu0 %v1512
      %1681 = vmatpush.msra.mxu0 %v1510
      %1682 = vmatpush.msra.mxu0 %v1508
      %1683 = vmatpush.msra.mxu0 %v1506
      %1684 = vmatpush.msra.mxu0 %v1504
      %1685 = vmatpush.msra.mxu0 %v1502
      %1686 = vmatpush.msra.mxu0 %v1500
      %1687 = vmatpush.msra.mxu0 %v1498
      %1688 = vmatpush.msra.mxu0 %v1496
      %1689 = vmatpush.msra.mxu0 %v1494
      %1690 = vmatpush.msra.mxu0 %v1492
      %1691 = vmatpush.msra.mxu0 %v1490
      %1692 = vmatpush.msra.mxu0 %v1488
      %1693 = vmatpush.msra.mxu0 %v1486
      %1694 = vmatpush.msra.mxu0 %v1484
      %1695 = vmatmul.f32.gmra.mxu0 %v1441
      %v1696 = vpop.f32.mrf.mxu0
      %v1697 = vadd.f32 %v1677, %v1696
      %1698 = vdwg.mxu0
      %1699 = vmatpush.msra.mxu0 %v1546
      %1700 = vmatpush.msra.mxu0 %v1544
      %1701 = vmatpush.msra.mxu0 %v1542
      %1702 = vmatpush.msra.mxu0 %v1540
      %1703 = vmatpush.msra.mxu0 %v1538
      %1704 = vmatpush.msra.mxu0 %v1536
      %1705 = vmatpush.msra.mxu0 %v1534
      %1706 = vmatpush.msra.mxu0 %v1532
      %1707 = vmatpush.msra.mxu0 %v1530
      %1708 = vmatpush.msra.mxu0 %v1528
      %1709 = vmatpush.msra.mxu0 %v1526
      %1710 = vmatpush.msra.mxu0 %v1524
      %1711 = vmatpush.msra.mxu0 %v1522
      %1712 = vmatpush.msra.mxu0 %v1520
      %1713 = vmatpush.msra.mxu0 %v1518
      %1714 = vmatpush.msra.mxu0 %v1516
      %1715 = vmatmul.f32.gmra.mxu0 %v1442
      %v1716 = vpop.f32.mrf.mxu0
      %v1717 = vadd.f32 %v1697, %v1716
      %1718 = vdwg.mxu0
      %1719 = vmatpush.msra.mxu0 %v1578
      %1720 = vmatpush.msra.mxu0 %v1576
      %1721 = vmatpush.msra.mxu0 %v1574
      %1722 = vmatpush.msra.mxu0 %v1572
      %1723 = vmatpush.msra.mxu0 %v1570
      %1724 = vmatpush.msra.mxu0 %v1568
      %1725 = vmatpush.msra.mxu0 %v1566
      %1726 = vmatpush.msra.mxu0 %v1564
      %1727 = vmatpush.msra.mxu0 %v1562
      %1728 = vmatpush.msra.mxu0 %v1560
      %1729 = vmatpush.msra.mxu0 %v1558
      %1730 = vmatpush.msra.mxu0 %v1556
      %1731 = vmatpush.msra.mxu0 %v1554
      %1732 = vmatpush.msra.mxu0 %v1552
      %1733 = vmatpush.msra.mxu0 %v1550
      %1734 = vmatpush.msra.mxu0 %v1548
      %1735 = vmatmul.f32.gmra.mxu0 %v1443
      %v1736 = vpop.f32.mrf.mxu0
      %v1737 = vadd.f32 %v1717, %v1736
      %1738 = vdwg.mxu0
      %v1739 = vadd.f32 %v1446, %v1657
      %v1740 = vadd.f32 %v1447, %v1737
      %v1741 = vrot.slane %v1440, 4
      %v1742 = vsel %vm534, %v1741, %v1440
      %v1743 = vrot.slane %v1441, 4
      %v1744 = vsel %vm534, %v1743, %v1441
      %v1745 = vrot.slane %v1442, 4
      %v1746 = vsel %vm534, %v1745, %v1442
      %v1747 = vrot.slane %v1443, 4
      %v1748 = vsel %vm534, %v1747, %v1443
      %v1749 = vrot.slane %v1742, 4
      %v1750 = vrot.slane %v1744, 4
      %v1751 = vrot.slane %v1746, 4
      %v1752 = vrot.slane %v1748, 4
      %v1753 = vsel %vm534, %v1749, %v1440
      %v1754 = vsel %vm534, %v1750, %v1441
      %v1755 = vsel %vm534, %v1751, %v1442
      %v1756 = vsel %vm534, %v1752, %v1443
      %v1757 = vmul.f32 %v1753, %v540
      %v1758 = vmul.f32 %v1754, %v540
      %v1759 = vmul.f32 %v1755, %v540
      %v1760 = vmul.f32 %v1756, %v540
      %v1761 = vmul.f32 %v1753, %v544
      %v1762 = vmul.f32 %v1754, %v544
      %v1763 = vmul.f32 %v1755, %v544
      %v1764 = vmul.f32 %v1756, %v544
      %v1765 = vld [vmem:[%s6] sm:$0xff]
      %v1766 = vld [vmem:[%s6 + $0x8] sm:$0xff]
      %v1767 = vld [vmem:[%s6 + $0x10] sm:$0xff]
      %v1768 = vld [vmem:[%s6 + $0x18] sm:$0xff]
      %v1769 = vld [vmem:[%s6 + $0x20] sm:$0xff]
      %v1770 = vld [vmem:[%s6 + $0x28] sm:$0xff]
      %v1771 = vld [vmem:[%s6 + $0x30] sm:$0xff]
      %v1772 = vld [vmem:[%s6 + $0x38] sm:$0xff]
      %v1773 = vld [vmem:[%s6 + $0x40] sm:$0xff]
      %v1774 = vld [vmem:[%s6 + $0x48] sm:$0xff]
      %v1775 = vld [vmem:[%s6 + $0x50] sm:$0xff]
      %v1776 = vld [vmem:[%s6 + $0x58] sm:$0xff]
      %v1777 = vld [vmem:[%s6 + $0x60] sm:$0xff]
      %v1778 = vld [vmem:[%s6 + $0x68] sm:$0xff]
      %v1779 = vld [vmem:[%s6 + $0x70] sm:$0xff]
      %v1780 = vld [vmem:[%s6 + $0x78] sm:$0xff]
      %v1781 = vld [vmem:[%s6 + $0x80] sm:$0xff]
      %v1782 = vld [vmem:[%s6 + $0x88] sm:$0xff]
      %v1783 = vld [vmem:[%s6 + $0x90] sm:$0xff]
      %v1784 = vld [vmem:[%s6 + $0x98] sm:$0xff]
      %v1785 = vld [vmem:[%s6 + $0xa0] sm:$0xff]
      %v1786 = vld [vmem:[%s6 + $0xa8] sm:$0xff]
      %v1787 = vld [vmem:[%s6 + $0xb0] sm:$0xff]
      %v1788 = vld [vmem:[%s6 + $0xb8] sm:$0xff]
      %v1789 = vld [vmem:[%s6 + $0xc0] sm:$0xff]
      %v1790 = vld [vmem:[%s6 + $0xc8] sm:$0xff]
      %v1791 = vld [vmem:[%s6 + $0xd0] sm:$0xff]
      %v1792 = vld [vmem:[%s6 + $0xd8] sm:$0xff]
      %v1793 = vld [vmem:[%s6 + $0xe0] sm:$0xff]
      %v1794 = vld [vmem:[%s6 + $0xe8] sm:$0xff]
      %v1795 = vld [vmem:[%s6 + $0xf0] sm:$0xff]
      %v1796 = vld [vmem:[%s6 + $0xf8] sm:$0xff]
      %v1797 = vld [vmem:[%s6 + $0x100] sm:$0xff]
      %v1798 = vld [vmem:[%s6 + $0x108] sm:$0xff]
      %v1799 = vld [vmem:[%s6 + $0x110] sm:$0xff]
      %v1800 = vld [vmem:[%s6 + $0x118] sm:$0xff]
      %v1801 = vld [vmem:[%s6 + $0x120] sm:$0xff]
      %v1802 = vld [vmem:[%s6 + $0x128] sm:$0xff]
      %v1803 = vld [vmem:[%s6 + $0x130] sm:$0xff]
      %v1804 = vld [vmem:[%s6 + $0x138] sm:$0xff]
      %v1805 = vld [vmem:[%s6 + $0x140] sm:$0xff]
      %v1806 = vld [vmem:[%s6 + $0x148] sm:$0xff]
      %v1807 = vld [vmem:[%s6 + $0x150] sm:$0xff]
      %v1808 = vld [vmem:[%s6 + $0x158] sm:$0xff]
      %v1809 = vld [vmem:[%s6 + $0x160] sm:$0xff]
      %v1810 = vld [vmem:[%s6 + $0x168] sm:$0xff]
      %v1811 = vld [vmem:[%s6 + $0x170] sm:$0xff]
      %v1812 = vld [vmem:[%s6 + $0x178] sm:$0xff]
      %v1813 = vld [vmem:[%s6 + $0x180] sm:$0xff]
      %v1814 = vld [vmem:[%s6 + $0x188] sm:$0xff]
      %v1815 = vld [vmem:[%s6 + $0x190] sm:$0xff]
      %v1816 = vld [vmem:[%s6 + $0x198] sm:$0xff]
      %v1817 = vld [vmem:[%s6 + $0x1a0] sm:$0xff]
      %v1818 = vld [vmem:[%s6 + $0x1a8] sm:$0xff]
      %v1819 = vld [vmem:[%s6 + $0x1b0] sm:$0xff]
      %v1820 = vld [vmem:[%s6 + $0x1b8] sm:$0xff]
      %v1821 = vld [vmem:[%s6 + $0x1c0] sm:$0xff]
      %v1822 = vld [vmem:[%s6 + $0x1c8] sm:$0xff]
      %v1823 = vld [vmem:[%s6 + $0x1d0] sm:$0xff]
      %v1824 = vld [vmem:[%s6 + $0x1d8] sm:$0xff]
      %v1825 = vld [vmem:[%s6 + $0x1e0] sm:$0xff]
      %v1826 = vld [vmem:[%s6 + $0x1e8] sm:$0xff]
      %v1827 = vld [vmem:[%s6 + $0x1f0] sm:$0xff]
      %v1828 = vld [vmem:[%s6 + $0x1f8] sm:$0xff]
      %v1829 = vld [vmem:[%s6 + $0x200] sm:$0xff]
      %v1830 = vld [vmem:[%s6 + $0x208] sm:$0xff]
      %v1831 = vld [vmem:[%s6 + $0x210] sm:$0xff]
      %v1832 = vld [vmem:[%s6 + $0x218] sm:$0xff]
      %v1833 = vld [vmem:[%s6 + $0x220] sm:$0xff]
      %v1834 = vld [vmem:[%s6 + $0x228] sm:$0xff]
      %v1835 = vld [vmem:[%s6 + $0x230] sm:$0xff]
      %v1836 = vld [vmem:[%s6 + $0x238] sm:$0xff]
      %v1837 = vld [vmem:[%s6 + $0x240] sm:$0xff]
      %v1838 = vld [vmem:[%s6 + $0x248] sm:$0xff]
      %v1839 = vld [vmem:[%s6 + $0x250] sm:$0xff]
      %v1840 = vld [vmem:[%s6 + $0x258] sm:$0xff]
      %v1841 = vld [vmem:[%s6 + $0x260] sm:$0xff]
      %v1842 = vld [vmem:[%s6 + $0x268] sm:$0xff]
      %v1843 = vld [vmem:[%s6 + $0x270] sm:$0xff]
      %v1844 = vld [vmem:[%s6 + $0x278] sm:$0xff]
      %v1845 = vld [vmem:[%s6 + $0x280] sm:$0xff]
      %v1846 = vld [vmem:[%s6 + $0x288] sm:$0xff]
      %v1847 = vld [vmem:[%s6 + $0x290] sm:$0xff]
      %v1848 = vld [vmem:[%s6 + $0x298] sm:$0xff]
      %v1849 = vld [vmem:[%s6 + $0x2a0] sm:$0xff]
      %v1850 = vld [vmem:[%s6 + $0x2a8] sm:$0xff]
      %v1851 = vld [vmem:[%s6 + $0x2b0] sm:$0xff]
      %v1852 = vld [vmem:[%s6 + $0x2b8] sm:$0xff]
      %v1853 = vld [vmem:[%s6 + $0x2c0] sm:$0xff]
      %v1854 = vld [vmem:[%s6 + $0x2c8] sm:$0xff]
      %v1855 = vld [vmem:[%s6 + $0x2d0] sm:$0xff]
      %v1856 = vld [vmem:[%s6 + $0x2d8] sm:$0xff]
      %v1857 = vld [vmem:[%s6 + $0x2e0] sm:$0xff]
      %v1858 = vld [vmem:[%s6 + $0x2e8] sm:$0xff]
      %v1859 = vld [vmem:[%s6 + $0x2f0] sm:$0xff]
      %v1860 = vld [vmem:[%s6 + $0x2f8] sm:$0xff]
      %v1861 = vld [vmem:[%s6 + $0x300] sm:$0xff]
      %v1862 = vld [vmem:[%s6 + $0x308] sm:$0xff]
      %v1863 = vld [vmem:[%s6 + $0x310] sm:$0xff]
      %v1864 = vld [vmem:[%s6 + $0x318] sm:$0xff]
      %v1865 = vld [vmem:[%s6 + $0x320] sm:$0xff]
      %v1866 = vld [vmem:[%s6 + $0x328] sm:$0xff]
      %v1867 = vld [vmem:[%s6 + $0x330] sm:$0xff]
      %v1868 = vld [vmem:[%s6 + $0x338] sm:$0xff]
      %v1869 = vld [vmem:[%s6 + $0x340] sm:$0xff]
      %v1870 = vld [vmem:[%s6 + $0x348] sm:$0xff]
      %v1871 = vld [vmem:[%s6 + $0x350] sm:$0xff]
      %v1872 = vld [vmem:[%s6 + $0x358] sm:$0xff]
      %v1873 = vld [vmem:[%s6 + $0x360] sm:$0xff]
      %v1874 = vld [vmem:[%s6 + $0x368] sm:$0xff]
      %v1875 = vld [vmem:[%s6 + $0x370] sm:$0xff]
      %v1876 = vld [vmem:[%s6 + $0x378] sm:$0xff]
      %v1877 = vld [vmem:[%s6 + $0x380] sm:$0xff]
      %v1878 = vld [vmem:[%s6 + $0x388] sm:$0xff]
      %v1879 = vld [vmem:[%s6 + $0x390] sm:$0xff]
      %v1880 = vld [vmem:[%s6 + $0x398] sm:$0xff]
      %v1881 = vld [vmem:[%s6 + $0x3a0] sm:$0xff]
      %v1882 = vld [vmem:[%s6 + $0x3a8] sm:$0xff]
      %v1883 = vld [vmem:[%s6 + $0x3b0] sm:$0xff]
      %v1884 = vld [vmem:[%s6 + $0x3b8] sm:$0xff]
      %v1885 = vld [vmem:[%s6 + $0x3c0] sm:$0xff]
      %v1886 = vld [vmem:[%s6 + $0x3c8] sm:$0xff]
      %v1887 = vld [vmem:[%s6 + $0x3d0] sm:$0xff]
      %v1888 = vld [vmem:[%s6 + $0x3d8] sm:$0xff]
      %v1889 = vld [vmem:[%s6 + $0x3e0] sm:$0xff]
      %v1890 = vld [vmem:[%s6 + $0x3e8] sm:$0xff]
      %v1891 = vld [vmem:[%s6 + $0x3f0] sm:$0xff]
      %v1892 = vld [vmem:[%s6 + $0x3f8] sm:$0xff]
      %v1897 = vrot.slane %v1757, 3
      %v1898 = vrot.slane %v1758, 3
      %v1899 = vrot.slane %v1759, 3
      %v1900 = vrot.slane %v1760, 3
      %1905 = vmatpush.msra.mxu0 %v1795
      %1906 = vmatpush.msra.mxu0 %v1793
      %1907 = vmatpush.msra.mxu0 %v1791
      %1908 = vmatpush.msra.mxu0 %v1789
      %1909 = vmatpush.msra.mxu0 %v1787
      %1910 = vmatpush.msra.mxu0 %v1785
      %1911 = vmatpush.msra.mxu0 %v1783
      %1912 = vmatpush.msra.mxu0 %v1781
      %1913 = vmatpush.msra.mxu0 %v1779
      %1914 = vmatpush.msra.mxu0 %v1777
      %1915 = vmatpush.msra.mxu0 %v1775
      %1916 = vmatpush.msra.mxu0 %v1773
      %1917 = vmatpush.msra.mxu0 %v1771
      %1918 = vmatpush.msra.mxu0 %v1769
      %1919 = vmatpush.msra.mxu0 %v1767
      %1920 = vmatpush.msra.mxu0 %v1765
      %1921 = vmatmul.f32.gmra.mxu0 %v1897
      %v1922 = vpop.f32.mrf.mxu0
      %v1923 = vadd.f32 0.0, %v1922
      %1924 = vdwg.mxu0
      %1925 = vmatpush.msra.mxu0 %v1827
      %1926 = vmatpush.msra.mxu0 %v1825
      %1927 = vmatpush.msra.mxu0 %v1823
      %1928 = vmatpush.msra.mxu0 %v1821
      %1929 = vmatpush.msra.mxu0 %v1819
      %1930 = vmatpush.msra.mxu0 %v1817
      %1931 = vmatpush.msra.mxu0 %v1815
      %1932 = vmatpush.msra.mxu0 %v1813
      %1933 = vmatpush.msra.mxu0 %v1811
      %1934 = vmatpush.msra.mxu0 %v1809
      %1935 = vmatpush.msra.mxu0 %v1807
      %1936 = vmatpush.msra.mxu0 %v1805
      %1937 = vmatpush.msra.mxu0 %v1803
      %1938 = vmatpush.msra.mxu0 %v1801
      %1939 = vmatpush.msra.mxu0 %v1799
      %1940 = vmatpush.msra.mxu0 %v1797
      %1941 = vmatmul.f32.gmra.mxu0 %v1898
      %v1942 = vpop.f32.mrf.mxu0
      %v1943 = vadd.f32 %v1923, %v1942
      %1944 = vdwg.mxu0
      %1945 = vmatpush.msra.mxu0 %v1859
      %1946 = vmatpush.msra.mxu0 %v1857
      %1947 = vmatpush.msra.mxu0 %v1855
      %1948 = vmatpush.msra.mxu0 %v1853
      %1949 = vmatpush.msra.mxu0 %v1851
      %1950 = vmatpush.msra.mxu0 %v1849
      %1951 = vmatpush.msra.mxu0 %v1847
      %1952 = vmatpush.msra.mxu0 %v1845
      %1953 = vmatpush.msra.mxu0 %v1843
      %1954 = vmatpush.msra.mxu0 %v1841
      %1955 = vmatpush.msra.mxu0 %v1839
      %1956 = vmatpush.msra.mxu0 %v1837
      %1957 = vmatpush.msra.mxu0 %v1835
      %1958 = vmatpush.msra.mxu0 %v1833
      %1959 = vmatpush.msra.mxu0 %v1831
      %1960 = vmatpush.msra.mxu0 %v1829
      %1961 = vmatmul.f32.gmra.mxu0 %v1899
      %v1962 = vpop.f32.mrf.mxu0
      %v1963 = vadd.f32 %v1943, %v1962
      %1964 = vdwg.mxu0
      %1965 = vmatpush.msra.mxu0 %v1891
      %1966 = vmatpush.msra.mxu0 %v1889
      %1967 = vmatpush.msra.mxu0 %v1887
      %1968 = vmatpush.msra.mxu0 %v1885
      %1969 = vmatpush.msra.mxu0 %v1883
      %1970 = vmatpush.msra.mxu0 %v1881
      %1971 = vmatpush.msra.mxu0 %v1879
      %1972 = vmatpush.msra.mxu0 %v1877
      %1973 = vmatpush.msra.mxu0 %v1875
      %1974 = vmatpush.msra.mxu0 %v1873
      %1975 = vmatpush.msra.mxu0 %v1871
      %1976 = vmatpush.msra.mxu0 %v1869
      %1977 = vmatpush.msra.mxu0 %v1867
      %1978 = vmatpush.msra.mxu0 %v1865
      %1979 = vmatpush.msra.mxu0 %v1863
      %1980 = vmatpush.msra.mxu0 %v1861
      %1981 = vmatmul.f32.gmra.mxu0 %v1900
      %v1982 = vpop.f32.mrf.mxu0
      %v1983 = vadd.f32 %v1963, %v1982
      %1984 = vdwg.mxu0
      %1985 = vmatpush.msra.mxu0 %v1796
      %1986 = vmatpush.msra.mxu0 %v1794
      %1987 = vmatpush.msra.mxu0 %v1792
      %1988 = vmatpush.msra.mxu0 %v1790
      %1989 = vmatpush.msra.mxu0 %v1788
      %1990 = vmatpush.msra.mxu0 %v1786
      %1991 = vmatpush.msra.mxu0 %v1784
      %1992 = vmatpush.msra.mxu0 %v1782
      %1993 = vmatpush.msra.mxu0 %v1780
      %1994 = vmatpush.msra.mxu0 %v1778
      %1995 = vmatpush.msra.mxu0 %v1776
      %1996 = vmatpush.msra.mxu0 %v1774
      %1997 = vmatpush.msra.mxu0 %v1772
      %1998 = vmatpush.msra.mxu0 %v1770
      %1999 = vmatpush.msra.mxu0 %v1768
      %2000 = vmatpush.msra.mxu0 %v1766
      %2001 = vmatmul.f32.gmra.mxu0 %v1897
      %v2002 = vpop.f32.mrf.mxu0
      %v2003 = vadd.f32 0.0, %v2002
      %2004 = vdwg.mxu0
      %2005 = vmatpush.msra.mxu0 %v1828
      %2006 = vmatpush.msra.mxu0 %v1826
      %2007 = vmatpush.msra.mxu0 %v1824
      %2008 = vmatpush.msra.mxu0 %v1822
      %2009 = vmatpush.msra.mxu0 %v1820
      %2010 = vmatpush.msra.mxu0 %v1818
      %2011 = vmatpush.msra.mxu0 %v1816
      %2012 = vmatpush.msra.mxu0 %v1814
      %2013 = vmatpush.msra.mxu0 %v1812
      %2014 = vmatpush.msra.mxu0 %v1810
      %2015 = vmatpush.msra.mxu0 %v1808
      %2016 = vmatpush.msra.mxu0 %v1806
      %2017 = vmatpush.msra.mxu0 %v1804
      %2018 = vmatpush.msra.mxu0 %v1802
      %2019 = vmatpush.msra.mxu0 %v1800
      %2020 = vmatpush.msra.mxu0 %v1798
      %2021 = vmatmul.f32.gmra.mxu0 %v1898
      %v2022 = vpop.f32.mrf.mxu0
      %v2023 = vadd.f32 %v2003, %v2022
      %2024 = vdwg.mxu0
      %2025 = vmatpush.msra.mxu0 %v1860
      %2026 = vmatpush.msra.mxu0 %v1858
      %2027 = vmatpush.msra.mxu0 %v1856
      %2028 = vmatpush.msra.mxu0 %v1854
      %2029 = vmatpush.msra.mxu0 %v1852
      %2030 = vmatpush.msra.mxu0 %v1850
      %2031 = vmatpush.msra.mxu0 %v1848
      %2032 = vmatpush.msra.mxu0 %v1846
      %2033 = vmatpush.msra.mxu0 %v1844
      %2034 = vmatpush.msra.mxu0 %v1842
      %2035 = vmatpush.msra.mxu0 %v1840
      %2036 = vmatpush.msra.mxu0 %v1838
      %2037 = vmatpush.msra.mxu0 %v1836
      %2038 = vmatpush.msra.mxu0 %v1834
      %2039 = vmatpush.msra.mxu0 %v1832
      %2040 = vmatpush.msra.mxu0 %v1830
      %2041 = vmatmul.f32.gmra.mxu0 %v1899
      %v2042 = vpop.f32.mrf.mxu0
      %v2043 = vadd.f32 %v2023, %v2042
      %2044 = vdwg.mxu0
      %2045 = vmatpush.msra.mxu0 %v1892
      %2046 = vmatpush.msra.mxu0 %v1890
      %2047 = vmatpush.msra.mxu0 %v1888
      %2048 = vmatpush.msra.mxu0 %v1886
      %2049 = vmatpush.msra.mxu0 %v1884
      %2050 = vmatpush.msra.mxu0 %v1882
      %2051 = vmatpush.msra.mxu0 %v1880
      %2052 = vmatpush.msra.mxu0 %v1878
      %2053 = vmatpush.msra.mxu0 %v1876
      %2054 = vmatpush.msra.mxu0 %v1874
      %2055 = vmatpush.msra.mxu0 %v1872
      %2056 = vmatpush.msra.mxu0 %v1870
      %2057 = vmatpush.msra.mxu0 %v1868
      %2058 = vmatpush.msra.mxu0 %v1866
      %2059 = vmatpush.msra.mxu0 %v1864
      %2060 = vmatpush.msra.mxu0 %v1862
      %2061 = vmatmul.f32.gmra.mxu0 %v1900
      %v2062 = vpop.f32.mrf.mxu0
      %v2063 = vadd.f32 %v2043, %v2062
      %2064 = vdwg.mxu0
      %v2065 = vadd.f32 %v1739, %v1983
      %v2066 = vadd.f32 %v1740, %v2063
      %s2067 = scalar_lea.vmem %s6, 2048
      %v2068 = vld [vmem:[%s2067] sm:$0xff]
      %v2069 = vld [vmem:[%s2067 + $0x8] sm:$0xff]
      %v2070 = vld [vmem:[%s2067 + $0x10] sm:$0xff]
      %v2071 = vld [vmem:[%s2067 + $0x18] sm:$0xff]
      %v2072 = vld [vmem:[%s2067 + $0x20] sm:$0xff]
      %v2073 = vld [vmem:[%s2067 + $0x28] sm:$0xff]
      %v2074 = vld [vmem:[%s2067 + $0x30] sm:$0xff]
      %v2075 = vld [vmem:[%s2067 + $0x38] sm:$0xff]
      %v2076 = vld [vmem:[%s2067 + $0x40] sm:$0xff]
      %v2077 = vld [vmem:[%s2067 + $0x48] sm:$0xff]
      %v2078 = vld [vmem:[%s2067 + $0x50] sm:$0xff]
      %v2079 = vld [vmem:[%s2067 + $0x58] sm:$0xff]
      %v2080 = vld [vmem:[%s2067 + $0x60] sm:$0xff]
      %v2081 = vld [vmem:[%s2067 + $0x68] sm:$0xff]
      %v2082 = vld [vmem:[%s2067 + $0x70] sm:$0xff]
      %v2083 = vld [vmem:[%s2067 + $0x78] sm:$0xff]
      %v2084 = vld [vmem:[%s2067 + $0x80] sm:$0xff]
      %v2085 = vld [vmem:[%s2067 + $0x88] sm:$0xff]
      %v2086 = vld [vmem:[%s2067 + $0x90] sm:$0xff]
      %v2087 = vld [vmem:[%s2067 + $0x98] sm:$0xff]
      %v2088 = vld [vmem:[%s2067 + $0xa0] sm:$0xff]
      %v2089 = vld [vmem:[%s2067 + $0xa8] sm:$0xff]
      %v2090 = vld [vmem:[%s2067 + $0xb0] sm:$0xff]
      %v2091 = vld [vmem:[%s2067 + $0xb8] sm:$0xff]
      %v2092 = vld [vmem:[%s2067 + $0xc0] sm:$0xff]
      %v2093 = vld [vmem:[%s2067 + $0xc8] sm:$0xff]
      %v2094 = vld [vmem:[%s2067 + $0xd0] sm:$0xff]
      %v2095 = vld [vmem:[%s2067 + $0xd8] sm:$0xff]
      %v2096 = vld [vmem:[%s2067 + $0xe0] sm:$0xff]
      %v2097 = vld [vmem:[%s2067 + $0xe8] sm:$0xff]
      %v2098 = vld [vmem:[%s2067 + $0xf0] sm:$0xff]
      %v2099 = vld [vmem:[%s2067 + $0xf8] sm:$0xff]
      %v2100 = vld [vmem:[%s2067 + $0x100] sm:$0xff]
      %v2101 = vld [vmem:[%s2067 + $0x108] sm:$0xff]
      %v2102 = vld [vmem:[%s2067 + $0x110] sm:$0xff]
      %v2103 = vld [vmem:[%s2067 + $0x118] sm:$0xff]
      %v2104 = vld [vmem:[%s2067 + $0x120] sm:$0xff]
      %v2105 = vld [vmem:[%s2067 + $0x128] sm:$0xff]
      %v2106 = vld [vmem:[%s2067 + $0x130] sm:$0xff]
      %v2107 = vld [vmem:[%s2067 + $0x138] sm:$0xff]
      %v2108 = vld [vmem:[%s2067 + $0x140] sm:$0xff]
      %v2109 = vld [vmem:[%s2067 + $0x148] sm:$0xff]
      %v2110 = vld [vmem:[%s2067 + $0x150] sm:$0xff]
      %v2111 = vld [vmem:[%s2067 + $0x158] sm:$0xff]
      %v2112 = vld [vmem:[%s2067 + $0x160] sm:$0xff]
      %v2113 = vld [vmem:[%s2067 + $0x168] sm:$0xff]
      %v2114 = vld [vmem:[%s2067 + $0x170] sm:$0xff]
      %v2115 = vld [vmem:[%s2067 + $0x178] sm:$0xff]
      %v2116 = vld [vmem:[%s2067 + $0x180] sm:$0xff]
      %v2117 = vld [vmem:[%s2067 + $0x188] sm:$0xff]
      %v2118 = vld [vmem:[%s2067 + $0x190] sm:$0xff]
      %v2119 = vld [vmem:[%s2067 + $0x198] sm:$0xff]
      %v2120 = vld [vmem:[%s2067 + $0x1a0] sm:$0xff]
      %v2121 = vld [vmem:[%s2067 + $0x1a8] sm:$0xff]
      %v2122 = vld [vmem:[%s2067 + $0x1b0] sm:$0xff]
      %v2123 = vld [vmem:[%s2067 + $0x1b8] sm:$0xff]
      %v2124 = vld [vmem:[%s2067 + $0x1c0] sm:$0xff]
      %v2125 = vld [vmem:[%s2067 + $0x1c8] sm:$0xff]
      %v2126 = vld [vmem:[%s2067 + $0x1d0] sm:$0xff]
      %v2127 = vld [vmem:[%s2067 + $0x1d8] sm:$0xff]
      %v2128 = vld [vmem:[%s2067 + $0x1e0] sm:$0xff]
      %v2129 = vld [vmem:[%s2067 + $0x1e8] sm:$0xff]
      %v2130 = vld [vmem:[%s2067 + $0x1f0] sm:$0xff]
      %v2131 = vld [vmem:[%s2067 + $0x1f8] sm:$0xff]
      %v2132 = vld [vmem:[%s2067 + $0x200] sm:$0xff]
      %v2133 = vld [vmem:[%s2067 + $0x208] sm:$0xff]
      %v2134 = vld [vmem:[%s2067 + $0x210] sm:$0xff]
      %v2135 = vld [vmem:[%s2067 + $0x218] sm:$0xff]
      %v2136 = vld [vmem:[%s2067 + $0x220] sm:$0xff]
      %v2137 = vld [vmem:[%s2067 + $0x228] sm:$0xff]
      %v2138 = vld [vmem:[%s2067 + $0x230] sm:$0xff]
      %v2139 = vld [vmem:[%s2067 + $0x238] sm:$0xff]
      %v2140 = vld [vmem:[%s2067 + $0x240] sm:$0xff]
      %v2141 = vld [vmem:[%s2067 + $0x248] sm:$0xff]
      %v2142 = vld [vmem:[%s2067 + $0x250] sm:$0xff]
      %v2143 = vld [vmem:[%s2067 + $0x258] sm:$0xff]
      %v2144 = vld [vmem:[%s2067 + $0x260] sm:$0xff]
      %v2145 = vld [vmem:[%s2067 + $0x268] sm:$0xff]
      %v2146 = vld [vmem:[%s2067 + $0x270] sm:$0xff]
      %v2147 = vld [vmem:[%s2067 + $0x278] sm:$0xff]
      %v2148 = vld [vmem:[%s2067 + $0x280] sm:$0xff]
      %v2149 = vld [vmem:[%s2067 + $0x288] sm:$0xff]
      %v2150 = vld [vmem:[%s2067 + $0x290] sm:$0xff]
      %v2151 = vld [vmem:[%s2067 + $0x298] sm:$0xff]
      %v2152 = vld [vmem:[%s2067 + $0x2a0] sm:$0xff]
      %v2153 = vld [vmem:[%s2067 + $0x2a8] sm:$0xff]
      %v2154 = vld [vmem:[%s2067 + $0x2b0] sm:$0xff]
      %v2155 = vld [vmem:[%s2067 + $0x2b8] sm:$0xff]
      %v2156 = vld [vmem:[%s2067 + $0x2c0] sm:$0xff]
      %v2157 = vld [vmem:[%s2067 + $0x2c8] sm:$0xff]
      %v2158 = vld [vmem:[%s2067 + $0x2d0] sm:$0xff]
      %v2159 = vld [vmem:[%s2067 + $0x2d8] sm:$0xff]
      %v2160 = vld [vmem:[%s2067 + $0x2e0] sm:$0xff]
      %v2161 = vld [vmem:[%s2067 + $0x2e8] sm:$0xff]
      %v2162 = vld [vmem:[%s2067 + $0x2f0] sm:$0xff]
      %v2163 = vld [vmem:[%s2067 + $0x2f8] sm:$0xff]
      %v2164 = vld [vmem:[%s2067 + $0x300] sm:$0xff]
      %v2165 = vld [vmem:[%s2067 + $0x308] sm:$0xff]
      %v2166 = vld [vmem:[%s2067 + $0x310] sm:$0xff]
      %v2167 = vld [vmem:[%s2067 + $0x318] sm:$0xff]
      %v2168 = vld [vmem:[%s2067 + $0x320] sm:$0xff]
      %v2169 = vld [vmem:[%s2067 + $0x328] sm:$0xff]
      %v2170 = vld [vmem:[%s2067 + $0x330] sm:$0xff]
      %v2171 = vld [vmem:[%s2067 + $0x338] sm:$0xff]
      %v2172 = vld [vmem:[%s2067 + $0x340] sm:$0xff]
      %v2173 = vld [vmem:[%s2067 + $0x348] sm:$0xff]
      %v2174 = vld [vmem:[%s2067 + $0x350] sm:$0xff]
      %v2175 = vld [vmem:[%s2067 + $0x358] sm:$0xff]
      %v2176 = vld [vmem:[%s2067 + $0x360] sm:$0xff]
      %v2177 = vld [vmem:[%s2067 + $0x368] sm:$0xff]
      %v2178 = vld [vmem:[%s2067 + $0x370] sm:$0xff]
      %v2179 = vld [vmem:[%s2067 + $0x378] sm:$0xff]
      %v2180 = vld [vmem:[%s2067 + $0x380] sm:$0xff]
      %v2181 = vld [vmem:[%s2067 + $0x388] sm:$0xff]
      %v2182 = vld [vmem:[%s2067 + $0x390] sm:$0xff]
      %v2183 = vld [vmem:[%s2067 + $0x398] sm:$0xff]
      %v2184 = vld [vmem:[%s2067 + $0x3a0] sm:$0xff]
      %v2185 = vld [vmem:[%s2067 + $0x3a8] sm:$0xff]
      %v2186 = vld [vmem:[%s2067 + $0x3b0] sm:$0xff]
      %v2187 = vld [vmem:[%s2067 + $0x3b8] sm:$0xff]
      %v2188 = vld [vmem:[%s2067 + $0x3c0] sm:$0xff]
      %v2189 = vld [vmem:[%s2067 + $0x3c8] sm:$0xff]
      %v2190 = vld [vmem:[%s2067 + $0x3d0] sm:$0xff]
      %v2191 = vld [vmem:[%s2067 + $0x3d8] sm:$0xff]
      %v2192 = vld [vmem:[%s2067 + $0x3e0] sm:$0xff]
      %v2193 = vld [vmem:[%s2067 + $0x3e8] sm:$0xff]
      %v2194 = vld [vmem:[%s2067 + $0x3f0] sm:$0xff]
      %v2195 = vld [vmem:[%s2067 + $0x3f8] sm:$0xff]
      %v2200 = vrot.slane %v1761, 1
      %v2201 = vrot.slane %v1762, 1
      %v2202 = vrot.slane %v1763, 1
      %v2203 = vrot.slane %v1764, 1
      %2208 = vmatpush.msra.mxu0 %v2098
      %2209 = vmatpush.msra.mxu0 %v2096
      %2210 = vmatpush.msra.mxu0 %v2094
      %2211 = vmatpush.msra.mxu0 %v2092
      %2212 = vmatpush.msra.mxu0 %v2090
      %2213 = vmatpush.msra.mxu0 %v2088
      %2214 = vmatpush.msra.mxu0 %v2086
      %2215 = vmatpush.msra.mxu0 %v2084
      %2216 = vmatpush.msra.mxu0 %v2082
      %2217 = vmatpush.msra.mxu0 %v2080
      %2218 = vmatpush.msra.mxu0 %v2078
      %2219 = vmatpush.msra.mxu0 %v2076
      %2220 = vmatpush.msra.mxu0 %v2074
      %2221 = vmatpush.msra.mxu0 %v2072
      %2222 = vmatpush.msra.mxu0 %v2070
      %2223 = vmatpush.msra.mxu0 %v2068
      %2224 = vmatmul.f32.gmra.mxu0 %v2200
      %v2225 = vpop.f32.mrf.mxu0
      %v2226 = vadd.f32 0.0, %v2225
      %2227 = vdwg.mxu0
      %2228 = vmatpush.msra.mxu0 %v2130
      %2229 = vmatpush.msra.mxu0 %v2128
      %2230 = vmatpush.msra.mxu0 %v2126
      %2231 = vmatpush.msra.mxu0 %v2124
      %2232 = vmatpush.msra.mxu0 %v2122
      %2233 = vmatpush.msra.mxu0 %v2120
      %2234 = vmatpush.msra.mxu0 %v2118
      %2235 = vmatpush.msra.mxu0 %v2116
      %2236 = vmatpush.msra.mxu0 %v2114
      %2237 = vmatpush.msra.mxu0 %v2112
      %2238 = vmatpush.msra.mxu0 %v2110
      %2239 = vmatpush.msra.mxu0 %v2108
      %2240 = vmatpush.msra.mxu0 %v2106
      %2241 = vmatpush.msra.mxu0 %v2104
      %2242 = vmatpush.msra.mxu0 %v2102
      %2243 = vmatpush.msra.mxu0 %v2100
      %2244 = vmatmul.f32.gmra.mxu0 %v2201
      %v2245 = vpop.f32.mrf.mxu0
      %v2246 = vadd.f32 %v2226, %v2245
      %2247 = vdwg.mxu0
      %2248 = vmatpush.msra.mxu0 %v2162
      %2249 = vmatpush.msra.mxu0 %v2160
      %2250 = vmatpush.msra.mxu0 %v2158
      %2251 = vmatpush.msra.mxu0 %v2156
      %2252 = vmatpush.msra.mxu0 %v2154
      %2253 = vmatpush.msra.mxu0 %v2152
      %2254 = vmatpush.msra.mxu0 %v2150
      %2255 = vmatpush.msra.mxu0 %v2148
      %2256 = vmatpush.msra.mxu0 %v2146
      %2257 = vmatpush.msra.mxu0 %v2144
      %2258 = vmatpush.msra.mxu0 %v2142
      %2259 = vmatpush.msra.mxu0 %v2140
      %2260 = vmatpush.msra.mxu0 %v2138
      %2261 = vmatpush.msra.mxu0 %v2136
      %2262 = vmatpush.msra.mxu0 %v2134
      %2263 = vmatpush.msra.mxu0 %v2132
      %2264 = vmatmul.f32.gmra.mxu0 %v2202
      %v2265 = vpop.f32.mrf.mxu0
      %v2266 = vadd.f32 %v2246, %v2265
      %2267 = vdwg.mxu0
      %2268 = vmatpush.msra.mxu0 %v2194
      %2269 = vmatpush.msra.mxu0 %v2192
      %2270 = vmatpush.msra.mxu0 %v2190
      %2271 = vmatpush.msra.mxu0 %v2188
      %2272 = vmatpush.msra.mxu0 %v2186
      %2273 = vmatpush.msra.mxu0 %v2184
      %2274 = vmatpush.msra.mxu0 %v2182
      %2275 = vmatpush.msra.mxu0 %v2180
      %2276 = vmatpush.msra.mxu0 %v2178
      %2277 = vmatpush.msra.mxu0 %v2176
      %2278 = vmatpush.msra.mxu0 %v2174
      %2279 = vmatpush.msra.mxu0 %v2172
      %2280 = vmatpush.msra.mxu0 %v2170
      %2281 = vmatpush.msra.mxu0 %v2168
      %2282 = vmatpush.msra.mxu0 %v2166
      %2283 = vmatpush.msra.mxu0 %v2164
      %2284 = vmatmul.f32.gmra.mxu0 %v2203
      %v2285 = vpop.f32.mrf.mxu0
      %v2286 = vadd.f32 %v2266, %v2285
      %2287 = vdwg.mxu0
      %2288 = vmatpush.msra.mxu0 %v2099
      %2289 = vmatpush.msra.mxu0 %v2097
      %2290 = vmatpush.msra.mxu0 %v2095
      %2291 = vmatpush.msra.mxu0 %v2093
      %2292 = vmatpush.msra.mxu0 %v2091
      %2293 = vmatpush.msra.mxu0 %v2089
      %2294 = vmatpush.msra.mxu0 %v2087
      %2295 = vmatpush.msra.mxu0 %v2085
      %2296 = vmatpush.msra.mxu0 %v2083
      %2297 = vmatpush.msra.mxu0 %v2081
      %2298 = vmatpush.msra.mxu0 %v2079
      %2299 = vmatpush.msra.mxu0 %v2077
      %2300 = vmatpush.msra.mxu0 %v2075
      %2301 = vmatpush.msra.mxu0 %v2073
      %2302 = vmatpush.msra.mxu0 %v2071
      %2303 = vmatpush.msra.mxu0 %v2069
      %2304 = vmatmul.f32.gmra.mxu0 %v2200
      %v2305 = vpop.f32.mrf.mxu0
      %v2306 = vadd.f32 0.0, %v2305
      %2307 = vdwg.mxu0
      %2308 = vmatpush.msra.mxu0 %v2131
      %2309 = vmatpush.msra.mxu0 %v2129
      %2310 = vmatpush.msra.mxu0 %v2127
      %2311 = vmatpush.msra.mxu0 %v2125
      %2312 = vmatpush.msra.mxu0 %v2123
      %2313 = vmatpush.msra.mxu0 %v2121
      %2314 = vmatpush.msra.mxu0 %v2119
      %2315 = vmatpush.msra.mxu0 %v2117
      %2316 = vmatpush.msra.mxu0 %v2115
      %2317 = vmatpush.msra.mxu0 %v2113
      %2318 = vmatpush.msra.mxu0 %v2111
      %2319 = vmatpush.msra.mxu0 %v2109
      %2320 = vmatpush.msra.mxu0 %v2107
      %2321 = vmatpush.msra.mxu0 %v2105
      %2322 = vmatpush.msra.mxu0 %v2103
      %2323 = vmatpush.msra.mxu0 %v2101
      %2324 = vmatmul.f32.gmra.mxu0 %v2201
      %v2325 = vpop.f32.mrf.mxu0
      %v2326 = vadd.f32 %v2306, %v2325
      %2327 = vdwg.mxu0
      %2328 = vmatpush.msra.mxu0 %v2163
      %2329 = vmatpush.msra.mxu0 %v2161
      %2330 = vmatpush.msra.mxu0 %v2159
      %2331 = vmatpush.msra.mxu0 %v2157
      %2332 = vmatpush.msra.mxu0 %v2155
      %2333 = vmatpush.msra.mxu0 %v2153
      %2334 = vmatpush.msra.mxu0 %v2151
      %2335 = vmatpush.msra.mxu0 %v2149
      %2336 = vmatpush.msra.mxu0 %v2147
      %2337 = vmatpush.msra.mxu0 %v2145
      %2338 = vmatpush.msra.mxu0 %v2143
      %2339 = vmatpush.msra.mxu0 %v2141
      %2340 = vmatpush.msra.mxu0 %v2139
      %2341 = vmatpush.msra.mxu0 %v2137
      %2342 = vmatpush.msra.mxu0 %v2135
      %2343 = vmatpush.msra.mxu0 %v2133
      %2344 = vmatmul.f32.gmra.mxu0 %v2202
      %v2345 = vpop.f32.mrf.mxu0
      %v2346 = vadd.f32 %v2326, %v2345
      %2347 = vdwg.mxu0
      %2348 = vmatpush.msra.mxu0 %v2195
      %2349 = vmatpush.msra.mxu0 %v2193
      %2350 = vmatpush.msra.mxu0 %v2191
      %2351 = vmatpush.msra.mxu0 %v2189
      %2352 = vmatpush.msra.mxu0 %v2187
      %2353 = vmatpush.msra.mxu0 %v2185
      %2354 = vmatpush.msra.mxu0 %v2183
      %2355 = vmatpush.msra.mxu0 %v2181
      %2356 = vmatpush.msra.mxu0 %v2179
      %2357 = vmatpush.msra.mxu0 %v2177
      %2358 = vmatpush.msra.mxu0 %v2175
      %2359 = vmatpush.msra.mxu0 %v2173
      %2360 = vmatpush.msra.mxu0 %v2171
      %2361 = vmatpush.msra.mxu0 %v2169
      %2362 = vmatpush.msra.mxu0 %v2167
      %2363 = vmatpush.msra.mxu0 %v2165
      %2364 = vmatmul.f32.gmra.mxu0 %v2203
      %v2365 = vpop.f32.mrf.mxu0
      %v2366 = vadd.f32 %v2346, %v2365
      %2367 = vdwg.mxu0
      %v2368 = vadd.f32 %v2065, %v2286
      %v2369 = vadd.f32 %v2066, %v2366
      %v2370 = vadd.f32 %v2368, 2.0
      %v2371 = vxor.u32 %v2370, 2147483648
      %v2372 = vmul.f32 %v2371, 1.442695
      %v2373 = vpow.pop %v2372
      %v2374 = vadd.f32 %v2373, 1.0
      %v2375 = vrcp.pop %v2374
      %v2376 = vmul.f32 %v2374, %v2375
      %v2377 = vsub.f32 1.0, %v2376
      %v2378 = vmul.f32 %v2375, %v2377
      %v2379 = vadd.f32 %v2375, %v2378
      %vm2380 = vweird.f32 %v2374
      %vm2381 = vweird.f32 %v2375
      %vm2382 = vmor %vm2380, %vm2381
      %v2383 = vsel %vm2382, %v2375, %v2379
      %v2384 = vand.u32 2147483647, %v2374
      %vm2385 = vcmp.eq.f32.partialorder %v2384, 8.507059e+37
      %v2386 = vand.u32 %v2374, 2147483648
      %v2387 = vor.u32 1.1754944e-38, %v2386
      %v2388 = vsel %vm2385, %v2387, %v2383
      %v2389 = vmul.f32 1.0, %v2388
      %v2390 = vadd.f32 %v2389, 1.0
      %v2391 = vlog2.pop %v2390
      %v2392 = vmul.f32 %v2391, 0.6931472
      %v2393 = vld [vmem:[%s346] sm:$0xf]
      %v2394 = vmul.f32 %v2393, %v2390
      %v2395 = vadd.f32 %v2394, %v2369
      %2396 = vst [vmem:[%s350] sm:$0xf] %v2395
      %vm2397 = vcmask 1043456
      %v2398 = vsel %vm2397, %v2392, 0.0
      %2399 = vadd.xlane.f32.xlu0 %v2398
      %v2400 = vpop.xlane.xlu0 %2399
      %v2401 = vsel %vm2397, %v2400, 0.0
      %v2402 = vrot.slane %v2401, 4
      %v2403 = vadd.f32 %v2401, %v2402
      %v2404 = vrot.slane %v2403, 2
      %v2405 = vadd.f32 %v2403, %v2404
      %v2406 = vrot.slane %v2405, 1
      %v2407 = vadd.f32 %v2405, %v2406
      %2408 = vst [vmem:[%s353] sm:$0x1] %v2407
      %p2409 = scmp.lt.s32.totalorder %s21, 1
      %s2410 = scalar_select %p2409, %s21, 1
      %s2411 = smul.addr %s2410, 4
      %s2412 = scalar_lea.vmem %s8, %s2411
      %p2413 = scmp.lt.s32.totalorder %s21, 1
      %s2414 = scalar_select %p2413, %s21, 1
      %s2415 = scalar_lea.vmem %s9, %s2414
      // Predicated region
      $region53: #{affine_coupling_forward.1} parent=51 // pred_check
        %p2416 = pneg %p217
      $region54: #{affine_coupling_forward.1} parent=51 // pred_check_branch
        %2418 = sbr.rel (%p2416) target = $region56
      $region55: #{affine_coupling_forward.1} parent=51 // pred_region
        _
      $region56: #{affine_coupling_forward.1} parent=51 // pred_fallthru
        _
      // Predicated region
      $region57: #{affine_coupling_forward.1} parent=51 // pred_check
        %p2419 = pneg %p243
      $region58: #{affine_coupling_forward.1} parent=51 // pred_check_branch
        %2421 = sbr.rel (%p2419) target = $region60
      $region59: #{affine_coupling_forward.1} parent=51 // pred_region
        _
      $region60: #{affine_coupling_forward.1} parent=51 // pred_fallthru
        _
    $region52: #{affine_coupling_forward.1} parent=5 // pred_fallthru
      _
    %p2422 = scmp.le.s32.totalorder 2, %s16
    // Predicated region
    $region61: #{affine_coupling_forward.1} parent=5 // pred_check
      %p2423 = pneg %p2422
    $region62: #{affine_coupling_forward.1} parent=5 // pred_check_branch
      %2425 = sbr.rel (%p2423) target = $region64
    $region63: #{affine_coupling_forward.1} parent=5 // pred_region
      %s2426 = ssub.s32 %s16, 2
      // Predicated region
      $region65: #{affine_coupling_forward.1} parent=63 // pred_check
        %p2427 = pneg %p223
      $region66: #{affine_coupling_forward.1} parent=63 // pred_check_branch
        %2429 = sbr.rel (%p2427) target = $region68
      $region67: #{affine_coupling_forward.1} parent=63 // pred_region
        %p2430 = scmp.lt.s32.totalorder %s22, 1
        %s2431 = scalar_select %p2430, %s22, 1
        %s2432 = smul.addr %s2431, 4
        %s2433 = scalar_lea.vmem %s8, %s2432
      $region68: #{affine_coupling_forward.1} parent=63 // pred_fallthru
        _
      // Predicated region
      $region69: #{affine_coupling_forward.1} parent=63 // pred_check
        %p2434 = pneg %p249
      $region70: #{affine_coupling_forward.1} parent=63 // pred_check_branch
        %2436 = sbr.rel (%p2434) target = $region72
      $region71: #{affine_coupling_forward.1} parent=63 // pred_region
        %p2437 = scmp.lt.s32.totalorder %s22, 1
        %s2438 = scalar_select %p2437, %s22, 1
        %s2439 = scalar_lea.vmem %s9, %s2438
      $region72: #{affine_coupling_forward.1} parent=63 // pred_fallthru
        _
    $region64: #{affine_coupling_forward.1} parent=5 // pred_fallthru
      _
  $region6: #{affine_coupling_forward.1} parent=0 // loop_footer
    %s20 = sadd.s32 1, %s16
  $region7: #{affine_coupling_forward.1} parent=0 // loop_footer_branch
    %15 = sbr.rel target = $region3
  $region8: #{affine_coupling_forward.1} parent=0 // loop_exit
    _

</llo_original>
